<compile_context>
chip_gen: v7x
topology: tpu7x:2x2x1
jax: 0.10.0
libtpu: 0.0.40
codegen_flags: <defaults>
</compile_context>

<pallas_src>
import math
import jax
import jax.numpy as jnp
from jax.experimental import pallas as pl
from jax.experimental.pallas import tpu as pltpu  # noqa: F401  (kept for TPU-specific tuning hooks)

RANK = 16
NUM_HEADS = 2
HEAD_DIM = RANK // NUM_HEADS
MLP_RATIO = 4
HIDDEN = RANK * MLP_RATIO
NUM_BLOCKS = 2
LN_EPS = 1e-6          # timm ViT-style LayerNorm eps
PARAMS_PER_BLOCK = 12
ATTN_SCALE = 1.0 / math.sqrt(HEAD_DIM)


# --------------------------------------------------------------------------
# Kernel (lane-dense layout: x is (RANK, N), weights are (out, in))
# --------------------------------------------------------------------------
def _layernorm_channels(x, gamma, beta):
    """LayerNorm over the channel (sublane) axis of x: (C, N)."""
    mu = jnp.mean(x, axis=0, keepdims=True)
    var = jnp.mean(jnp.square(x - mu), axis=0, keepdims=True)
    return (x - mu) * jax.lax.rsqrt(var + LN_EPS) * gamma + beta


def _apply_block(x, p):
    """One pre-norm transformer block on x of shape (C, N)."""
    (ln1g, ln1b, qkvw, qkvb, projw, projb,
     ln2g, ln2b, fc1w, fc1b, fc2w, fc2b) = p

    # ---- LN1 ----
    xn = _layernorm_channels(x, ln1g, ln1b)                               # (C, N)

    # ---- QKV (single MXU push, 48xC weight) ----
    qkv = jnp.dot(qkvw, xn, preferred_element_type=jnp.float32) + qkvb    # (3C, N)

    attn = None
    for h in range(NUM_HEADS):                                            # static unroll (2 heads)
        q = qkv[h * HEAD_DIM:(h + 1) * HEAD_DIM, :] * ATTN_SCALE          # (HD, N) scale on q, not scores
        k = qkv[RANK + h * HEAD_DIM: RANK + (h + 1) * HEAD_DIM, :]        # (HD, N)
        v = qkv[2 * RANK + h * HEAD_DIM: 2 * RANK + (h + 1) * HEAD_DIM, :]

        # scores[i, j] = sum_d q[d, i] * k[d, j]  -> (N, N), no transpose materialized
        att = jax.lax.dot_general(q, k, (((0,), (0,)), ((), ())),
                                  preferred_element_type=jnp.float32)
        att = jnp.exp(att - jnp.max(att, axis=-1, keepdims=True))
        inv = pl.reciprocal(jnp.sum(att, axis=-1, keepdims=True), approx=True)
        att = att * inv

        # head_out[d, i] = sum_j v[d, j] * att[i, j]  -> (HD, N)
        ho = jax.lax.dot_general(v, att, (((1,), (1,)), ((), ())),
                                 preferred_element_type=jnp.float32)

        # distributed output projection: sum_h projw[:, hHD:(h+1)HD] @ head_out_h
        contrib = jnp.dot(projw[:, h * HEAD_DIM:(h + 1) * HEAD_DIM], ho,
                          preferred_element_type=jnp.float32)             # (C, N)
        attn = contrib if attn is None else attn + contrib

    x = x + attn + projb                                                  # residual (drop_path = id)

    # ---- LN2 + MLP ----
    xn2 = _layernorm_channels(x, ln2g, ln2b)
    h1 = jnp.dot(fc1w, xn2, preferred_element_type=jnp.float32) + fc1b    # (HIDDEN, N)
    h1 = jax.nn.gelu(h1, approximate=True)                                # tanh-approx GELU (EUP)
    h2 = jnp.dot(fc2w, h1, preferred_element_type=jnp.float32) + fc2b     # (C, N)
    return x + h2


def _hypernet_kernel(x_ref, *refs):
    """x_ref: (C, N); refs = 2*12 param refs (block0, block1) + out_ref."""
    out_ref = refs[-1]
    param_refs = refs[:-1]

    x = x_ref[...]
    for b in range(NUM_BLOCKS):                                           # static unroll (2 blocks)
        prefs = param_refs[b * PARAMS_PER_BLOCK:(b + 1) * PARAMS_PER_BLOCK]
        p = tuple(r[...] for r in prefs)
        x = _apply_block(x, p)
    out_ref[...] = x                                                      # (C, N): full-width lane-dense store


# --------------------------------------------------------------------------
# Wrapper
# --------------------------------------------------------------------------
def _full_spec(a):
    # whole-array block resident in VMEM (no grid -> index_map takes no args)
    return pl.BlockSpec(a.shape, lambda *_, n=a.ndim: (0,) * n)


def _to_lane_dense(params):
    """Convert reference-layout params ((in,out) weights, (1,out) vectors) to
    kernel layout ((out,in) weights, (out,1) vectors)."""
    (ln1g, ln1b, qkvw, qkvb, projw, projb,
     ln2g, ln2b, fc1w, fc1b, fc2w, fc2b) = params
    t = lambda m: m.T
    c = lambda v: v.reshape(-1, 1)
    return (c(ln1g), c(ln1b), t(qkvw), c(qkvb), t(projw), c(projb),
            c(ln2g), c(ln2b), t(fc1w), c(fc1b), t(fc2w), c(fc2b))


def _forward_impl(w, blocks_params):
    # The block operates independently per batch element and the module
    # returns w[0], so only batch 0 is computed.
    xt = w[0].T                                                           # (RANK, N) lane-dense

    flat = [xt]
    for p in blocks_params:
        flat.extend(_to_lane_dense(p))
    flat = tuple(flat)

    out_t = pl.pallas_call(
        _hypernet_kernel,
        out_shape=jax.ShapeDtypeStruct(xt.shape, xt.dtype),
        in_specs=[_full_spec(a) for a in flat],
        out_specs=_full_spec(xt),
    )(*flat)
    return out_t.T                                                        # back to (N, RANK)


_forward_jit = jax.jit(_forward_impl)


def hypernet_forward(w, blocks_params):
    """Mirrors Hypernet.forward: accepts (N, rank) or (B, N, rank), returns w[0]."""
    if w.ndim == 2:
        w = w[None]
    assert w.ndim == 3, f"Invalid input shape {w.shape}"
    _, out_features, rank = w.shape
    assert rank == RANK, (
        f"Input shape {w.shape[1:]} does not match expected shape {(out_features, RANK)}")
    return _forward_jit(w, tuple(tuple(p) for p in blocks_params))


# --------------------------------------------------------------------------
# Parameter init (reference layout) + pure-JAX reference
# --------------------------------------------------------------------------
def init_block_params(key):
    ks = jax.random.split(key, 4)

    def linear(k, in_d, out_d):
        # stored (in_d, out_d) so the reference does x @ W
        w = jax.random.normal(k, (in_d, out_d), jnp.float32) * 0.02
        b = jnp.zeros((1, out_d), jnp.float32)
        return w, b

    ln1_g = jnp.ones((1, RANK), jnp.float32)
    ln1_b = jnp.zeros((1, RANK), jnp.float32)
    qkv_w, qkv_b = linear(ks[0], RANK, 3 * RANK)
    proj_w, proj_b = linear(ks[1], RANK, RANK)
    ln2_g = jnp.ones((1, RANK), jnp.float32)
    ln2_b = jnp.zeros((1, RANK), jnp.float32)
    fc1_w, fc1_b = linear(ks[2], RANK, HIDDEN)
    fc2_w, fc2_b = linear(ks[3], HIDDEN, RANK)
    return (ln1_g, ln1_b, qkv_w, qkv_b, proj_w, proj_b,
            ln2_g, ln2_b, fc1_w, fc1_b, fc2_w, fc2_b)


def _block_ref(x, params):
    (ln1_g, ln1_b, qkv_w, qkv_b, proj_w, proj_b,
     ln2_g, ln2_b, fc1_w, fc1_b, fc2_w, fc2_b) = params

    def ln(z, g, bta):
        mu = jnp.mean(z, axis=-1, keepdims=True)
        var = jnp.mean(jnp.square(z - mu), axis=-1, keepdims=True)
        return (z - mu) * jax.lax.rsqrt(var + LN_EPS) * g + bta

    xn = ln(x, ln1_g, ln1_b)
    qkv = xn @ qkv_w + qkv_b
    scale = 1.0 / math.sqrt(HEAD_DIM)
    outs = []
    for h in range(NUM_HEADS):
        q = qkv[:, h * HEAD_DIM:(h + 1) * HEAD_DIM]
        k = qkv[:, RANK + h * HEAD_DIM: RANK + (h + 1) * HEAD_DIM]
        v = qkv[:, 2 * RANK + h * HEAD_DIM: 2 * RANK + (h + 1) * HEAD_DIM]
        att = jax.nn.softmax(q @ k.T * scale, axis=-1)
        outs.append(att @ v)
    attn = jnp.concatenate(outs, axis=-1) @ proj_w + proj_b
    x = x + attn
    xn2 = ln(x, ln2_g, ln2_b)
    h1 = jax.nn.gelu(xn2 @ fc1_w + fc1_b, approximate=True)
    return x + (h1 @ fc2_w + fc2_b)


def hypernet_ref(w, blocks_params):
    if w.ndim == 2:
        w = w[None]
    wb = w[0]
    for p in blocks_params:
        wb = _block_ref(wb, p)
    return wb


# --------------------------------------------------------------------------
if __name__ == "__main__":
    key = jax.random.PRNGKey(0)
    k_in, k_params = jax.random.split(key)

    OUT_FEATURES = 128   # lane-dense N (out_features axis maps to lanes in the kernel)
    # 2D input (out_features, rank) -> exercises the unsqueeze(0) path
    w_in = jax.random.normal(k_in, (OUT_FEATURES, RANK), jnp.float32)

    block_keys = jax.random.split(k_params, NUM_BLOCKS)
    blocks_params = [init_block_params(bk) for bk in block_keys]

    out = hypernet_forward(w_in, blocks_params)
    out = jax.block_until_ready(out)

    ref = hypernet_ref(w_in, blocks_params)
    assert out.shape == (OUT_FEATURES, RANK), out.shape
    err = jnp.max(jnp.abs(out - ref))
    assert jnp.allclose(out, ref, atol=1e-2, rtol=1e-2), f"max abs err {err}"

    # Batched (B, N, rank) path: module returns processed w[0] only.
    w_batched = jnp.stack([w_in, 0.5 * w_in])
    out_b = jax.block_until_ready(hypernet_forward(w_batched, blocks_params))
    assert jnp.allclose(out_b, ref, atol=1e-2, rtol=1e-2)

    print("KERNEL_OK")
</pallas_src>

<mosaic_0001>
module attributes {stable_mosaic.version = 11 : i64} {
  func.func @_hypernet_kernel(%arg0: memref<16x128xf32, #tpu.memory_space<vmem>>, %arg1: memref<16x1xf32, #tpu.memory_space<vmem>>, %arg2: memref<16x1xf32, #tpu.memory_space<vmem>>, %arg3: memref<48x16xf32, #tpu.memory_space<vmem>>, %arg4: memref<48x1xf32, #tpu.memory_space<vmem>>, %arg5: memref<16x16xf32, #tpu.memory_space<vmem>>, %arg6: memref<16x1xf32, #tpu.memory_space<vmem>>, %arg7: memref<16x1xf32, #tpu.memory_space<vmem>>, %arg8: memref<16x1xf32, #tpu.memory_space<vmem>>, %arg9: memref<64x16xf32, #tpu.memory_space<vmem>>, %arg10: memref<64x1xf32, #tpu.memory_space<vmem>>, %arg11: memref<16x64xf32, #tpu.memory_space<vmem>>, %arg12: memref<16x1xf32, #tpu.memory_space<vmem>>, %arg13: memref<16x1xf32, #tpu.memory_space<vmem>>, %arg14: memref<16x1xf32, #tpu.memory_space<vmem>>, %arg15: memref<48x16xf32, #tpu.memory_space<vmem>>, %arg16: memref<48x1xf32, #tpu.memory_space<vmem>>, %arg17: memref<16x16xf32, #tpu.memory_space<vmem>>, %arg18: memref<16x1xf32, #tpu.memory_space<vmem>>, %arg19: memref<16x1xf32, #tpu.memory_space<vmem>>, %arg20: memref<16x1xf32, #tpu.memory_space<vmem>>, %arg21: memref<64x16xf32, #tpu.memory_space<vmem>>, %arg22: memref<64x1xf32, #tpu.memory_space<vmem>>, %arg23: memref<16x64xf32, #tpu.memory_space<vmem>>, %arg24: memref<16x1xf32, #tpu.memory_space<vmem>>, %arg25: memref<16x128xf32, #tpu.memory_space<vmem>>) attributes {dimension_semantics = [], scalar_prefetch = 0 : i64, scratch_operands = 0 : i64, tpu.core_type = #tpu.core_type<tc>} {
    %c0 = arith.constant 0 : index
    %c0_0 = arith.constant 0 : index
    %0 = vector.load %arg0[%c0, %c0_0] : memref<16x128xf32, #tpu.memory_space<vmem>>, vector<16x128xf32>
    %c0_1 = arith.constant 0 : index
    %c0_2 = arith.constant 0 : index
    %1 = vector.load %arg1[%c0_1, %c0_2] : memref<16x1xf32, #tpu.memory_space<vmem>>, vector<16x1xf32>
    %c0_3 = arith.constant 0 : index
    %c0_4 = arith.constant 0 : index
    %2 = vector.load %arg2[%c0_3, %c0_4] : memref<16x1xf32, #tpu.memory_space<vmem>>, vector<16x1xf32>
    %c0_5 = arith.constant 0 : index
    %c0_6 = arith.constant 0 : index
    %3 = vector.load %arg3[%c0_5, %c0_6] : memref<48x16xf32, #tpu.memory_space<vmem>>, vector<48x16xf32>
    %c0_7 = arith.constant 0 : index
    %c0_8 = arith.constant 0 : index
    %4 = vector.load %arg4[%c0_7, %c0_8] : memref<48x1xf32, #tpu.memory_space<vmem>>, vector<48x1xf32>
    %c0_9 = arith.constant 0 : index
    %c0_10 = arith.constant 0 : index
    %5 = vector.load %arg5[%c0_9, %c0_10] : memref<16x16xf32, #tpu.memory_space<vmem>>, vector<16x16xf32>
    %c0_11 = arith.constant 0 : index
    %c0_12 = arith.constant 0 : index
    %6 = vector.load %arg6[%c0_11, %c0_12] : memref<16x1xf32, #tpu.memory_space<vmem>>, vector<16x1xf32>
    %c0_13 = arith.constant 0 : index
    %c0_14 = arith.constant 0 : index
    %7 = vector.load %arg7[%c0_13, %c0_14] : memref<16x1xf32, #tpu.memory_space<vmem>>, vector<16x1xf32>
    %c0_15 = arith.constant 0 : index
    %c0_16 = arith.constant 0 : index
    %8 = vector.load %arg8[%c0_15, %c0_16] : memref<16x1xf32, #tpu.memory_space<vmem>>, vector<16x1xf32>
    %c0_17 = arith.constant 0 : index
    %c0_18 = arith.constant 0 : index
    %9 = vector.load %arg9[%c0_17, %c0_18] : memref<64x16xf32, #tpu.memory_space<vmem>>, vector<64x16xf32>
    %c0_19 = arith.constant 0 : index
    %c0_20 = arith.constant 0 : index
    %10 = vector.load %arg10[%c0_19, %c0_20] : memref<64x1xf32, #tpu.memory_space<vmem>>, vector<64x1xf32>
    %c0_21 = arith.constant 0 : index
    %c0_22 = arith.constant 0 : index
    %11 = vector.load %arg11[%c0_21, %c0_22] : memref<16x64xf32, #tpu.memory_space<vmem>>, vector<16x64xf32>
    %c0_23 = arith.constant 0 : index
    %c0_24 = arith.constant 0 : index
    %12 = vector.load %arg12[%c0_23, %c0_24] : memref<16x1xf32, #tpu.memory_space<vmem>>, vector<16x1xf32>
    %cst = arith.constant dense<0.000000e+00> : vector<128xf32>
    %13 = vector.multi_reduction <add>, %0, %cst [0] : vector<16x128xf32> to vector<128xf32>
    %14 = vector.shape_cast %13 : vector<128xf32> to vector<1x128xf32>
    %cst_25 = arith.constant 1.600000e+01 : f32
    %15 = vector.broadcast %cst_25 : f32 to vector<1x128xf32>
    %16 = arith.divf %14, %15 : vector<1x128xf32>
    %17 = vector.broadcast %16 : vector<1x128xf32> to vector<16x128xf32>
    %18 = arith.subf %0, %17 : vector<16x128xf32>
    %19 = arith.mulf %18, %18 : vector<16x128xf32>
    %cst_26 = arith.constant dense<0.000000e+00> : vector<128xf32>
    %20 = vector.multi_reduction <add>, %19, %cst_26 [0] : vector<16x128xf32> to vector<128xf32>
    %21 = vector.shape_cast %20 : vector<128xf32> to vector<1x128xf32>
    %cst_27 = arith.constant 1.600000e+01 : f32
    %22 = vector.broadcast %cst_27 : f32 to vector<1x128xf32>
    %23 = arith.divf %21, %22 : vector<1x128xf32>
    %24 = vector.broadcast %16 : vector<1x128xf32> to vector<16x128xf32>
    %25 = arith.subf %0, %24 : vector<16x128xf32>
    %cst_28 = arith.constant 9.99999997E-7 : f32
    %26 = vector.broadcast %cst_28 : f32 to vector<1x128xf32>
    %27 = arith.addf %23, %26 : vector<1x128xf32>
    %28 = math.rsqrt %27 : vector<1x128xf32>
    %29 = vector.broadcast %28 : vector<1x128xf32> to vector<16x128xf32>
    %30 = arith.mulf %25, %29 : vector<16x128xf32>
    %31 = vector.broadcast %1 : vector<16x1xf32> to vector<16x128xf32>
    %32 = arith.mulf %30, %31 : vector<16x128xf32>
    %33 = vector.broadcast %2 : vector<16x1xf32> to vector<16x128xf32>
    %34 = arith.addf %32, %33 : vector<16x128xf32>
    %cst_29 = arith.constant dense<0.000000e+00> : vector<48x128xf32>
    %35 = tpu.matmul %3, %34, %cst_29 {dimension_numbers = #tpu.dot_dimension_numbers<[1], [0], [0], [1], [0, 0, 1, 1], [], []>} : vector<48x16xf32>, vector<16x128xf32>, vector<48x128xf32> -> vector<48x128xf32>
    %36 = vector.broadcast %4 : vector<48x1xf32> to vector<48x128xf32>
    %37 = arith.addf %35, %36 : vector<48x128xf32>
    %38 = vector.extract_strided_slice %37 {offsets = [0, 0], sizes = [8, 128], strides = [1, 1]} : vector<48x128xf32> to vector<8x128xf32>
    %cst_30 = arith.constant 0.353553385 : f32
    %39 = vector.broadcast %cst_30 : f32 to vector<8x128xf32>
    %40 = arith.mulf %38, %39 : vector<8x128xf32>
    %41 = vector.extract_strided_slice %37 {offsets = [16, 0], sizes = [8, 128], strides = [1, 1]} : vector<48x128xf32> to vector<8x128xf32>
    %42 = vector.extract_strided_slice %37 {offsets = [32, 0], sizes = [8, 128], strides = [1, 1]} : vector<48x128xf32> to vector<8x128xf32>
    %cst_31 = arith.constant dense<0.000000e+00> : vector<128x128xf32>
    %43 = tpu.matmul %40, %41, %cst_31 {dimension_numbers = #tpu.dot_dimension_numbers<[0], [0], [1], [1], [0, 1, 1, 1], [], []>} : vector<8x128xf32>, vector<8x128xf32>, vector<128x128xf32> -> vector<128x128xf32>
    %cst_32 = arith.constant dense<0xFF800000> : vector<128xf32>
    %44 = vector.multi_reduction <maximumf>, %43, %cst_32 [1] : vector<128x128xf32> to vector<128xf32>
    %45 = vector.shape_cast %44 : vector<128xf32> to vector<128x1xf32>
    %46 = vector.broadcast %45 : vector<128x1xf32> to vector<128x128xf32>
    %47 = arith.subf %43, %46 : vector<128x128xf32>
    %48 = math.exp %47 : vector<128x128xf32>
    %cst_33 = arith.constant dense<0.000000e+00> : vector<128xf32>
    %49 = vector.multi_reduction <add>, %48, %cst_33 [1] : vector<128x128xf32> to vector<128xf32>
    %50 = vector.shape_cast %49 : vector<128xf32> to vector<128x1xf32>
    %51 = tpu.reciprocal %50 {approx = true} : vector<128x1xf32> -> vector<128x1xf32>
    %52 = vector.broadcast %51 : vector<128x1xf32> to vector<128x128xf32>
    %53 = arith.mulf %48, %52 : vector<128x128xf32>
    %cst_34 = arith.constant dense<0.000000e+00> : vector<8x128xf32>
    %54 = tpu.matmul %42, %53, %cst_34 {dimension_numbers = #tpu.dot_dimension_numbers<[1], [1], [0], [0], [0, 0, 1, 0], [], []>} : vector<8x128xf32>, vector<128x128xf32>, vector<8x128xf32> -> vector<8x128xf32>
    %55 = vector.extract_strided_slice %5 {offsets = [0, 0], sizes = [16, 8], strides = [1, 1]} : vector<16x16xf32> to vector<16x8xf32>
    %cst_35 = arith.constant dense<0.000000e+00> : vector<16x128xf32>
    %56 = tpu.matmul %55, %54, %cst_35 {dimension_numbers = #tpu.dot_dimension_numbers<[1], [0], [0], [1], [0, 0, 1, 1], [], []>} : vector<16x8xf32>, vector<8x128xf32>, vector<16x128xf32> -> vector<16x128xf32>
    %57 = vector.extract_strided_slice %37 {offsets = [8, 0], sizes = [8, 128], strides = [1, 1]} : vector<48x128xf32> to vector<8x128xf32>
    %cst_36 = arith.constant 0.353553385 : f32
    %58 = vector.broadcast %cst_36 : f32 to vector<8x128xf32>
    %59 = arith.mulf %57, %58 : vector<8x128xf32>
    %60 = vector.extract_strided_slice %37 {offsets = [24, 0], sizes = [8, 128], strides = [1, 1]} : vector<48x128xf32> to vector<8x128xf32>
    %61 = vector.extract_strided_slice %37 {offsets = [40, 0], sizes = [8, 128], strides = [1, 1]} : vector<48x128xf32> to vector<8x128xf32>
    %cst_37 = arith.constant dense<0.000000e+00> : vector<128x128xf32>
    %62 = tpu.matmul %59, %60, %cst_37 {dimension_numbers = #tpu.dot_dimension_numbers<[0], [0], [1], [1], [0, 1, 1, 1], [], []>} : vector<8x128xf32>, vector<8x128xf32>, vector<128x128xf32> -> vector<128x128xf32>
    %cst_38 = arith.constant dense<0xFF800000> : vector<128xf32>
    %63 = vector.multi_reduction <maximumf>, %62, %cst_38 [1] : vector<128x128xf32> to vector<128xf32>
    %64 = vector.shape_cast %63 : vector<128xf32> to vector<128x1xf32>
    %65 = vector.broadcast %64 : vector<128x1xf32> to vector<128x128xf32>
    %66 = arith.subf %62, %65 : vector<128x128xf32>
    %67 = math.exp %66 : vector<128x128xf32>
    %cst_39 = arith.constant dense<0.000000e+00> : vector<128xf32>
    %68 = vector.multi_reduction <add>, %67, %cst_39 [1] : vector<128x128xf32> to vector<128xf32>
    %69 = vector.shape_cast %68 : vector<128xf32> to vector<128x1xf32>
    %70 = tpu.reciprocal %69 {approx = true} : vector<128x1xf32> -> vector<128x1xf32>
    %71 = vector.broadcast %70 : vector<128x1xf32> to vector<128x128xf32>
    %72 = arith.mulf %67, %71 : vector<128x128xf32>
    %cst_40 = arith.constant dense<0.000000e+00> : vector<8x128xf32>
    %73 = tpu.matmul %61, %72, %cst_40 {dimension_numbers = #tpu.dot_dimension_numbers<[1], [1], [0], [0], [0, 0, 1, 0], [], []>} : vector<8x128xf32>, vector<128x128xf32>, vector<8x128xf32> -> vector<8x128xf32>
    %74 = vector.extract_strided_slice %5 {offsets = [0, 8], sizes = [16, 8], strides = [1, 1]} : vector<16x16xf32> to vector<16x8xf32>
    %cst_41 = arith.constant dense<0.000000e+00> : vector<16x128xf32>
    %75 = tpu.matmul %74, %73, %cst_41 {dimension_numbers = #tpu.dot_dimension_numbers<[1], [0], [0], [1], [0, 0, 1, 1], [], []>} : vector<16x8xf32>, vector<8x128xf32>, vector<16x128xf32> -> vector<16x128xf32>
    %76 = arith.addf %56, %75 : vector<16x128xf32>
    %77 = arith.addf %0, %76 : vector<16x128xf32>
    %78 = vector.broadcast %6 : vector<16x1xf32> to vector<16x128xf32>
    %79 = arith.addf %77, %78 : vector<16x128xf32>
    %cst_42 = arith.constant dense<0.000000e+00> : vector<128xf32>
    %80 = vector.multi_reduction <add>, %79, %cst_42 [0] : vector<16x128xf32> to vector<128xf32>
    %81 = vector.shape_cast %80 : vector<128xf32> to vector<1x128xf32>
    %cst_43 = arith.constant 1.600000e+01 : f32
    %82 = vector.broadcast %cst_43 : f32 to vector<1x128xf32>
    %83 = arith.divf %81, %82 : vector<1x128xf32>
    %84 = vector.broadcast %83 : vector<1x128xf32> to vector<16x128xf32>
    %85 = arith.subf %79, %84 : vector<16x128xf32>
    %86 = arith.mulf %85, %85 : vector<16x128xf32>
    %cst_44 = arith.constant dense<0.000000e+00> : vector<128xf32>
    %87 = vector.multi_reduction <add>, %86, %cst_44 [0] : vector<16x128xf32> to vector<128xf32>
    %88 = vector.shape_cast %87 : vector<128xf32> to vector<1x128xf32>
    %cst_45 = arith.constant 1.600000e+01 : f32
    %89 = vector.broadcast %cst_45 : f32 to vector<1x128xf32>
    %90 = arith.divf %88, %89 : vector<1x128xf32>
    %91 = vector.broadcast %83 : vector<1x128xf32> to vector<16x128xf32>
    %92 = arith.subf %79, %91 : vector<16x128xf32>
    %cst_46 = arith.constant 9.99999997E-7 : f32
    %93 = vector.broadcast %cst_46 : f32 to vector<1x128xf32>
    %94 = arith.addf %90, %93 : vector<1x128xf32>
    %95 = math.rsqrt %94 : vector<1x128xf32>
    %96 = vector.broadcast %95 : vector<1x128xf32> to vector<16x128xf32>
    %97 = arith.mulf %92, %96 : vector<16x128xf32>
    %98 = vector.broadcast %7 : vector<16x1xf32> to vector<16x128xf32>
    %99 = arith.mulf %97, %98 : vector<16x128xf32>
    %100 = vector.broadcast %8 : vector<16x1xf32> to vector<16x128xf32>
    %101 = arith.addf %99, %100 : vector<16x128xf32>
    %cst_47 = arith.constant dense<0.000000e+00> : vector<64x128xf32>
    %102 = tpu.matmul %9, %101, %cst_47 {dimension_numbers = #tpu.dot_dimension_numbers<[1], [0], [0], [1], [0, 0, 1, 1], [], []>} : vector<64x16xf32>, vector<16x128xf32>, vector<64x128xf32> -> vector<64x128xf32>
    %103 = vector.broadcast %10 : vector<64x1xf32> to vector<64x128xf32>
    %104 = arith.addf %102, %103 : vector<64x128xf32>
    %105 = arith.mulf %104, %104 : vector<64x128xf32>
    %106 = arith.mulf %104, %105 : vector<64x128xf32>
    %cst_48 = arith.constant 4.471500e-02 : f32
    %107 = vector.broadcast %cst_48 : f32 to vector<64x128xf32>
    %108 = arith.mulf %107, %106 : vector<64x128xf32>
    %109 = arith.addf %104, %108 : vector<64x128xf32>
    %cst_49 = arith.constant 0.797884583 : f32
    %110 = vector.broadcast %cst_49 : f32 to vector<64x128xf32>
    %111 = arith.mulf %110, %109 : vector<64x128xf32>
    %112 = math.tanh %111 : vector<64x128xf32>
    %cst_50 = arith.constant 1.000000e+00 : f32
    %113 = vector.broadcast %cst_50 : f32 to vector<64x128xf32>
    %114 = arith.addf %113, %112 : vector<64x128xf32>
    %cst_51 = arith.constant 5.000000e-01 : f32
    %115 = vector.broadcast %cst_51 : f32 to vector<64x128xf32>
    %116 = arith.mulf %115, %114 : vector<64x128xf32>
    %117 = arith.mulf %104, %116 : vector<64x128xf32>
    %cst_52 = arith.constant dense<0.000000e+00> : vector<16x128xf32>
    %118 = tpu.matmul %11, %117, %cst_52 {dimension_numbers = #tpu.dot_dimension_numbers<[1], [0], [0], [1], [0, 0, 1, 1], [], []>} : vector<16x64xf32>, vector<64x128xf32>, vector<16x128xf32> -> vector<16x128xf32>
    %119 = vector.broadcast %12 : vector<16x1xf32> to vector<16x128xf32>
    %120 = arith.addf %118, %119 : vector<16x128xf32>
    %121 = arith.addf %79, %120 : vector<16x128xf32>
    %c0_53 = arith.constant 0 : index
    %c0_54 = arith.constant 0 : index
    %122 = vector.load %arg13[%c0_53, %c0_54] : memref<16x1xf32, #tpu.memory_space<vmem>>, vector<16x1xf32>
    %c0_55 = arith.constant 0 : index
    %c0_56 = arith.constant 0 : index
    %123 = vector.load %arg14[%c0_55, %c0_56] : memref<16x1xf32, #tpu.memory_space<vmem>>, vector<16x1xf32>
    %c0_57 = arith.constant 0 : index
    %c0_58 = arith.constant 0 : index
    %124 = vector.load %arg15[%c0_57, %c0_58] : memref<48x16xf32, #tpu.memory_space<vmem>>, vector<48x16xf32>
    %c0_59 = arith.constant 0 : index
    %c0_60 = arith.constant 0 : index
    %125 = vector.load %arg16[%c0_59, %c0_60] : memref<48x1xf32, #tpu.memory_space<vmem>>, vector<48x1xf32>
    %c0_61 = arith.constant 0 : index
    %c0_62 = arith.constant 0 : index
    %126 = vector.load %arg17[%c0_61, %c0_62] : memref<16x16xf32, #tpu.memory_space<vmem>>, vector<16x16xf32>
    %c0_63 = arith.constant 0 : index
    %c0_64 = arith.constant 0 : index
    %127 = vector.load %arg18[%c0_63, %c0_64] : memref<16x1xf32, #tpu.memory_space<vmem>>, vector<16x1xf32>
    %c0_65 = arith.constant 0 : index
    %c0_66 = arith.constant 0 : index
    %128 = vector.load %arg19[%c0_65, %c0_66] : memref<16x1xf32, #tpu.memory_space<vmem>>, vector<16x1xf32>
    %c0_67 = arith.constant 0 : index
    %c0_68 = arith.constant 0 : index
    %129 = vector.load %arg20[%c0_67, %c0_68] : memref<16x1xf32, #tpu.memory_space<vmem>>, vector<16x1xf32>
    %c0_69 = arith.constant 0 : index
    %c0_70 = arith.constant 0 : index
    %130 = vector.load %arg21[%c0_69, %c0_70] : memref<64x16xf32, #tpu.memory_space<vmem>>, vector<64x16xf32>
    %c0_71 = arith.constant 0 : index
    %c0_72 = arith.constant 0 : index
    %131 = vector.load %arg22[%c0_71, %c0_72] : memref<64x1xf32, #tpu.memory_space<vmem>>, vector<64x1xf32>
    %c0_73 = arith.constant 0 : index
    %c0_74 = arith.constant 0 : index
    %132 = vector.load %arg23[%c0_73, %c0_74] : memref<16x64xf32, #tpu.memory_space<vmem>>, vector<16x64xf32>
    %c0_75 = arith.constant 0 : index
    %c0_76 = arith.constant 0 : index
    %133 = vector.load %arg24[%c0_75, %c0_76] : memref<16x1xf32, #tpu.memory_space<vmem>>, vector<16x1xf32>
    %cst_77 = arith.constant dense<0.000000e+00> : vector<128xf32>
    %134 = vector.multi_reduction <add>, %121, %cst_77 [0] : vector<16x128xf32> to vector<128xf32>
    %135 = vector.shape_cast %134 : vector<128xf32> to vector<1x128xf32>
    %cst_78 = arith.constant 1.600000e+01 : f32
    %136 = vector.broadcast %cst_78 : f32 to vector<1x128xf32>
    %137 = arith.divf %135, %136 : vector<1x128xf32>
    %138 = vector.broadcast %137 : vector<1x128xf32> to vector<16x128xf32>
    %139 = arith.subf %121, %138 : vector<16x128xf32>
    %140 = arith.mulf %139, %139 : vector<16x128xf32>
    %cst_79 = arith.constant dense<0.000000e+00> : vector<128xf32>
    %141 = vector.multi_reduction <add>, %140, %cst_79 [0] : vector<16x128xf32> to vector<128xf32>
    %142 = vector.shape_cast %141 : vector<128xf32> to vector<1x128xf32>
    %cst_80 = arith.constant 1.600000e+01 : f32
    %143 = vector.broadcast %cst_80 : f32 to vector<1x128xf32>
    %144 = arith.divf %142, %143 : vector<1x128xf32>
    %145 = vector.broadcast %137 : vector<1x128xf32> to vector<16x128xf32>
    %146 = arith.subf %121, %145 : vector<16x128xf32>
    %cst_81 = arith.constant 9.99999997E-7 : f32
    %147 = vector.broadcast %cst_81 : f32 to vector<1x128xf32>
    %148 = arith.addf %144, %147 : vector<1x128xf32>
    %149 = math.rsqrt %148 : vector<1x128xf32>
    %150 = vector.broadcast %149 : vector<1x128xf32> to vector<16x128xf32>
    %151 = arith.mulf %146, %150 : vector<16x128xf32>
    %152 = vector.broadcast %122 : vector<16x1xf32> to vector<16x128xf32>
    %153 = arith.mulf %151, %152 : vector<16x128xf32>
    %154 = vector.broadcast %123 : vector<16x1xf32> to vector<16x128xf32>
    %155 = arith.addf %153, %154 : vector<16x128xf32>
    %cst_82 = arith.constant dense<0.000000e+00> : vector<48x128xf32>
    %156 = tpu.matmul %124, %155, %cst_82 {dimension_numbers = #tpu.dot_dimension_numbers<[1], [0], [0], [1], [0, 0, 1, 1], [], []>} : vector<48x16xf32>, vector<16x128xf32>, vector<48x128xf32> -> vector<48x128xf32>
    %157 = vector.broadcast %125 : vector<48x1xf32> to vector<48x128xf32>
    %158 = arith.addf %156, %157 : vector<48x128xf32>
    %159 = vector.extract_strided_slice %158 {offsets = [0, 0], sizes = [8, 128], strides = [1, 1]} : vector<48x128xf32> to vector<8x128xf32>
    %cst_83 = arith.constant 0.353553385 : f32
    %160 = vector.broadcast %cst_83 : f32 to vector<8x128xf32>
    %161 = arith.mulf %159, %160 : vector<8x128xf32>
    %162 = vector.extract_strided_slice %158 {offsets = [16, 0], sizes = [8, 128], strides = [1, 1]} : vector<48x128xf32> to vector<8x128xf32>
    %163 = vector.extract_strided_slice %158 {offsets = [32, 0], sizes = [8, 128], strides = [1, 1]} : vector<48x128xf32> to vector<8x128xf32>
    %cst_84 = arith.constant dense<0.000000e+00> : vector<128x128xf32>
    %164 = tpu.matmul %161, %162, %cst_84 {dimension_numbers = #tpu.dot_dimension_numbers<[0], [0], [1], [1], [0, 1, 1, 1], [], []>} : vector<8x128xf32>, vector<8x128xf32>, vector<128x128xf32> -> vector<128x128xf32>
    %cst_85 = arith.constant dense<0xFF800000> : vector<128xf32>
    %165 = vector.multi_reduction <maximumf>, %164, %cst_85 [1] : vector<128x128xf32> to vector<128xf32>
    %166 = vector.shape_cast %165 : vector<128xf32> to vector<128x1xf32>
    %167 = vector.broadcast %166 : vector<128x1xf32> to vector<128x128xf32>
    %168 = arith.subf %164, %167 : vector<128x128xf32>
    %169 = math.exp %168 : vector<128x128xf32>
    %cst_86 = arith.constant dense<0.000000e+00> : vector<128xf32>
    %170 = vector.multi_reduction <add>, %169, %cst_86 [1] : vector<128x128xf32> to vector<128xf32>
    %171 = vector.shape_cast %170 : vector<128xf32> to vector<128x1xf32>
    %172 = tpu.reciprocal %171 {approx = true} : vector<128x1xf32> -> vector<128x1xf32>
    %173 = vector.broadcast %172 : vector<128x1xf32> to vector<128x128xf32>
    %174 = arith.mulf %169, %173 : vector<128x128xf32>
    %cst_87 = arith.constant dense<0.000000e+00> : vector<8x128xf32>
    %175 = tpu.matmul %163, %174, %cst_87 {dimension_numbers = #tpu.dot_dimension_numbers<[1], [1], [0], [0], [0, 0, 1, 0], [], []>} : vector<8x128xf32>, vector<128x128xf32>, vector<8x128xf32> -> vector<8x128xf32>
    %176 = vector.extract_strided_slice %126 {offsets = [0, 0], sizes = [16, 8], strides = [1, 1]} : vector<16x16xf32> to vector<16x8xf32>
    %cst_88 = arith.constant dense<0.000000e+00> : vector<16x128xf32>
    %177 = tpu.matmul %176, %175, %cst_88 {dimension_numbers = #tpu.dot_dimension_numbers<[1], [0], [0], [1], [0, 0, 1, 1], [], []>} : vector<16x8xf32>, vector<8x128xf32>, vector<16x128xf32> -> vector<16x128xf32>
    %178 = vector.extract_strided_slice %158 {offsets = [8, 0], sizes = [8, 128], strides = [1, 1]} : vector<48x128xf32> to vector<8x128xf32>
    %cst_89 = arith.constant 0.353553385 : f32
    %179 = vector.broadcast %cst_89 : f32 to vector<8x128xf32>
    %180 = arith.mulf %178, %179 : vector<8x128xf32>
    %181 = vector.extract_strided_slice %158 {offsets = [24, 0], sizes = [8, 128], strides = [1, 1]} : vector<48x128xf32> to vector<8x128xf32>
    %182 = vector.extract_strided_slice %158 {offsets = [40, 0], sizes = [8, 128], strides = [1, 1]} : vector<48x128xf32> to vector<8x128xf32>
    %cst_90 = arith.constant dense<0.000000e+00> : vector<128x128xf32>
    %183 = tpu.matmul %180, %181, %cst_90 {dimension_numbers = #tpu.dot_dimension_numbers<[0], [0], [1], [1], [0, 1, 1, 1], [], []>} : vector<8x128xf32>, vector<8x128xf32>, vector<128x128xf32> -> vector<128x128xf32>
    %cst_91 = arith.constant dense<0xFF800000> : vector<128xf32>
    %184 = vector.multi_reduction <maximumf>, %183, %cst_91 [1] : vector<128x128xf32> to vector<128xf32>
    %185 = vector.shape_cast %184 : vector<128xf32> to vector<128x1xf32>
    %186 = vector.broadcast %185 : vector<128x1xf32> to vector<128x128xf32>
    %187 = arith.subf %183, %186 : vector<128x128xf32>
    %188 = math.exp %187 : vector<128x128xf32>
    %cst_92 = arith.constant dense<0.000000e+00> : vector<128xf32>
    %189 = vector.multi_reduction <add>, %188, %cst_92 [1] : vector<128x128xf32> to vector<128xf32>
    %190 = vector.shape_cast %189 : vector<128xf32> to vector<128x1xf32>
    %191 = tpu.reciprocal %190 {approx = true} : vector<128x1xf32> -> vector<128x1xf32>
    %192 = vector.broadcast %191 : vector<128x1xf32> to vector<128x128xf32>
    %193 = arith.mulf %188, %192 : vector<128x128xf32>
    %cst_93 = arith.constant dense<0.000000e+00> : vector<8x128xf32>
    %194 = tpu.matmul %182, %193, %cst_93 {dimension_numbers = #tpu.dot_dimension_numbers<[1], [1], [0], [0], [0, 0, 1, 0], [], []>} : vector<8x128xf32>, vector<128x128xf32>, vector<8x128xf32> -> vector<8x128xf32>
    %195 = vector.extract_strided_slice %126 {offsets = [0, 8], sizes = [16, 8], strides = [1, 1]} : vector<16x16xf32> to vector<16x8xf32>
    %cst_94 = arith.constant dense<0.000000e+00> : vector<16x128xf32>
    %196 = tpu.matmul %195, %194, %cst_94 {dimension_numbers = #tpu.dot_dimension_numbers<[1], [0], [0], [1], [0, 0, 1, 1], [], []>} : vector<16x8xf32>, vector<8x128xf32>, vector<16x128xf32> -> vector<16x128xf32>
    %197 = arith.addf %177, %196 : vector<16x128xf32>
    %198 = arith.addf %121, %197 : vector<16x128xf32>
    %199 = vector.broadcast %127 : vector<16x1xf32> to vector<16x128xf32>
    %200 = arith.addf %198, %199 : vector<16x128xf32>
    %cst_95 = arith.constant dense<0.000000e+00> : vector<128xf32>
    %201 = vector.multi_reduction <add>, %200, %cst_95 [0] : vector<16x128xf32> to vector<128xf32>
    %202 = vector.shape_cast %201 : vector<128xf32> to vector<1x128xf32>
    %cst_96 = arith.constant 1.600000e+01 : f32
    %203 = vector.broadcast %cst_96 : f32 to vector<1x128xf32>
    %204 = arith.divf %202, %203 : vector<1x128xf32>
    %205 = vector.broadcast %204 : vector<1x128xf32> to vector<16x128xf32>
    %206 = arith.subf %200, %205 : vector<16x128xf32>
    %207 = arith.mulf %206, %206 : vector<16x128xf32>
    %cst_97 = arith.constant dense<0.000000e+00> : vector<128xf32>
    %208 = vector.multi_reduction <add>, %207, %cst_97 [0] : vector<16x128xf32> to vector<128xf32>
    %209 = vector.shape_cast %208 : vector<128xf32> to vector<1x128xf32>
    %cst_98 = arith.constant 1.600000e+01 : f32
    %210 = vector.broadcast %cst_98 : f32 to vector<1x128xf32>
    %211 = arith.divf %209, %210 : vector<1x128xf32>
    %212 = vector.broadcast %204 : vector<1x128xf32> to vector<16x128xf32>
    %213 = arith.subf %200, %212 : vector<16x128xf32>
    %cst_99 = arith.constant 9.99999997E-7 : f32
    %214 = vector.broadcast %cst_99 : f32 to vector<1x128xf32>
    %215 = arith.addf %211, %214 : vector<1x128xf32>
    %216 = math.rsqrt %215 : vector<1x128xf32>
    %217 = vector.broadcast %216 : vector<1x128xf32> to vector<16x128xf32>
    %218 = arith.mulf %213, %217 : vector<16x128xf32>
    %219 = vector.broadcast %128 : vector<16x1xf32> to vector<16x128xf32>
    %220 = arith.mulf %218, %219 : vector<16x128xf32>
    %221 = vector.broadcast %129 : vector<16x1xf32> to vector<16x128xf32>
    %222 = arith.addf %220, %221 : vector<16x128xf32>
    %cst_100 = arith.constant dense<0.000000e+00> : vector<64x128xf32>
    %223 = tpu.matmul %130, %222, %cst_100 {dimension_numbers = #tpu.dot_dimension_numbers<[1], [0], [0], [1], [0, 0, 1, 1], [], []>} : vector<64x16xf32>, vector<16x128xf32>, vector<64x128xf32> -> vector<64x128xf32>
    %224 = vector.broadcast %131 : vector<64x1xf32> to vector<64x128xf32>
    %225 = arith.addf %223, %224 : vector<64x128xf32>
    %226 = arith.mulf %225, %225 : vector<64x128xf32>
    %227 = arith.mulf %225, %226 : vector<64x128xf32>
    %cst_101 = arith.constant 4.471500e-02 : f32
    %228 = vector.broadcast %cst_101 : f32 to vector<64x128xf32>
    %229 = arith.mulf %228, %227 : vector<64x128xf32>
    %230 = arith.addf %225, %229 : vector<64x128xf32>
    %cst_102 = arith.constant 0.797884583 : f32
    %231 = vector.broadcast %cst_102 : f32 to vector<64x128xf32>
    %232 = arith.mulf %231, %230 : vector<64x128xf32>
    %233 = math.tanh %232 : vector<64x128xf32>
    %cst_103 = arith.constant 1.000000e+00 : f32
    %234 = vector.broadcast %cst_103 : f32 to vector<64x128xf32>
    %235 = arith.addf %234, %233 : vector<64x128xf32>
    %cst_104 = arith.constant 5.000000e-01 : f32
    %236 = vector.broadcast %cst_104 : f32 to vector<64x128xf32>
    %237 = arith.mulf %236, %235 : vector<64x128xf32>
    %238 = arith.mulf %225, %237 : vector<64x128xf32>
    %cst_105 = arith.constant dense<0.000000e+00> : vector<16x128xf32>
    %239 = tpu.matmul %132, %238, %cst_105 {dimension_numbers = #tpu.dot_dimension_numbers<[1], [0], [0], [1], [0, 0, 1, 1], [], []>} : vector<16x64xf32>, vector<64x128xf32>, vector<16x128xf32> -> vector<16x128xf32>
    %240 = vector.broadcast %133 : vector<16x1xf32> to vector<16x128xf32>
    %241 = arith.addf %239, %240 : vector<16x128xf32>
    %242 = arith.addf %200, %241 : vector<16x128xf32>
    %c0_106 = arith.constant 0 : index
    %c0_107 = arith.constant 0 : index
    %243 = vector.load %arg25[%c0_106, %c0_107] : memref<16x128xf32, #tpu.memory_space<vmem>>, vector<16x128xf32>
    tpu.vector_store %arg25[%c0_106, %c0_107], %242 {strides = array<i32>} : memref<16x128xf32, #tpu.memory_space<vmem>>, vector<16x128xf32>,
    return
  }
}

</mosaic_0001>

<llo_original>
// kernel: _forward_impl.1
$region0: #{_forward_impl.1}
  #allocation0 [shape = 'u32[]', space=smem, size = 0x4, offset = 0x4, fixed_abs, tag = 'smem constant byte address 0x4 - core index']
  #allocation1 [shape = 'u32[144,128]{1,0:T(1,128)}', space=vmem, size = 0x12000, scoped, tag = 'internal scratch']
  %s0 = inlined_call_operand.vmem [shape: f32[16,128], index: 0, kind: input, shape index: {}]
  %s1 = inlined_call_operand.vmem [shape: f32[16,1], index: 1, kind: input, shape index: {}]
  %s2 = inlined_call_operand.vmem [shape: f32[16,1], index: 2, kind: input, shape index: {}]
  %s3 = inlined_call_operand.vmem [shape: f32[48,16], index: 3, kind: input, shape index: {}]
  %s4 = inlined_call_operand.vmem [shape: f32[48,1], index: 4, kind: input, shape index: {}]
  %s5 = inlined_call_operand.vmem [shape: f32[16,16], index: 5, kind: input, shape index: {}]
  %s6 = inlined_call_operand.vmem [shape: f32[16,1], index: 6, kind: input, shape index: {}]
  %s7 = inlined_call_operand.vmem [shape: f32[16,1], index: 7, kind: input, shape index: {}]
  %s8 = inlined_call_operand.vmem [shape: f32[16,1], index: 8, kind: input, shape index: {}]
  %s9 = inlined_call_operand.vmem [shape: f32[64,16], index: 9, kind: input, shape index: {}]
  %s10 = inlined_call_operand.vmem [shape: f32[64,1], index: 10, kind: input, shape index: {}]
  %s11 = inlined_call_operand.vmem [shape: f32[16,64], index: 11, kind: input, shape index: {}]
  %s12 = inlined_call_operand.vmem [shape: f32[16,1], index: 12, kind: input, shape index: {}]
  %s13 = inlined_call_operand.vmem [shape: f32[16,1], index: 13, kind: input, shape index: {}]
  %s14 = inlined_call_operand.vmem [shape: f32[16,1], index: 14, kind: input, shape index: {}]
  %s15 = inlined_call_operand.vmem [shape: f32[48,16], index: 15, kind: input, shape index: {}]
  %s16 = inlined_call_operand.vmem [shape: f32[48,1], index: 16, kind: input, shape index: {}]
  %s17 = inlined_call_operand.vmem [shape: f32[16,16], index: 17, kind: input, shape index: {}]
  %s18 = inlined_call_operand.vmem [shape: f32[16,1], index: 18, kind: input, shape index: {}]
  %s19 = inlined_call_operand.vmem [shape: f32[16,1], index: 19, kind: input, shape index: {}]
  %s20 = inlined_call_operand.vmem [shape: f32[16,1], index: 20, kind: input, shape index: {}]
  %s21 = inlined_call_operand.vmem [shape: f32[64,16], index: 21, kind: input, shape index: {}]
  %s22 = inlined_call_operand.vmem [shape: f32[64,1], index: 22, kind: input, shape index: {}]
  %s23 = inlined_call_operand.vmem [shape: f32[16,64], index: 23, kind: input, shape index: {}]
  %s24 = inlined_call_operand.vmem [shape: f32[16,1], index: 24, kind: input, shape index: {}]
  %s25 = inlined_call_operand.hbm [shape: f32[16,128], index: 25, kind: output, shape index: {}]
  %s26 = sld [smem:[#allocation0]]
  $region110: #{_forward_impl.1} parent=0
    _
  %s28 = ssub.s32 1, %s26
  %s29 = scalar_select 0, %s28, %s26
  $region1: #{_forward_impl.1} parent=0
    #allocation2 [shape = 'u8[8192]{0}', space=vmem, size = 0x2000, scoped, tag = 'output window, operand 0, single buffered']
    #allocation3 [shape = 's32[1]{0}', space=sflag, size = 0x4, scoped, tag = 'scoped memory for _forward_impl.1']
    %30 = vsyncpa [#allocation3], 0
    // Predicated region
    $region2: #{_forward_impl.1} parent=1 // pred_check
      _
    $region3: #{_forward_impl.1} parent=1 // pred_check_branch
      %32 = sbr.rel (0) target = $region5
    $region4: #{_forward_impl.1} parent=1 // pred_region
      _
    $region5: #{_forward_impl.1} parent=1 // pred_fallthru
      _
    // Predicated region
    $region6: #{_forward_impl.1} parent=1 // pred_check
      _
    $region7: #{_forward_impl.1} parent=1 // pred_check_branch
      %34 = sbr.rel (0) target = $region9
    $region8: #{_forward_impl.1} parent=1 // pred_region
      _
    $region9: #{_forward_impl.1} parent=1 // pred_fallthru
      _
    // Predicated region
    $region10: #{_forward_impl.1} parent=1 // pred_check
      _
    $region11: #{_forward_impl.1} parent=1 // pred_check_branch
      %36 = sbr.rel (0) target = $region13
    $region12: #{_forward_impl.1} parent=1 // pred_region
      _
    $region13: #{_forward_impl.1} parent=1 // pred_fallthru
      _
    // Predicated region
    $region14: #{_forward_impl.1} parent=1 // pred_check
      _
    $region15: #{_forward_impl.1} parent=1 // pred_check_branch
      %38 = sbr.rel (0) target = $region17
    $region16: #{_forward_impl.1} parent=1 // pred_region
      _
    $region17: #{_forward_impl.1} parent=1 // pred_fallthru
      _
    // Predicated region
    $region18: #{_forward_impl.1} parent=1 // pred_check
      _
    $region19: #{_forward_impl.1} parent=1 // pred_check_branch
      %40 = sbr.rel (0) target = $region21
    $region20: #{_forward_impl.1} parent=1 // pred_region
      _
    $region21: #{_forward_impl.1} parent=1 // pred_fallthru
      _
    // Predicated region
    $region22: #{_forward_impl.1} parent=1 // pred_check
      _
    $region23: #{_forward_impl.1} parent=1 // pred_check_branch
      %42 = sbr.rel (0) target = $region25
    $region24: #{_forward_impl.1} parent=1 // pred_region
      _
    $region25: #{_forward_impl.1} parent=1 // pred_fallthru
      _
    // Predicated region
    $region26: #{_forward_impl.1} parent=1 // pred_check
      _
    $region27: #{_forward_impl.1} parent=1 // pred_check_branch
      %44 = sbr.rel (0) target = $region29
    $region28: #{_forward_impl.1} parent=1 // pred_region
      _
    $region29: #{_forward_impl.1} parent=1 // pred_fallthru
      _
    // Predicated region
    $region30: #{_forward_impl.1} parent=1 // pred_check
      _
    $region31: #{_forward_impl.1} parent=1 // pred_check_branch
      %46 = sbr.rel (0) target = $region33
    $region32: #{_forward_impl.1} parent=1 // pred_region
      _
    $region33: #{_forward_impl.1} parent=1 // pred_fallthru
      _
    // Predicated region
    $region34: #{_forward_impl.1} parent=1 // pred_check
      _
    $region35: #{_forward_impl.1} parent=1 // pred_check_branch
      %48 = sbr.rel (0) target = $region37
    $region36: #{_forward_impl.1} parent=1 // pred_region
      _
    $region37: #{_forward_impl.1} parent=1 // pred_fallthru
      _
    // Predicated region
    $region38: #{_forward_impl.1} parent=1 // pred_check
      _
    $region39: #{_forward_impl.1} parent=1 // pred_check_branch
      %50 = sbr.rel (0) target = $region41
    $region40: #{_forward_impl.1} parent=1 // pred_region
      _
    $region41: #{_forward_impl.1} parent=1 // pred_fallthru
      _
    // Predicated region
    $region42: #{_forward_impl.1} parent=1 // pred_check
      _
    $region43: #{_forward_impl.1} parent=1 // pred_check_branch
      %52 = sbr.rel (0) target = $region45
    $region44: #{_forward_impl.1} parent=1 // pred_region
      _
    $region45: #{_forward_impl.1} parent=1 // pred_fallthru
      _
    // Predicated region
    $region46: #{_forward_impl.1} parent=1 // pred_check
      _
    $region47: #{_forward_impl.1} parent=1 // pred_check_branch
      %54 = sbr.rel (0) target = $region49
    $region48: #{_forward_impl.1} parent=1 // pred_region
      _
    $region49: #{_forward_impl.1} parent=1 // pred_fallthru
      _
    // Predicated region
    $region50: #{_forward_impl.1} parent=1 // pred_check
      _
    $region51: #{_forward_impl.1} parent=1 // pred_check_branch
      %56 = sbr.rel (0) target = $region53
    $region52: #{_forward_impl.1} parent=1 // pred_region
      _
    $region53: #{_forward_impl.1} parent=1 // pred_fallthru
      _
    // Predicated region
    $region54: #{_forward_impl.1} parent=1 // pred_check
      _
    $region55: #{_forward_impl.1} parent=1 // pred_check_branch
      %58 = sbr.rel (0) target = $region57
    $region56: #{_forward_impl.1} parent=1 // pred_region
      _
    $region57: #{_forward_impl.1} parent=1 // pred_fallthru
      _
    // Predicated region
    $region58: #{_forward_impl.1} parent=1 // pred_check
      _
    $region59: #{_forward_impl.1} parent=1 // pred_check_branch
      %60 = sbr.rel (0) target = $region61
    $region60: #{_forward_impl.1} parent=1 // pred_region
      _
    $region61: #{_forward_impl.1} parent=1 // pred_fallthru
      _
    // Predicated region
    $region62: #{_forward_impl.1} parent=1 // pred_check
      _
    $region63: #{_forward_impl.1} parent=1 // pred_check_branch
      %62 = sbr.rel (0) target = $region65
    $region64: #{_forward_impl.1} parent=1 // pred_region
      _
    $region65: #{_forward_impl.1} parent=1 // pred_fallthru
      _
    // Predicated region
    $region66: #{_forward_impl.1} parent=1 // pred_check
      _
    $region67: #{_forward_impl.1} parent=1 // pred_check_branch
      %64 = sbr.rel (0) target = $region69
    $region68: #{_forward_impl.1} parent=1 // pred_region
      _
    $region69: #{_forward_impl.1} parent=1 // pred_fallthru
      _
    // Predicated region
    $region70: #{_forward_impl.1} parent=1 // pred_check
      _
    $region71: #{_forward_impl.1} parent=1 // pred_check_branch
      %66 = sbr.rel (0) target = $region73
    $region72: #{_forward_impl.1} parent=1 // pred_region
      _
    $region73: #{_forward_impl.1} parent=1 // pred_fallthru
      _
    // Predicated region
    $region74: #{_forward_impl.1} parent=1 // pred_check
      _
    $region75: #{_forward_impl.1} parent=1 // pred_check_branch
      %68 = sbr.rel (0) target = $region77
    $region76: #{_forward_impl.1} parent=1 // pred_region
      _
    $region77: #{_forward_impl.1} parent=1 // pred_fallthru
      _
    // Predicated region
    $region78: #{_forward_impl.1} parent=1 // pred_check
      _
    $region79: #{_forward_impl.1} parent=1 // pred_check_branch
      %70 = sbr.rel (0) target = $region81
    $region80: #{_forward_impl.1} parent=1 // pred_region
      _
    $region81: #{_forward_impl.1} parent=1 // pred_fallthru
      _
    // Predicated region
    $region82: #{_forward_impl.1} parent=1 // pred_check
      _
    $region83: #{_forward_impl.1} parent=1 // pred_check_branch
      %72 = sbr.rel (0) target = $region85
    $region84: #{_forward_impl.1} parent=1 // pred_region
      _
    $region85: #{_forward_impl.1} parent=1 // pred_fallthru
      _
    // Predicated region
    $region86: #{_forward_impl.1} parent=1 // pred_check
      _
    $region87: #{_forward_impl.1} parent=1 // pred_check_branch
      %74 = sbr.rel (0) target = $region89
    $region88: #{_forward_impl.1} parent=1 // pred_region
      _
    $region89: #{_forward_impl.1} parent=1 // pred_fallthru
      _
    // Predicated region
    $region90: #{_forward_impl.1} parent=1 // pred_check
      _
    $region91: #{_forward_impl.1} parent=1 // pred_check_branch
      %76 = sbr.rel (0) target = $region93
    $region92: #{_forward_impl.1} parent=1 // pred_region
      _
    $region93: #{_forward_impl.1} parent=1 // pred_fallthru
      _
    // Predicated region
    $region94: #{_forward_impl.1} parent=1 // pred_check
      _
    $region95: #{_forward_impl.1} parent=1 // pred_check_branch
      %78 = sbr.rel (0) target = $region97
    $region96: #{_forward_impl.1} parent=1 // pred_region
      _
    $region97: #{_forward_impl.1} parent=1 // pred_fallthru
      _
    // Predicated region
    $region98: #{_forward_impl.1} parent=1 // pred_check
      _
    $region99: #{_forward_impl.1} parent=1 // pred_check_branch
      %80 = sbr.rel (0) target = $region101
    $region100: #{_forward_impl.1} parent=1 // pred_region
      _
    $region101: #{_forward_impl.1} parent=1 // pred_fallthru
      _
    %v81 = vld [vmem:[%s0] sm:$0xff]
    %v82 = vld [vmem:[%s0 + $0x8] sm:$0xff]
    %v83 = vld [vmem:[%s1] sm:$0xff]
    %v84 = vld [vmem:[%s1 + $0x8] sm:$0xff]
    %v85 = vld [vmem:[%s2] sm:$0xff]
    %v86 = vld [vmem:[%s2 + $0x8] sm:$0xff]
    %v87 = vld [vmem:[%s3] sm:$0xff]
    %v88 = vld [vmem:[%s3 + $0x8] sm:$0xff]
    %v89 = vld [vmem:[%s3 + $0x10] sm:$0xff]
    %v90 = vld [vmem:[%s3 + $0x18] sm:$0xff]
    %v91 = vld [vmem:[%s3 + $0x20] sm:$0xff]
    %v92 = vld [vmem:[%s3 + $0x28] sm:$0xff]
    %v93 = vld [vmem:[%s4] sm:$0xff]
    %v94 = vld [vmem:[%s4 + $0x8] sm:$0xff]
    %v95 = vld [vmem:[%s4 + $0x10] sm:$0xff]
    %v96 = vld [vmem:[%s4 + $0x18] sm:$0xff]
    %v97 = vld [vmem:[%s4 + $0x20] sm:$0xff]
    %v98 = vld [vmem:[%s4 + $0x28] sm:$0xff]
    %v99 = vld [vmem:[%s5] sm:$0xff]
    %v100 = vld [vmem:[%s5 + $0x8] sm:$0xff]
    %v101 = vld [vmem:[%s6] sm:$0xff]
    %v102 = vld [vmem:[%s6 + $0x8] sm:$0xff]
    %v103 = vld [vmem:[%s7] sm:$0xff]
    %v104 = vld [vmem:[%s7 + $0x8] sm:$0xff]
    %v105 = vld [vmem:[%s8] sm:$0xff]
    %v106 = vld [vmem:[%s8 + $0x8] sm:$0xff]
    %v107 = vld [vmem:[%s9] sm:$0xff]
    %v108 = vld [vmem:[%s9 + $0x8] sm:$0xff]
    %v109 = vld [vmem:[%s9 + $0x10] sm:$0xff]
    %v110 = vld [vmem:[%s9 + $0x18] sm:$0xff]
    %v111 = vld [vmem:[%s9 + $0x20] sm:$0xff]
    %v112 = vld [vmem:[%s9 + $0x28] sm:$0xff]
    %v113 = vld [vmem:[%s9 + $0x30] sm:$0xff]
    %v114 = vld [vmem:[%s9 + $0x38] sm:$0xff]
    %v115 = vld [vmem:[%s10] sm:$0xff]
    %v116 = vld [vmem:[%s10 + $0x8] sm:$0xff]
    %v117 = vld [vmem:[%s10 + $0x10] sm:$0xff]
    %v118 = vld [vmem:[%s10 + $0x18] sm:$0xff]
    %v119 = vld [vmem:[%s10 + $0x20] sm:$0xff]
    %v120 = vld [vmem:[%s10 + $0x28] sm:$0xff]
    %v121 = vld [vmem:[%s10 + $0x30] sm:$0xff]
    %v122 = vld [vmem:[%s10 + $0x38] sm:$0xff]
    %v123 = vld [vmem:[%s11] sm:$0xff]
    %v124 = vld [vmem:[%s11 + $0x8] sm:$0xff]
    %v125 = vld [vmem:[%s12] sm:$0xff]
    %v126 = vld [vmem:[%s12 + $0x8] sm:$0xff]
    %v127 = vadd.f32 %v81, %v82
    %v128 = vrot.slane %v127, 4
    %v129 = vadd.f32 %v127, %v128
    %v130 = vrot.slane %v129, 2
    %v131 = vadd.f32 %v129, %v130
    %v132 = vrot.slane %v131, 1
    %v133 = vadd.f32 %v131, %v132
    %v134 = vrcp.pop 16.0
    %v135 = vmul.f32 %v133, %v134
    %v136 = vsub.f32 %v81, %v135
    %v137 = vsub.f32 %v82, %v135
    %v138 = vmul.f32 %v136, %v136
    %v139 = vmul.f32 %v137, %v137
    %v140 = vadd.f32 %v138, %v139
    %v141 = vrot.slane %v140, 4
    %v142 = vadd.f32 %v140, %v141
    %v143 = vrot.slane %v142, 2
    %v144 = vadd.f32 %v142, %v143
    %v145 = vrot.slane %v144, 1
    %v146 = vadd.f32 %v144, %v145
    %v147 = vmul.f32 %v146, %v134
    %v148 = vadd.f32 %v147, 1e-06
    %v149 = vrsqrt.pop %v148
    %v150 = vmul.f32 %v136, %v149
    %v151 = vmul.f32 %v137, %v149
    %153 = vset.pattern.permute.xlu0 0
    %154 = vperm.xlu0 %153, %v83
    %v155 = vpop.permute.xlu0 %154
    %158 = vset.pattern.permute.xlu0 0
    %159 = vperm.xlu0 %158, %v84
    %v160 = vpop.permute.xlu0 %159
    %v162 = vmul.f32 %v150, %v155
    %v163 = vmul.f32 %v151, %v160
    %165 = vset.pattern.permute.xlu0 0
    %166 = vperm.xlu0 %165, %v85
    %v167 = vpop.permute.xlu0 %166
    %170 = vset.pattern.permute.xlu0 0
    %171 = vperm.xlu0 %170, %v86
    %v172 = vpop.permute.xlu0 %171
    %v174 = vadd.f32 %v162, %v167
    %v175 = vadd.f32 %v163, %v172
    %177 = vset.pattern.permute.xlu0 0
    %178 = vperm.xlu0 %177, %v93
    %v179 = vpop.permute.xlu0 %178
    %182 = vset.pattern.permute.xlu0 0
    %183 = vperm.xlu0 %182, %v94
    %v184 = vpop.permute.xlu0 %183
    %187 = vset.pattern.permute.xlu0 0
    %188 = vperm.xlu0 %187, %v95
    %v189 = vpop.permute.xlu0 %188
    %192 = vset.pattern.permute.xlu0 0
    %193 = vperm.xlu0 %192, %v96
    %v194 = vpop.permute.xlu0 %193
    %197 = vset.pattern.permute.xlu0 0
    %198 = vperm.xlu0 %197, %v97
    %v199 = vpop.permute.xlu0 %198
    %202 = vset.pattern.permute.xlu0 0
    %203 = vperm.xlu0 %202, %v98
    %v204 = vpop.permute.xlu0 %203
    %vm206 = vcmask 130048
    %v208 = vsel %vm206, %v87, 0
    %v211 = vsel %vm206, %v88, 0
    %v214 = vsel %vm206, %v89, 0
    %v217 = vsel %vm206, %v90, 0
    %v220 = vsel %vm206, %v91, 0
    %v223 = vsel %vm206, %v92, 0
    %225 = vmatprep.subr.mxu0 0.0
    %226 = vmatpush1.msra.mxu0 %v174
    %227 = vmatprep.subr.mxu0 0.0
    %228 = vmatpush1.msra.mxu0 %v175
    %229 = vmatprep.subr.mxu0 0.0
    %230 = vmatpush1.msra.mxu0 0.0
    %231 = vmatprep.subr.mxu0 0.0
    %232 = vmatpush1.msra.mxu0 0.0
    %233 = vmatprep.subr.mxu0 0.0
    %234 = vmatpush1.msra.mxu0 0.0
    %235 = vmatprep.subr.mxu0 0.0
    %236 = vmatpush1.msra.mxu0 0.0
    %237 = vmatprep.subr.mxu0 0.0
    %238 = vmatpush1.msra.mxu0 0.0
    %239 = vmatprep.subr.mxu0 0.0
    %240 = vmatpush1.msra.mxu0 0.0
    %241 = vmatprep.subr.mxu0 0.0
    %242 = vmatpush1.msra.mxu0 0.0
    %243 = vmatprep.subr.mxu0 0.0
    %244 = vmatpush1.msra.mxu0 0.0
    %245 = vmatprep.subr.mxu0 0.0
    %246 = vmatpush1.msra.mxu0 0.0
    %247 = vmatprep.subr.mxu0 0.0
    %248 = vmatpush1.msra.mxu0 0.0
    %249 = vmatprep.subr.mxu0 0.0
    %250 = vmatpush1.msra.mxu0 0.0
    %251 = vmatprep.subr.mxu0 0.0
    %252 = vmatpush1.msra.mxu0 0.0
    %253 = vmatprep.subr.mxu0 0.0
    %254 = vmatpush1.msra.mxu0 0.0
    %255 = vmatprep.subr.mxu0 0.0
    %256 = vmatpush1.msra.mxu0 0.0
    %257 = vmatprep.subr.mxu0 0.0
    %258 = vmatpush1.msra.mxu0 0.0
    %259 = vmatprep.subr.mxu0 0.0
    %260 = vmatpush1.msra.mxu0 0.0
    %261 = vmatprep.subr.mxu0 0.0
    %262 = vmatpush1.msra.mxu0 0.0
    %263 = vmatprep.subr.mxu0 0.0
    %264 = vmatpush1.msra.mxu0 0.0
    %265 = vmatprep.subr.mxu0 0.0
    %266 = vmatpush1.msra.mxu0 0.0
    %267 = vmatprep.subr.mxu0 0.0
    %268 = vmatpush1.msra.mxu0 0.0
    %269 = vmatprep.subr.mxu0 0.0
    %270 = vmatpush1.msra.mxu0 0.0
    %271 = vmatprep.subr.mxu0 0.0
    %272 = vmatpush1.msra.mxu0 0.0
    %273 = vmatprep.subr.mxu0 0.0
    %274 = vmatpush1.msra.mxu0 0.0
    %275 = vmatprep.subr.mxu0 0.0
    %276 = vmatpush1.msra.mxu0 0.0
    %277 = vmatprep.subr.mxu0 0.0
    %278 = vmatpush1.msra.mxu0 0.0
    %279 = vmatprep.subr.mxu0 0.0
    %280 = vmatpush1.msra.mxu0 0.0
    %281 = vmatprep.subr.mxu0 0.0
    %282 = vmatpush1.msra.mxu0 0.0
    %283 = vmatprep.subr.mxu0 0.0
    %284 = vmatpush1.msra.mxu0 0.0
    %285 = vmatprep.subr.mxu0 0.0
    %286 = vmatpush1.msra.mxu0 0.0
    %287 = vmatprep.subr.mxu0 0.0
    %288 = vmatpush1.msra.mxu0 0.0
    %289 = vmatprep.mubr.f32.mxu0 0.0
    %290 = vmatmul.mubr.f32.gmra.mrb[0].mxu0 %v208
    %v291 = vpop.f32.mrb[0].mxu0
    %v292 = vadd.f32 %v179, %v291
    %v293 = vpop.f32.mrb[0].mxu0
    %294 = vmatprep.mubr.f32.mxu0 0.0
    %295 = vmatmul.mubr.f32.gmra.mrb[0].mxu0 %v211
    %v296 = vpop.f32.mrb[0].mxu0
    %v297 = vadd.f32 %v184, %v296
    %v298 = vpop.f32.mrb[0].mxu0
    %299 = vmatprep.mubr.f32.mxu0 0.0
    %300 = vmatmul.mubr.f32.gmra.mrb[0].mxu0 %v214
    %v301 = vpop.f32.mrb[0].mxu0
    %v302 = vadd.f32 %v189, %v301
    %v303 = vpop.f32.mrb[0].mxu0
    %304 = vmatprep.mubr.f32.mxu0 0.0
    %305 = vmatmul.mubr.f32.gmra.mrb[0].mxu0 %v217
    %v306 = vpop.f32.mrb[0].mxu0
    %v307 = vadd.f32 %v194, %v306
    %v308 = vpop.f32.mrb[0].mxu0
    %309 = vmatprep.mubr.f32.mxu0 0.0
    %310 = vmatmul.mubr.f32.gmra.mrb[0].mxu0 %v220
    %v311 = vpop.f32.mrb[0].mxu0
    %v312 = vadd.f32 %v199, %v311
    %v313 = vpop.f32.mrb[0].mxu0
    %314 = vmatprep.mubr.f32.mxu0 0.0
    %315 = vmatmul.mubr.f32.gmra.mrb[0].mxu0 %v223
    %v316 = vpop.f32.mrb[0].mxu0
    %v317 = vadd.f32 %v204, %v316
    %v318 = vpop.f32.mrb[0].mxu0
    %319 = vdwg.mxu0
    %v320 = vmul.f32 %v292, 0.35355338
    %321 = vxpose.xlu0.b32.start [1/16] %v320, 128
    %322 = vxpose.xlu0.b32.cont [2/16] 0.0, 128
    %323 = vxpose.xlu0.b32.cont [3/16] 0.0, 128
    %324 = vxpose.xlu0.b32.cont [4/16] 0.0, 128
    %325 = vxpose.xlu0.b32.cont [5/16] 0.0, 128
    %326 = vxpose.xlu0.b32.cont [6/16] 0.0, 128
    %327 = vxpose.xlu0.b32.cont [7/16] 0.0, 128
    %328 = vxpose.xlu0.b32.cont [8/16] 0.0, 128
    %329 = vxpose.xlu0.b32.cont [9/16] 0.0, 128
    %330 = vxpose.xlu0.b32.cont [10/16] 0.0, 128
    %331 = vxpose.xlu0.b32.cont [11/16] 0.0, 128
    %332 = vxpose.xlu0.b32.cont [12/16] 0.0, 128
    %333 = vxpose.xlu0.b32.cont [13/16] 0.0, 128
    %334 = vxpose.xlu0.b32.cont [14/16] 0.0, 128
    %335 = vxpose.xlu0.b32.cont [15/16] 0.0, 128
    %336 = vxpose.xlu0.b32.end [16/16] 0.0, 128
    %v337 = vpop.trf.xlu0
    %v338 = vpop.trf.xlu0
    %v339 = vpop.trf.xlu0
    %v340 = vpop.trf.xlu0
    %v341 = vpop.trf.xlu0
    %v342 = vpop.trf.xlu0
    %v343 = vpop.trf.xlu0
    %v344 = vpop.trf.xlu0
    %v345 = vpop.trf.xlu0
    %v346 = vpop.trf.xlu0
    %v347 = vpop.trf.xlu0
    %v348 = vpop.trf.xlu0
    %v349 = vpop.trf.xlu0
    %v350 = vpop.trf.xlu0
    %v351 = vpop.trf.xlu0
    %v352 = vpop.trf.xlu0
    %vm353 = vcmask 64512
    %v355 = vsel %vm353, %v337, 0
    %v358 = vsel %vm353, %v338, 0
    %v361 = vsel %vm353, %v339, 0
    %v364 = vsel %vm353, %v340, 0
    %v367 = vsel %vm353, %v341, 0
    %v370 = vsel %vm353, %v342, 0
    %v373 = vsel %vm353, %v343, 0
    %v376 = vsel %vm353, %v344, 0
    %v379 = vsel %vm353, %v345, 0
    %v382 = vsel %vm353, %v346, 0
    %v385 = vsel %vm353, %v347, 0
    %v388 = vsel %vm353, %v348, 0
    %v391 = vsel %vm353, %v349, 0
    %v394 = vsel %vm353, %v350, 0
    %v397 = vsel %vm353, %v351, 0
    %v400 = vsel %vm353, %v352, 0
    %402 = vmatprep.subr.mxu0 0.0
    %403 = vmatpush1.msra.mxu0 %v302
    %404 = vmatprep.subr.mxu0 0.0
    %405 = vmatpush1.msra.mxu0 0.0
    %406 = vmatprep.subr.mxu0 0.0
    %407 = vmatpush1.msra.mxu0 0.0
    %408 = vmatprep.subr.mxu0 0.0
    %409 = vmatpush1.msra.mxu0 0.0
    %410 = vmatprep.subr.mxu0 0.0
    %411 = vmatpush1.msra.mxu0 0.0
    %412 = vmatprep.subr.mxu0 0.0
    %413 = vmatpush1.msra.mxu0 0.0
    %414 = vmatprep.subr.mxu0 0.0
    %415 = vmatpush1.msra.mxu0 0.0
    %416 = vmatprep.subr.mxu0 0.0
    %417 = vmatpush1.msra.mxu0 0.0
    %418 = vmatprep.subr.mxu0 0.0
    %419 = vmatpush1.msra.mxu0 0.0
    %420 = vmatprep.subr.mxu0 0.0
    %421 = vmatpush1.msra.mxu0 0.0
    %422 = vmatprep.subr.mxu0 0.0
    %423 = vmatpush1.msra.mxu0 0.0
    %424 = vmatprep.subr.mxu0 0.0
    %425 = vmatpush1.msra.mxu0 0.0
    %426 = vmatprep.subr.mxu0 0.0
    %427 = vmatpush1.msra.mxu0 0.0
    %428 = vmatprep.subr.mxu0 0.0
    %429 = vmatpush1.msra.mxu0 0.0
    %430 = vmatprep.subr.mxu0 0.0
    %431 = vmatpush1.msra.mxu0 0.0
    %432 = vmatprep.subr.mxu0 0.0
    %433 = vmatpush1.msra.mxu0 0.0
    %434 = vmatprep.subr.mxu0 0.0
    %435 = vmatpush1.msra.mxu0 0.0
    %436 = vmatprep.subr.mxu0 0.0
    %437 = vmatpush1.msra.mxu0 0.0
    %438 = vmatprep.subr.mxu0 0.0
    %439 = vmatpush1.msra.mxu0 0.0
    %440 = vmatprep.subr.mxu0 0.0
    %441 = vmatpush1.msra.mxu0 0.0
    %442 = vmatprep.subr.mxu0 0.0
    %443 = vmatpush1.msra.mxu0 0.0
    %444 = vmatprep.subr.mxu0 0.0
    %445 = vmatpush1.msra.mxu0 0.0
    %446 = vmatprep.subr.mxu0 0.0
    %447 = vmatpush1.msra.mxu0 0.0
    %448 = vmatprep.subr.mxu0 0.0
    %449 = vmatpush1.msra.mxu0 0.0
    %450 = vmatprep.subr.mxu0 0.0
    %451 = vmatpush1.msra.mxu0 0.0
    %452 = vmatprep.subr.mxu0 0.0
    %453 = vmatpush1.msra.mxu0 0.0
    %454 = vmatprep.subr.mxu0 0.0
    %455 = vmatpush1.msra.mxu0 0.0
    %456 = vmatprep.subr.mxu0 0.0
    %457 = vmatpush1.msra.mxu0 0.0
    %458 = vmatprep.subr.mxu0 0.0
    %459 = vmatpush1.msra.mxu0 0.0
    %460 = vmatprep.subr.mxu0 0.0
    %461 = vmatpush1.msra.mxu0 0.0
    %462 = vmatprep.subr.mxu0 0.0
    %463 = vmatpush1.msra.mxu0 0.0
    %464 = vmatprep.subr.mxu0 0.0
    %465 = vmatpush1.msra.mxu0 0.0
    %466 = vmatprep.mubr.f32.mxu0 0.0
    %467 = vmatmul.mubr.f32.gmra.mrb[0].mxu0 %v355
    %v468 = vpop.f32.mrb[0].mxu0
    %v469 = vadd.f32 0.0, %v468
    %v470 = vpop.f32.mrb[0].mxu0
    %471 = vmatprep.mubr.f32.mxu0 0.0
    %472 = vmatmul.mubr.f32.gmra.mrb[0].mxu0 %v358
    %v473 = vpop.f32.mrb[0].mxu0
    %v474 = vadd.f32 0.0, %v473
    %v475 = vpop.f32.mrb[0].mxu0
    %476 = vmatprep.mubr.f32.mxu0 0.0
    %477 = vmatmul.mubr.f32.gmra.mrb[0].mxu0 %v361
    %v478 = vpop.f32.mrb[0].mxu0
    %v479 = vadd.f32 0.0, %v478
    %v480 = vpop.f32.mrb[0].mxu0
    %481 = vmatprep.mubr.f32.mxu0 0.0
    %482 = vmatmul.mubr.f32.gmra.mrb[0].mxu0 %v364
    %v483 = vpop.f32.mrb[0].mxu0
    %v484 = vadd.f32 0.0, %v483
    %v485 = vpop.f32.mrb[0].mxu0
    %486 = vmatprep.mubr.f32.mxu0 0.0
    %487 = vmatmul.mubr.f32.gmra.mrb[0].mxu0 %v367
    %v488 = vpop.f32.mrb[0].mxu0
    %v489 = vadd.f32 0.0, %v488
    %v490 = vpop.f32.mrb[0].mxu0
    %491 = vmatprep.mubr.f32.mxu0 0.0
    %492 = vmatmul.mubr.f32.gmra.mrb[0].mxu0 %v370
    %v493 = vpop.f32.mrb[0].mxu0
    %v494 = vadd.f32 0.0, %v493
    %v495 = vpop.f32.mrb[0].mxu0
    %496 = vmatprep.mubr.f32.mxu0 0.0
    %497 = vmatmul.mubr.f32.gmra.mrb[0].mxu0 %v373
    %v498 = vpop.f32.mrb[0].mxu0
    %v499 = vadd.f32 0.0, %v498
    %v500 = vpop.f32.mrb[0].mxu0
    %501 = vmatprep.mubr.f32.mxu0 0.0
    %502 = vmatmul.mubr.f32.gmra.mrb[0].mxu0 %v376
    %v503 = vpop.f32.mrb[0].mxu0
    %v504 = vadd.f32 0.0, %v503
    %v505 = vpop.f32.mrb[0].mxu0
    %506 = vmatprep.mubr.f32.mxu0 0.0
    %507 = vmatmul.mubr.f32.gmra.mrb[0].mxu0 %v379
    %v508 = vpop.f32.mrb[0].mxu0
    %v509 = vadd.f32 0.0, %v508
    %v510 = vpop.f32.mrb[0].mxu0
    %511 = vmatprep.mubr.f32.mxu0 0.0
    %512 = vmatmul.mubr.f32.gmra.mrb[0].mxu0 %v382
    %v513 = vpop.f32.mrb[0].mxu0
    %v514 = vadd.f32 0.0, %v513
    %v515 = vpop.f32.mrb[0].mxu0
    %516 = vmatprep.mubr.f32.mxu0 0.0
    %517 = vmatmul.mubr.f32.gmra.mrb[0].mxu0 %v385
    %v518 = vpop.f32.mrb[0].mxu0
    %v519 = vadd.f32 0.0, %v518
    %v520 = vpop.f32.mrb[0].mxu0
    %521 = vmatprep.mubr.f32.mxu0 0.0
    %522 = vmatmul.mubr.f32.gmra.mrb[0].mxu0 %v388
    %v523 = vpop.f32.mrb[0].mxu0
    %v524 = vadd.f32 0.0, %v523
    %v525 = vpop.f32.mrb[0].mxu0
    %526 = vmatprep.mubr.f32.mxu0 0.0
    %527 = vmatmul.mubr.f32.gmra.mrb[0].mxu0 %v391
    %v528 = vpop.f32.mrb[0].mxu0
    %v529 = vadd.f32 0.0, %v528
    %v530 = vpop.f32.mrb[0].mxu0
    %531 = vmatprep.mubr.f32.mxu0 0.0
    %532 = vmatmul.mubr.f32.gmra.mrb[0].mxu0 %v394
    %v533 = vpop.f32.mrb[0].mxu0
    %v534 = vadd.f32 0.0, %v533
    %v535 = vpop.f32.mrb[0].mxu0
    %536 = vmatprep.mubr.f32.mxu0 0.0
    %537 = vmatmul.mubr.f32.gmra.mrb[0].mxu0 %v397
    %v538 = vpop.f32.mrb[0].mxu0
    %v539 = vadd.f32 0.0, %v538
    %v540 = vpop.f32.mrb[0].mxu0
    %541 = vmatprep.mubr.f32.mxu0 0.0
    %542 = vmatmul.mubr.f32.gmra.mrb[0].mxu0 %v400
    %v543 = vpop.f32.mrb[0].mxu0
    %v544 = vadd.f32 0.0, %v543
    %v545 = vpop.f32.mrb[0].mxu0
    %546 = vdwg.mxu0
    %547 = vmax.xlane.f32.xlu0 %v469
    %v548 = vpop.xlane.xlu0 %547
    %549 = vmax.xlane.f32.xlu0 %v474
    %v550 = vpop.xlane.xlu0 %549
    %551 = vmax.xlane.f32.xlu0 %v479
    %v552 = vpop.xlane.xlu0 %551
    %553 = vmax.xlane.f32.xlu0 %v484
    %v554 = vpop.xlane.xlu0 %553
    %555 = vmax.xlane.f32.xlu0 %v489
    %v556 = vpop.xlane.xlu0 %555
    %557 = vmax.xlane.f32.xlu0 %v494
    %v558 = vpop.xlane.xlu0 %557
    %559 = vmax.xlane.f32.xlu0 %v499
    %v560 = vpop.xlane.xlu0 %559
    %561 = vmax.xlane.f32.xlu0 %v504
    %v562 = vpop.xlane.xlu0 %561
    %563 = vmax.xlane.f32.xlu0 %v509
    %v564 = vpop.xlane.xlu0 %563
    %565 = vmax.xlane.f32.xlu0 %v514
    %v566 = vpop.xlane.xlu0 %565
    %567 = vmax.xlane.f32.xlu0 %v519
    %v568 = vpop.xlane.xlu0 %567
    %569 = vmax.xlane.f32.xlu0 %v524
    %v570 = vpop.xlane.xlu0 %569
    %571 = vmax.xlane.f32.xlu0 %v529
    %v572 = vpop.xlane.xlu0 %571
    %573 = vmax.xlane.f32.xlu0 %v534
    %v574 = vpop.xlane.xlu0 %573
    %575 = vmax.xlane.f32.xlu0 %v539
    %v576 = vpop.xlane.xlu0 %575
    %577 = vmax.xlane.f32.xlu0 %v544
    %v578 = vpop.xlane.xlu0 %577
    %v579 = vsub.f32 %v469, %v548
    %v580 = vsub.f32 %v474, %v550
    %v581 = vsub.f32 %v479, %v552
    %v582 = vsub.f32 %v484, %v554
    %v583 = vsub.f32 %v489, %v556
    %v584 = vsub.f32 %v494, %v558
    %v585 = vsub.f32 %v499, %v560
    %v586 = vsub.f32 %v504, %v562
    %v587 = vsub.f32 %v509, %v564
    %v588 = vsub.f32 %v514, %v566
    %v589 = vsub.f32 %v519, %v568
    %v590 = vsub.f32 %v524, %v570
    %v591 = vsub.f32 %v529, %v572
    %v592 = vsub.f32 %v534, %v574
    %v593 = vsub.f32 %v539, %v576
    %v594 = vsub.f32 %v544, %v578
    %v595 = vmul.f32 %v579, 1.442695
    %v596 = vpow.pop %v595
    %v597 = vmul.f32 %v580, 1.442695
    %v598 = vpow.pop %v597
    %v599 = vmul.f32 %v581, 1.442695
    %v600 = vpow.pop %v599
    %v601 = vmul.f32 %v582, 1.442695
    %v602 = vpow.pop %v601
    %v603 = vmul.f32 %v583, 1.442695
    %v604 = vpow.pop %v603
    %v605 = vmul.f32 %v584, 1.442695
    %v606 = vpow.pop %v605
    %v607 = vmul.f32 %v585, 1.442695
    %v608 = vpow.pop %v607
    %v609 = vmul.f32 %v586, 1.442695
    %v610 = vpow.pop %v609
    %v611 = vmul.f32 %v587, 1.442695
    %v612 = vpow.pop %v611
    %v613 = vmul.f32 %v588, 1.442695
    %v614 = vpow.pop %v613
    %v615 = vmul.f32 %v589, 1.442695
    %v616 = vpow.pop %v615
    %v617 = vmul.f32 %v590, 1.442695
    %v618 = vpow.pop %v617
    %v619 = vmul.f32 %v591, 1.442695
    %v620 = vpow.pop %v619
    %v621 = vmul.f32 %v592, 1.442695
    %v622 = vpow.pop %v621
    %v623 = vmul.f32 %v593, 1.442695
    %v624 = vpow.pop %v623
    %v625 = vmul.f32 %v594, 1.442695
    %v626 = vpow.pop %v625
    %627 = vadd.xlane.f32.xlu0 %v596
    %v628 = vpop.xlane.xlu0 %627
    %629 = vadd.xlane.f32.xlu0 %v598
    %v630 = vpop.xlane.xlu0 %629
    %631 = vadd.xlane.f32.xlu0 %v600
    %v632 = vpop.xlane.xlu0 %631
    %633 = vadd.xlane.f32.xlu0 %v602
    %v634 = vpop.xlane.xlu0 %633
    %635 = vadd.xlane.f32.xlu0 %v604
    %v636 = vpop.xlane.xlu0 %635
    %637 = vadd.xlane.f32.xlu0 %v606
    %v638 = vpop.xlane.xlu0 %637
    %639 = vadd.xlane.f32.xlu0 %v608
    %v640 = vpop.xlane.xlu0 %639
    %641 = vadd.xlane.f32.xlu0 %v610
    %v642 = vpop.xlane.xlu0 %641
    %643 = vadd.xlane.f32.xlu0 %v612
    %v644 = vpop.xlane.xlu0 %643
    %645 = vadd.xlane.f32.xlu0 %v614
    %v646 = vpop.xlane.xlu0 %645
    %647 = vadd.xlane.f32.xlu0 %v616
    %v648 = vpop.xlane.xlu0 %647
    %649 = vadd.xlane.f32.xlu0 %v618
    %v650 = vpop.xlane.xlu0 %649
    %651 = vadd.xlane.f32.xlu0 %v620
    %v652 = vpop.xlane.xlu0 %651
    %653 = vadd.xlane.f32.xlu0 %v622
    %v654 = vpop.xlane.xlu0 %653
    %655 = vadd.xlane.f32.xlu0 %v624
    %v656 = vpop.xlane.xlu0 %655
    %657 = vadd.xlane.f32.xlu0 %v626
    %v658 = vpop.xlane.xlu0 %657
    %v659 = vrcp.pop %v628
    %v660 = vrcp.pop %v630
    %v661 = vrcp.pop %v632
    %v662 = vrcp.pop %v634
    %v663 = vrcp.pop %v636
    %v664 = vrcp.pop %v638
    %v665 = vrcp.pop %v640
    %v666 = vrcp.pop %v642
    %v667 = vrcp.pop %v644
    %v668 = vrcp.pop %v646
    %v669 = vrcp.pop %v648
    %v670 = vrcp.pop %v650
    %v671 = vrcp.pop %v652
    %v672 = vrcp.pop %v654
    %v673 = vrcp.pop %v656
    %v674 = vrcp.pop %v658
    %v675 = vmul.f32 %v596, %v659
    %v676 = vmul.f32 %v598, %v660
    %v677 = vmul.f32 %v600, %v661
    %v678 = vmul.f32 %v602, %v662
    %v679 = vmul.f32 %v604, %v663
    %v680 = vmul.f32 %v606, %v664
    %v681 = vmul.f32 %v608, %v665
    %v682 = vmul.f32 %v610, %v666
    %v683 = vmul.f32 %v612, %v667
    %v684 = vmul.f32 %v614, %v668
    %v685 = vmul.f32 %v616, %v669
    %v686 = vmul.f32 %v618, %v670
    %v687 = vmul.f32 %v620, %v671
    %v688 = vmul.f32 %v622, %v672
    %v689 = vmul.f32 %v624, %v673
    %v690 = vmul.f32 %v626, %v674
    %691 = vmatprep.subr.mxu0 0.0
    %692 = vmatpush1.xpose.msra.mxu0 %v675
    %693 = vmatprep.subr.mxu0 0.0
    %694 = vmatpush1.xpose.msra.mxu0 %v676
    %695 = vmatprep.subr.mxu0 0.0
    %696 = vmatpush1.xpose.msra.mxu0 %v677
    %697 = vmatprep.subr.mxu0 0.0
    %698 = vmatpush1.xpose.msra.mxu0 %v678
    %699 = vmatprep.subr.mxu0 0.0
    %700 = vmatpush1.xpose.msra.mxu0 %v679
    %701 = vmatprep.subr.mxu0 0.0
    %702 = vmatpush1.xpose.msra.mxu0 %v680
    %703 = vmatprep.subr.mxu0 0.0
    %704 = vmatpush1.xpose.msra.mxu0 %v681
    %705 = vmatprep.subr.mxu0 0.0
    %706 = vmatpush1.xpose.msra.mxu0 %v682
    %707 = vmatprep.subr.mxu0 0.0
    %708 = vmatpush1.xpose.msra.mxu0 %v683
    %709 = vmatprep.subr.mxu0 0.0
    %710 = vmatpush1.xpose.msra.mxu0 %v684
    %711 = vmatprep.subr.mxu0 0.0
    %712 = vmatpush1.xpose.msra.mxu0 %v685
    %713 = vmatprep.subr.mxu0 0.0
    %714 = vmatpush1.xpose.msra.mxu0 %v686
    %715 = vmatprep.subr.mxu0 0.0
    %716 = vmatpush1.xpose.msra.mxu0 %v687
    %717 = vmatprep.subr.mxu0 0.0
    %718 = vmatpush1.xpose.msra.mxu0 %v688
    %719 = vmatprep.subr.mxu0 0.0
    %720 = vmatpush1.xpose.msra.mxu0 %v689
    %721 = vmatprep.subr.mxu0 0.0
    %722 = vmatpush1.xpose.msra.mxu0 %v690
    %723 = vmatprep.subr.mxu0 0.0
    %724 = vmatpush1.xpose.msra.mxu0 0.0
    %725 = vmatprep.subr.mxu0 0.0
    %726 = vmatpush1.xpose.msra.mxu0 0.0
    %727 = vmatprep.subr.mxu0 0.0
    %728 = vmatpush1.xpose.msra.mxu0 0.0
    %729 = vmatprep.subr.mxu0 0.0
    %730 = vmatpush1.xpose.msra.mxu0 0.0
    %731 = vmatprep.subr.mxu0 0.0
    %732 = vmatpush1.xpose.msra.mxu0 0.0
    %733 = vmatprep.subr.mxu0 0.0
    %734 = vmatpush1.xpose.msra.mxu0 0.0
    %735 = vmatprep.subr.mxu0 0.0
    %736 = vmatpush1.xpose.msra.mxu0 0.0
    %737 = vmatprep.subr.mxu0 0.0
    %738 = vmatpush1.xpose.msra.mxu0 0.0
    %739 = vmatprep.subr.mxu0 0.0
    %740 = vmatpush1.xpose.msra.mxu0 0.0
    %741 = vmatprep.subr.mxu0 0.0
    %742 = vmatpush1.xpose.msra.mxu0 0.0
    %743 = vmatprep.subr.mxu0 0.0
    %744 = vmatpush1.xpose.msra.mxu0 0.0
    %745 = vmatprep.subr.mxu0 0.0
    %746 = vmatpush1.xpose.msra.mxu0 0.0
    %747 = vmatprep.subr.mxu0 0.0
    %748 = vmatpush1.xpose.msra.mxu0 0.0
    %749 = vmatprep.subr.mxu0 0.0
    %750 = vmatpush1.xpose.msra.mxu0 0.0
    %751 = vmatprep.subr.mxu0 0.0
    %752 = vmatpush1.xpose.msra.mxu0 0.0
    %753 = vmatprep.subr.mxu0 0.0
    %754 = vmatpush1.xpose.msra.mxu0 0.0
    %755 = vmatprep.mubr.f32.mxu0 0.0
    %756 = vmatmul.mubr.f32.gmra.mrb[0].mxu0 %v312
    %v757 = vpop.f32.mrb[0].mxu0
    %v758 = vadd.f32 0.0, %v757
    %v759 = vpop.f32.mrb[0].mxu0
    %760 = vdwg.mxu0
    %v761 = vmul.f32 %v297, 0.35355338
    %762 = vxpose.xlu0.b32.start [1/16] %v761, 128
    %763 = vxpose.xlu0.b32.cont [2/16] 0.0, 128
    %764 = vxpose.xlu0.b32.cont [3/16] 0.0, 128
    %765 = vxpose.xlu0.b32.cont [4/16] 0.0, 128
    %766 = vxpose.xlu0.b32.cont [5/16] 0.0, 128
    %767 = vxpose.xlu0.b32.cont [6/16] 0.0, 128
    %768 = vxpose.xlu0.b32.cont [7/16] 0.0, 128
    %769 = vxpose.xlu0.b32.cont [8/16] 0.0, 128
    %770 = vxpose.xlu0.b32.cont [9/16] 0.0, 128
    %771 = vxpose.xlu0.b32.cont [10/16] 0.0, 128
    %772 = vxpose.xlu0.b32.cont [11/16] 0.0, 128
    %773 = vxpose.xlu0.b32.cont [12/16] 0.0, 128
    %774 = vxpose.xlu0.b32.cont [13/16] 0.0, 128
    %775 = vxpose.xlu0.b32.cont [14/16] 0.0, 128
    %776 = vxpose.xlu0.b32.cont [15/16] 0.0, 128
    %777 = vxpose.xlu0.b32.end [16/16] 0.0, 128
    %v778 = vpop.trf.xlu0
    %v779 = vpop.trf.xlu0
    %v780 = vpop.trf.xlu0
    %v781 = vpop.trf.xlu0
    %v782 = vpop.trf.xlu0
    %v783 = vpop.trf.xlu0
    %v784 = vpop.trf.xlu0
    %v785 = vpop.trf.xlu0
    %v786 = vpop.trf.xlu0
    %v787 = vpop.trf.xlu0
    %v788 = vpop.trf.xlu0
    %v789 = vpop.trf.xlu0
    %v790 = vpop.trf.xlu0
    %v791 = vpop.trf.xlu0
    %v792 = vpop.trf.xlu0
    %v793 = vpop.trf.xlu0
    %v795 = vsel %vm353, %v778, 0
    %v798 = vsel %vm353, %v779, 0
    %v801 = vsel %vm353, %v780, 0
    %v804 = vsel %vm353, %v781, 0
    %v807 = vsel %vm353, %v782, 0
    %v810 = vsel %vm353, %v783, 0
    %v813 = vsel %vm353, %v784, 0
    %v816 = vsel %vm353, %v785, 0
    %v819 = vsel %vm353, %v786, 0
    %v822 = vsel %vm353, %v787, 0
    %v825 = vsel %vm353, %v788, 0
    %v828 = vsel %vm353, %v789, 0
    %v831 = vsel %vm353, %v790, 0
    %v834 = vsel %vm353, %v791, 0
    %v837 = vsel %vm353, %v792, 0
    %v840 = vsel %vm353, %v793, 0
    %842 = vmatprep.subr.mxu0 0.0
    %843 = vmatpush1.msra.mxu0 %v307
    %844 = vmatprep.subr.mxu0 0.0
    %845 = vmatpush1.msra.mxu0 0.0
    %846 = vmatprep.subr.mxu0 0.0
    %847 = vmatpush1.msra.mxu0 0.0
    %848 = vmatprep.subr.mxu0 0.0
    %849 = vmatpush1.msra.mxu0 0.0
    %850 = vmatprep.subr.mxu0 0.0
    %851 = vmatpush1.msra.mxu0 0.0
    %852 = vmatprep.subr.mxu0 0.0
    %853 = vmatpush1.msra.mxu0 0.0
    %854 = vmatprep.subr.mxu0 0.0
    %855 = vmatpush1.msra.mxu0 0.0
    %856 = vmatprep.subr.mxu0 0.0
    %857 = vmatpush1.msra.mxu0 0.0
    %858 = vmatprep.subr.mxu0 0.0
    %859 = vmatpush1.msra.mxu0 0.0
    %860 = vmatprep.subr.mxu0 0.0
    %861 = vmatpush1.msra.mxu0 0.0
    %862 = vmatprep.subr.mxu0 0.0
    %863 = vmatpush1.msra.mxu0 0.0
    %864 = vmatprep.subr.mxu0 0.0
    %865 = vmatpush1.msra.mxu0 0.0
    %866 = vmatprep.subr.mxu0 0.0
    %867 = vmatpush1.msra.mxu0 0.0
    %868 = vmatprep.subr.mxu0 0.0
    %869 = vmatpush1.msra.mxu0 0.0
    %870 = vmatprep.subr.mxu0 0.0
    %871 = vmatpush1.msra.mxu0 0.0
    %872 = vmatprep.subr.mxu0 0.0
    %873 = vmatpush1.msra.mxu0 0.0
    %874 = vmatprep.subr.mxu0 0.0
    %875 = vmatpush1.msra.mxu0 0.0
    %876 = vmatprep.subr.mxu0 0.0
    %877 = vmatpush1.msra.mxu0 0.0
    %878 = vmatprep.subr.mxu0 0.0
    %879 = vmatpush1.msra.mxu0 0.0
    %880 = vmatprep.subr.mxu0 0.0
    %881 = vmatpush1.msra.mxu0 0.0
    %882 = vmatprep.subr.mxu0 0.0
    %883 = vmatpush1.msra.mxu0 0.0
    %884 = vmatprep.subr.mxu0 0.0
    %885 = vmatpush1.msra.mxu0 0.0
    %886 = vmatprep.subr.mxu0 0.0
    %887 = vmatpush1.msra.mxu0 0.0
    %888 = vmatprep.subr.mxu0 0.0
    %889 = vmatpush1.msra.mxu0 0.0
    %890 = vmatprep.subr.mxu0 0.0
    %891 = vmatpush1.msra.mxu0 0.0
    %892 = vmatprep.subr.mxu0 0.0
    %893 = vmatpush1.msra.mxu0 0.0
    %894 = vmatprep.subr.mxu0 0.0
    %895 = vmatpush1.msra.mxu0 0.0
    %896 = vmatprep.subr.mxu0 0.0
    %897 = vmatpush1.msra.mxu0 0.0
    %898 = vmatprep.subr.mxu0 0.0
    %899 = vmatpush1.msra.mxu0 0.0
    %900 = vmatprep.subr.mxu0 0.0
    %901 = vmatpush1.msra.mxu0 0.0
    %902 = vmatprep.subr.mxu0 0.0
    %903 = vmatpush1.msra.mxu0 0.0
    %904 = vmatprep.subr.mxu0 0.0
    %905 = vmatpush1.msra.mxu0 0.0
    %906 = vmatprep.mubr.f32.mxu0 0.0
    %907 = vmatmul.mubr.f32.gmra.mrb[0].mxu0 %v795
    %v908 = vpop.f32.mrb[0].mxu0
    %v909 = vadd.f32 0.0, %v908
    %v910 = vpop.f32.mrb[0].mxu0
    %911 = vmatprep.mubr.f32.mxu0 0.0
    %912 = vmatmul.mubr.f32.gmra.mrb[0].mxu0 %v798
    %v913 = vpop.f32.mrb[0].mxu0
    %v914 = vadd.f32 0.0, %v913
    %v915 = vpop.f32.mrb[0].mxu0
    %916 = vmatprep.mubr.f32.mxu0 0.0
    %917 = vmatmul.mubr.f32.gmra.mrb[0].mxu0 %v801
    %v918 = vpop.f32.mrb[0].mxu0
    %v919 = vadd.f32 0.0, %v918
    %v920 = vpop.f32.mrb[0].mxu0
    %921 = vmatprep.mubr.f32.mxu0 0.0
    %922 = vmatmul.mubr.f32.gmra.mrb[0].mxu0 %v804
    %v923 = vpop.f32.mrb[0].mxu0
    %v924 = vadd.f32 0.0, %v923
    %v925 = vpop.f32.mrb[0].mxu0
    %926 = vmatprep.mubr.f32.mxu0 0.0
    %927 = vmatmul.mubr.f32.gmra.mrb[0].mxu0 %v807
    %v928 = vpop.f32.mrb[0].mxu0
    %v929 = vadd.f32 0.0, %v928
    %v930 = vpop.f32.mrb[0].mxu0
    %931 = vmatprep.mubr.f32.mxu0 0.0
    %932 = vmatmul.mubr.f32.gmra.mrb[0].mxu0 %v810
    %v933 = vpop.f32.mrb[0].mxu0
    %v934 = vadd.f32 0.0, %v933
    %v935 = vpop.f32.mrb[0].mxu0
    %936 = vmatprep.mubr.f32.mxu0 0.0
    %937 = vmatmul.mubr.f32.gmra.mrb[0].mxu0 %v813
    %v938 = vpop.f32.mrb[0].mxu0
    %v939 = vadd.f32 0.0, %v938
    %v940 = vpop.f32.mrb[0].mxu0
    %941 = vmatprep.mubr.f32.mxu0 0.0
    %942 = vmatmul.mubr.f32.gmra.mrb[0].mxu0 %v816
    %v943 = vpop.f32.mrb[0].mxu0
    %v944 = vadd.f32 0.0, %v943
    %v945 = vpop.f32.mrb[0].mxu0
    %946 = vmatprep.mubr.f32.mxu0 0.0
    %947 = vmatmul.mubr.f32.gmra.mrb[0].mxu0 %v819
    %v948 = vpop.f32.mrb[0].mxu0
    %v949 = vadd.f32 0.0, %v948
    %v950 = vpop.f32.mrb[0].mxu0
    %951 = vmatprep.mubr.f32.mxu0 0.0
    %952 = vmatmul.mubr.f32.gmra.mrb[0].mxu0 %v822
    %v953 = vpop.f32.mrb[0].mxu0
    %v954 = vadd.f32 0.0, %v953
    %v955 = vpop.f32.mrb[0].mxu0
    %956 = vmatprep.mubr.f32.mxu0 0.0
    %957 = vmatmul.mubr.f32.gmra.mrb[0].mxu0 %v825
    %v958 = vpop.f32.mrb[0].mxu0
    %v959 = vadd.f32 0.0, %v958
    %v960 = vpop.f32.mrb[0].mxu0
    %961 = vmatprep.mubr.f32.mxu0 0.0
    %962 = vmatmul.mubr.f32.gmra.mrb[0].mxu0 %v828
    %v963 = vpop.f32.mrb[0].mxu0
    %v964 = vadd.f32 0.0, %v963
    %v965 = vpop.f32.mrb[0].mxu0
    %966 = vmatprep.mubr.f32.mxu0 0.0
    %967 = vmatmul.mubr.f32.gmra.mrb[0].mxu0 %v831
    %v968 = vpop.f32.mrb[0].mxu0
    %v969 = vadd.f32 0.0, %v968
    %v970 = vpop.f32.mrb[0].mxu0
    %971 = vmatprep.mubr.f32.mxu0 0.0
    %972 = vmatmul.mubr.f32.gmra.mrb[0].mxu0 %v834
    %v973 = vpop.f32.mrb[0].mxu0
    %v974 = vadd.f32 0.0, %v973
    %v975 = vpop.f32.mrb[0].mxu0
    %976 = vmatprep.mubr.f32.mxu0 0.0
    %977 = vmatmul.mubr.f32.gmra.mrb[0].mxu0 %v837
    %v978 = vpop.f32.mrb[0].mxu0
    %v979 = vadd.f32 0.0, %v978
    %v980 = vpop.f32.mrb[0].mxu0
    %981 = vmatprep.mubr.f32.mxu0 0.0
    %982 = vmatmul.mubr.f32.gmra.mrb[0].mxu0 %v840
    %v983 = vpop.f32.mrb[0].mxu0
    %v984 = vadd.f32 0.0, %v983
    %v985 = vpop.f32.mrb[0].mxu0
    %986 = vdwg.mxu0
    %987 = vmax.xlane.f32.xlu0 %v909
    %v988 = vpop.xlane.xlu0 %987
    %989 = vmax.xlane.f32.xlu0 %v914
    %v990 = vpop.xlane.xlu0 %989
    %991 = vmax.xlane.f32.xlu0 %v919
    %v992 = vpop.xlane.xlu0 %991
    %993 = vmax.xlane.f32.xlu0 %v924
    %v994 = vpop.xlane.xlu0 %993
    %995 = vmax.xlane.f32.xlu0 %v929
    %v996 = vpop.xlane.xlu0 %995
    %997 = vmax.xlane.f32.xlu0 %v934
    %v998 = vpop.xlane.xlu0 %997
    %999 = vmax.xlane.f32.xlu0 %v939
    %v1000 = vpop.xlane.xlu0 %999
    %1001 = vmax.xlane.f32.xlu0 %v944
    %v1002 = vpop.xlane.xlu0 %1001
    %1003 = vmax.xlane.f32.xlu0 %v949
    %v1004 = vpop.xlane.xlu0 %1003
    %1005 = vmax.xlane.f32.xlu0 %v954
    %v1006 = vpop.xlane.xlu0 %1005
    %1007 = vmax.xlane.f32.xlu0 %v959
    %v1008 = vpop.xlane.xlu0 %1007
    %1009 = vmax.xlane.f32.xlu0 %v964
    %v1010 = vpop.xlane.xlu0 %1009
    %1011 = vmax.xlane.f32.xlu0 %v969
    %v1012 = vpop.xlane.xlu0 %1011
    %1013 = vmax.xlane.f32.xlu0 %v974
    %v1014 = vpop.xlane.xlu0 %1013
    %1015 = vmax.xlane.f32.xlu0 %v979
    %v1016 = vpop.xlane.xlu0 %1015
    %1017 = vmax.xlane.f32.xlu0 %v984
    %v1018 = vpop.xlane.xlu0 %1017
    %v1019 = vsub.f32 %v909, %v988
    %v1020 = vsub.f32 %v914, %v990
    %v1021 = vsub.f32 %v919, %v992
    %v1022 = vsub.f32 %v924, %v994
    %v1023 = vsub.f32 %v929, %v996
    %v1024 = vsub.f32 %v934, %v998
    %v1025 = vsub.f32 %v939, %v1000
    %v1026 = vsub.f32 %v944, %v1002
    %v1027 = vsub.f32 %v949, %v1004
    %v1028 = vsub.f32 %v954, %v1006
    %v1029 = vsub.f32 %v959, %v1008
    %v1030 = vsub.f32 %v964, %v1010
    %v1031 = vsub.f32 %v969, %v1012
    %v1032 = vsub.f32 %v974, %v1014
    %v1033 = vsub.f32 %v979, %v1016
    %v1034 = vsub.f32 %v984, %v1018
    %v1035 = vmul.f32 %v1019, 1.442695
    %v1036 = vpow.pop %v1035
    %v1037 = vmul.f32 %v1020, 1.442695
    %v1038 = vpow.pop %v1037
    %v1039 = vmul.f32 %v1021, 1.442695
    %v1040 = vpow.pop %v1039
    %v1041 = vmul.f32 %v1022, 1.442695
    %v1042 = vpow.pop %v1041
    %v1043 = vmul.f32 %v1023, 1.442695
    %v1044 = vpow.pop %v1043
    %v1045 = vmul.f32 %v1024, 1.442695
    %v1046 = vpow.pop %v1045
    %v1047 = vmul.f32 %v1025, 1.442695
    %v1048 = vpow.pop %v1047
    %v1049 = vmul.f32 %v1026, 1.442695
    %v1050 = vpow.pop %v1049
    %v1051 = vmul.f32 %v1027, 1.442695
    %v1052 = vpow.pop %v1051
    %v1053 = vmul.f32 %v1028, 1.442695
    %v1054 = vpow.pop %v1053
    %v1055 = vmul.f32 %v1029, 1.442695
    %v1056 = vpow.pop %v1055
    %v1057 = vmul.f32 %v1030, 1.442695
    %v1058 = vpow.pop %v1057
    %v1059 = vmul.f32 %v1031, 1.442695
    %v1060 = vpow.pop %v1059
    %v1061 = vmul.f32 %v1032, 1.442695
    %v1062 = vpow.pop %v1061
    %v1063 = vmul.f32 %v1033, 1.442695
    %v1064 = vpow.pop %v1063
    %v1065 = vmul.f32 %v1034, 1.442695
    %v1066 = vpow.pop %v1065
    %1067 = vadd.xlane.f32.xlu0 %v1036
    %v1068 = vpop.xlane.xlu0 %1067
    %1069 = vadd.xlane.f32.xlu0 %v1038
    %v1070 = vpop.xlane.xlu0 %1069
    %1071 = vadd.xlane.f32.xlu0 %v1040
    %v1072 = vpop.xlane.xlu0 %1071
    %1073 = vadd.xlane.f32.xlu0 %v1042
    %v1074 = vpop.xlane.xlu0 %1073
    %1075 = vadd.xlane.f32.xlu0 %v1044
    %v1076 = vpop.xlane.xlu0 %1075
    %1077 = vadd.xlane.f32.xlu0 %v1046
    %v1078 = vpop.xlane.xlu0 %1077
    %1079 = vadd.xlane.f32.xlu0 %v1048
    %v1080 = vpop.xlane.xlu0 %1079
    %1081 = vadd.xlane.f32.xlu0 %v1050
    %v1082 = vpop.xlane.xlu0 %1081
    %1083 = vadd.xlane.f32.xlu0 %v1052
    %v1084 = vpop.xlane.xlu0 %1083
    %1085 = vadd.xlane.f32.xlu0 %v1054
    %v1086 = vpop.xlane.xlu0 %1085
    %1087 = vadd.xlane.f32.xlu0 %v1056
    %v1088 = vpop.xlane.xlu0 %1087
    %1089 = vadd.xlane.f32.xlu0 %v1058
    %v1090 = vpop.xlane.xlu0 %1089
    %1091 = vadd.xlane.f32.xlu0 %v1060
    %v1092 = vpop.xlane.xlu0 %1091
    %1093 = vadd.xlane.f32.xlu0 %v1062
    %v1094 = vpop.xlane.xlu0 %1093
    %1095 = vadd.xlane.f32.xlu0 %v1064
    %v1096 = vpop.xlane.xlu0 %1095
    %1097 = vadd.xlane.f32.xlu0 %v1066
    %v1098 = vpop.xlane.xlu0 %1097
    %v1099 = vrcp.pop %v1068
    %v1100 = vrcp.pop %v1070
    %v1101 = vrcp.pop %v1072
    %v1102 = vrcp.pop %v1074
    %v1103 = vrcp.pop %v1076
    %v1104 = vrcp.pop %v1078
    %v1105 = vrcp.pop %v1080
    %v1106 = vrcp.pop %v1082
    %v1107 = vrcp.pop %v1084
    %v1108 = vrcp.pop %v1086
    %v1109 = vrcp.pop %v1088
    %v1110 = vrcp.pop %v1090
    %v1111 = vrcp.pop %v1092
    %v1112 = vrcp.pop %v1094
    %v1113 = vrcp.pop %v1096
    %v1114 = vrcp.pop %v1098
    %v1115 = vmul.f32 %v1036, %v1099
    %v1116 = vmul.f32 %v1038, %v1100
    %v1117 = vmul.f32 %v1040, %v1101
    %v1118 = vmul.f32 %v1042, %v1102
    %v1119 = vmul.f32 %v1044, %v1103
    %v1120 = vmul.f32 %v1046, %v1104
    %v1121 = vmul.f32 %v1048, %v1105
    %v1122 = vmul.f32 %v1050, %v1106
    %v1123 = vmul.f32 %v1052, %v1107
    %v1124 = vmul.f32 %v1054, %v1108
    %v1125 = vmul.f32 %v1056, %v1109
    %v1126 = vmul.f32 %v1058, %v1110
    %v1127 = vmul.f32 %v1060, %v1111
    %v1128 = vmul.f32 %v1062, %v1112
    %v1129 = vmul.f32 %v1064, %v1113
    %v1130 = vmul.f32 %v1066, %v1114
    %1131 = vmatprep.subr.mxu0 0.0
    %1132 = vmatpush1.xpose.msra.mxu0 %v1115
    %1133 = vmatprep.subr.mxu0 0.0
    %1134 = vmatpush1.xpose.msra.mxu0 %v1116
    %1135 = vmatprep.subr.mxu0 0.0
    %1136 = vmatpush1.xpose.msra.mxu0 %v1117
    %1137 = vmatprep.subr.mxu0 0.0
    %1138 = vmatpush1.xpose.msra.mxu0 %v1118
    %1139 = vmatprep.subr.mxu0 0.0
    %1140 = vmatpush1.xpose.msra.mxu0 %v1119
    %1141 = vmatprep.subr.mxu0 0.0
    %1142 = vmatpush1.xpose.msra.mxu0 %v1120
    %1143 = vmatprep.subr.mxu0 0.0
    %1144 = vmatpush1.xpose.msra.mxu0 %v1121
    %1145 = vmatprep.subr.mxu0 0.0
    %1146 = vmatpush1.xpose.msra.mxu0 %v1122
    %1147 = vmatprep.subr.mxu0 0.0
    %1148 = vmatpush1.xpose.msra.mxu0 %v1123
    %1149 = vmatprep.subr.mxu0 0.0
    %1150 = vmatpush1.xpose.msra.mxu0 %v1124
    %1151 = vmatprep.subr.mxu0 0.0
    %1152 = vmatpush1.xpose.msra.mxu0 %v1125
    %1153 = vmatprep.subr.mxu0 0.0
    %1154 = vmatpush1.xpose.msra.mxu0 %v1126
    %1155 = vmatprep.subr.mxu0 0.0
    %1156 = vmatpush1.xpose.msra.mxu0 %v1127
    %1157 = vmatprep.subr.mxu0 0.0
    %1158 = vmatpush1.xpose.msra.mxu0 %v1128
    %1159 = vmatprep.subr.mxu0 0.0
    %1160 = vmatpush1.xpose.msra.mxu0 %v1129
    %1161 = vmatprep.subr.mxu0 0.0
    %1162 = vmatpush1.xpose.msra.mxu0 %v1130
    %1163 = vmatprep.subr.mxu0 0.0
    %1164 = vmatpush1.xpose.msra.mxu0 0.0
    %1165 = vmatprep.subr.mxu0 0.0
    %1166 = vmatpush1.xpose.msra.mxu0 0.0
    %1167 = vmatprep.subr.mxu0 0.0
    %1168 = vmatpush1.xpose.msra.mxu0 0.0
    %1169 = vmatprep.subr.mxu0 0.0
    %1170 = vmatpush1.xpose.msra.mxu0 0.0
    %1171 = vmatprep.subr.mxu0 0.0
    %1172 = vmatpush1.xpose.msra.mxu0 0.0
    %1173 = vmatprep.subr.mxu0 0.0
    %1174 = vmatpush1.xpose.msra.mxu0 0.0
    %1175 = vmatprep.subr.mxu0 0.0
    %1176 = vmatpush1.xpose.msra.mxu0 0.0
    %1177 = vmatprep.subr.mxu0 0.0
    %1178 = vmatpush1.xpose.msra.mxu0 0.0
    %1179 = vmatprep.subr.mxu0 0.0
    %1180 = vmatpush1.xpose.msra.mxu0 0.0
    %1181 = vmatprep.subr.mxu0 0.0
    %1182 = vmatpush1.xpose.msra.mxu0 0.0
    %1183 = vmatprep.subr.mxu0 0.0
    %1184 = vmatpush1.xpose.msra.mxu0 0.0
    %1185 = vmatprep.subr.mxu0 0.0
    %1186 = vmatpush1.xpose.msra.mxu0 0.0
    %1187 = vmatprep.subr.mxu0 0.0
    %1188 = vmatpush1.xpose.msra.mxu0 0.0
    %1189 = vmatprep.subr.mxu0 0.0
    %1190 = vmatpush1.xpose.msra.mxu0 0.0
    %1191 = vmatprep.subr.mxu0 0.0
    %1192 = vmatpush1.xpose.msra.mxu0 0.0
    %1193 = vmatprep.subr.mxu0 0.0
    %1194 = vmatpush1.xpose.msra.mxu0 0.0
    %1195 = vmatprep.mubr.f32.mxu0 0.0
    %1196 = vmatmul.mubr.f32.gmra.mrb[0].mxu0 %v317
    %v1197 = vpop.f32.mrb[0].mxu0
    %v1198 = vadd.f32 0.0, %v1197
    %v1199 = vpop.f32.mrb[0].mxu0
    %1200 = vdwg.mxu0
    %1203 = vrot.lane.b32.xlu0 %v99, 120
    %v1204 = vpop.permute.xlu0 %1203
    %1205 = vrot.lane.b32.xlu0 %v100, 120
    %v1206 = vpop.permute.xlu0 %1205
    %v1207 = vsel %vm353, %v1204, 0
    %v1209 = vsel %vm353, %v1206, 0
    %1211 = vmatprep.subr.mxu0 0.0
    %1212 = vmatpush1.msra.mxu0 %v1198
    %1213 = vmatprep.subr.mxu0 0.0
    %1214 = vmatpush1.msra.mxu0 0.0
    %1215 = vmatprep.subr.mxu0 0.0
    %1216 = vmatpush1.msra.mxu0 0.0
    %1217 = vmatprep.subr.mxu0 0.0
    %1218 = vmatpush1.msra.mxu0 0.0
    %1219 = vmatprep.subr.mxu0 0.0
    %1220 = vmatpush1.msra.mxu0 0.0
    %1221 = vmatprep.subr.mxu0 0.0
    %1222 = vmatpush1.msra.mxu0 0.0
    %1223 = vmatprep.subr.mxu0 0.0
    %1224 = vmatpush1.msra.mxu0 0.0
    %1225 = vmatprep.subr.mxu0 0.0
    %1226 = vmatpush1.msra.mxu0 0.0
    %1227 = vmatprep.subr.mxu0 0.0
    %1228 = vmatpush1.msra.mxu0 0.0
    %1229 = vmatprep.subr.mxu0 0.0
    %1230 = vmatpush1.msra.mxu0 0.0
    %1231 = vmatprep.subr.mxu0 0.0
    %1232 = vmatpush1.msra.mxu0 0.0
    %1233 = vmatprep.subr.mxu0 0.0
    %1234 = vmatpush1.msra.mxu0 0.0
    %1235 = vmatprep.subr.mxu0 0.0
    %1236 = vmatpush1.msra.mxu0 0.0
    %1237 = vmatprep.subr.mxu0 0.0
    %1238 = vmatpush1.msra.mxu0 0.0
    %1239 = vmatprep.subr.mxu0 0.0
    %1240 = vmatpush1.msra.mxu0 0.0
    %1241 = vmatprep.subr.mxu0 0.0
    %1242 = vmatpush1.msra.mxu0 0.0
    %1243 = vmatprep.subr.mxu0 0.0
    %1244 = vmatpush1.msra.mxu0 0.0
    %1245 = vmatprep.subr.mxu0 0.0
    %1246 = vmatpush1.msra.mxu0 0.0
    %1247 = vmatprep.subr.mxu0 0.0
    %1248 = vmatpush1.msra.mxu0 0.0
    %1249 = vmatprep.subr.mxu0 0.0
    %1250 = vmatpush1.msra.mxu0 0.0
    %1251 = vmatprep.subr.mxu0 0.0
    %1252 = vmatpush1.msra.mxu0 0.0
    %1253 = vmatprep.subr.mxu0 0.0
    %1254 = vmatpush1.msra.mxu0 0.0
    %1255 = vmatprep.subr.mxu0 0.0
    %1256 = vmatpush1.msra.mxu0 0.0
    %1257 = vmatprep.subr.mxu0 0.0
    %1258 = vmatpush1.msra.mxu0 0.0
    %1259 = vmatprep.subr.mxu0 0.0
    %1260 = vmatpush1.msra.mxu0 0.0
    %1261 = vmatprep.subr.mxu0 0.0
    %1262 = vmatpush1.msra.mxu0 0.0
    %1263 = vmatprep.subr.mxu0 0.0
    %1264 = vmatpush1.msra.mxu0 0.0
    %1265 = vmatprep.subr.mxu0 0.0
    %1266 = vmatpush1.msra.mxu0 0.0
    %1267 = vmatprep.subr.mxu0 0.0
    %1268 = vmatpush1.msra.mxu0 0.0
    %1269 = vmatprep.subr.mxu0 0.0
    %1270 = vmatpush1.msra.mxu0 0.0
    %1271 = vmatprep.subr.mxu0 0.0
    %1272 = vmatpush1.msra.mxu0 0.0
    %1273 = vmatprep.subr.mxu0 0.0
    %1274 = vmatpush1.msra.mxu0 0.0
    %1275 = vmatprep.mubr.f32.mxu0 0.0
    %1276 = vmatmul.mubr.f32.gmra.mrb[0].mxu0 %v1207
    %v1277 = vpop.f32.mrb[0].mxu0
    %v1278 = vadd.f32 0.0, %v1277
    %v1279 = vpop.f32.mrb[0].mxu0
    %1280 = vmatprep.mubr.f32.mxu0 0.0
    %1281 = vmatmul.mubr.f32.gmra.mrb[0].mxu0 %v1209
    %v1282 = vpop.f32.mrb[0].mxu0
    %v1283 = vadd.f32 0.0, %v1282
    %v1284 = vpop.f32.mrb[0].mxu0
    %1285 = vdwg.mxu0
    %v1286 = vsel %vm353, %v99, 0
    %v1288 = vsel %vm353, %v100, 0
    %1290 = vmatprep.subr.mxu0 0.0
    %1291 = vmatpush1.msra.mxu0 %v758
    %1292 = vmatprep.subr.mxu0 0.0
    %1293 = vmatpush1.msra.mxu0 0.0
    %1294 = vmatprep.subr.mxu0 0.0
    %1295 = vmatpush1.msra.mxu0 0.0
    %1296 = vmatprep.subr.mxu0 0.0
    %1297 = vmatpush1.msra.mxu0 0.0
    %1298 = vmatprep.subr.mxu0 0.0
    %1299 = vmatpush1.msra.mxu0 0.0
    %1300 = vmatprep.subr.mxu0 0.0
    %1301 = vmatpush1.msra.mxu0 0.0
    %1302 = vmatprep.subr.mxu0 0.0
    %1303 = vmatpush1.msra.mxu0 0.0
    %1304 = vmatprep.subr.mxu0 0.0
    %1305 = vmatpush1.msra.mxu0 0.0
    %1306 = vmatprep.subr.mxu0 0.0
    %1307 = vmatpush1.msra.mxu0 0.0
    %1308 = vmatprep.subr.mxu0 0.0
    %1309 = vmatpush1.msra.mxu0 0.0
    %1310 = vmatprep.subr.mxu0 0.0
    %1311 = vmatpush1.msra.mxu0 0.0
    %1312 = vmatprep.subr.mxu0 0.0
    %1313 = vmatpush1.msra.mxu0 0.0
    %1314 = vmatprep.subr.mxu0 0.0
    %1315 = vmatpush1.msra.mxu0 0.0
    %1316 = vmatprep.subr.mxu0 0.0
    %1317 = vmatpush1.msra.mxu0 0.0
    %1318 = vmatprep.subr.mxu0 0.0
    %1319 = vmatpush1.msra.mxu0 0.0
    %1320 = vmatprep.subr.mxu0 0.0
    %1321 = vmatpush1.msra.mxu0 0.0
    %1322 = vmatprep.subr.mxu0 0.0
    %1323 = vmatpush1.msra.mxu0 0.0
    %1324 = vmatprep.subr.mxu0 0.0
    %1325 = vmatpush1.msra.mxu0 0.0
    %1326 = vmatprep.subr.mxu0 0.0
    %1327 = vmatpush1.msra.mxu0 0.0
    %1328 = vmatprep.subr.mxu0 0.0
    %1329 = vmatpush1.msra.mxu0 0.0
    %1330 = vmatprep.subr.mxu0 0.0
    %1331 = vmatpush1.msra.mxu0 0.0
    %1332 = vmatprep.subr.mxu0 0.0
    %1333 = vmatpush1.msra.mxu0 0.0
    %1334 = vmatprep.subr.mxu0 0.0
    %1335 = vmatpush1.msra.mxu0 0.0
    %1336 = vmatprep.subr.mxu0 0.0
    %1337 = vmatpush1.msra.mxu0 0.0
    %1338 = vmatprep.subr.mxu0 0.0
    %1339 = vmatpush1.msra.mxu0 0.0
    %1340 = vmatprep.subr.mxu0 0.0
    %1341 = vmatpush1.msra.mxu0 0.0
    %1342 = vmatprep.subr.mxu0 0.0
    %1343 = vmatpush1.msra.mxu0 0.0
    %1344 = vmatprep.subr.mxu0 0.0
    %1345 = vmatpush1.msra.mxu0 0.0
    %1346 = vmatprep.subr.mxu0 0.0
    %1347 = vmatpush1.msra.mxu0 0.0
    %1348 = vmatprep.subr.mxu0 0.0
    %1349 = vmatpush1.msra.mxu0 0.0
    %1350 = vmatprep.subr.mxu0 0.0
    %1351 = vmatpush1.msra.mxu0 0.0
    %1352 = vmatprep.subr.mxu0 0.0
    %1353 = vmatpush1.msra.mxu0 0.0
    %1354 = vmatprep.mubr.f32.mxu0 0.0
    %1355 = vmatmul.mubr.f32.gmra.mrb[0].mxu0 %v1286
    %v1356 = vpop.f32.mrb[0].mxu0
    %v1357 = vadd.f32 %v1278, %v1356
    %v1358 = vpop.f32.mrb[0].mxu0
    %1359 = vmatprep.mubr.f32.mxu0 0.0
    %1360 = vmatmul.mubr.f32.gmra.mrb[0].mxu0 %v1288
    %v1361 = vpop.f32.mrb[0].mxu0
    %v1362 = vadd.f32 %v1283, %v1361
    %v1363 = vpop.f32.mrb[0].mxu0
    %1364 = vdwg.mxu0
    %v1365 = vadd.f32 %v81, %v1357
    %v1366 = vadd.f32 %v82, %v1362
    %1368 = vset.pattern.permute.xlu0 0
    %1369 = vperm.xlu0 %1368, %v101
    %v1370 = vpop.permute.xlu0 %1369
    %1373 = vset.pattern.permute.xlu0 0
    %1374 = vperm.xlu0 %1373, %v102
    %v1375 = vpop.permute.xlu0 %1374
    %v1377 = vadd.f32 %v1365, %v1370
    %v1378 = vadd.f32 %v1366, %v1375
    %v1379 = vadd.f32 %v1377, %v1378
    %v1380 = vrot.slane %v1379, 4
    %v1381 = vadd.f32 %v1379, %v1380
    %v1382 = vrot.slane %v1381, 2
    %v1383 = vadd.f32 %v1381, %v1382
    %v1384 = vrot.slane %v1383, 1
    %v1385 = vadd.f32 %v1383, %v1384
    %v1386 = vmul.f32 %v1385, %v134
    %v1387 = vsub.f32 %v1377, %v1386
    %v1388 = vsub.f32 %v1378, %v1386
    %v1389 = vmul.f32 %v1387, %v1387
    %v1390 = vmul.f32 %v1388, %v1388
    %v1391 = vadd.f32 %v1389, %v1390
    %v1392 = vrot.slane %v1391, 4
    %v1393 = vadd.f32 %v1391, %v1392
    %v1394 = vrot.slane %v1393, 2
    %v1395 = vadd.f32 %v1393, %v1394
    %v1396 = vrot.slane %v1395, 1
    %v1397 = vadd.f32 %v1395, %v1396
    %v1398 = vmul.f32 %v1397, %v134
    %v1399 = vadd.f32 %v1398, 1e-06
    %v1400 = vrsqrt.pop %v1399
    %v1401 = vmul.f32 %v1387, %v1400
    %v1402 = vmul.f32 %v1388, %v1400
    %1404 = vset.pattern.permute.xlu0 0
    %1405 = vperm.xlu0 %1404, %v103
    %v1406 = vpop.permute.xlu0 %1405
    %1409 = vset.pattern.permute.xlu0 0
    %1410 = vperm.xlu0 %1409, %v104
    %v1411 = vpop.permute.xlu0 %1410
    %v1413 = vmul.f32 %v1401, %v1406
    %v1414 = vmul.f32 %v1402, %v1411
    %1416 = vset.pattern.permute.xlu0 0
    %1417 = vperm.xlu0 %1416, %v105
    %v1418 = vpop.permute.xlu0 %1417
    %1421 = vset.pattern.permute.xlu0 0
    %1422 = vperm.xlu0 %1421, %v106
    %v1423 = vpop.permute.xlu0 %1422
    %v1425 = vadd.f32 %v1413, %v1418
    %v1426 = vadd.f32 %v1414, %v1423
    %1428 = vset.pattern.permute.xlu0 0
    %1429 = vperm.xlu0 %1428, %v115
    %v1430 = vpop.permute.xlu0 %1429
    %1433 = vset.pattern.permute.xlu0 0
    %1434 = vperm.xlu0 %1433, %v116
    %v1435 = vpop.permute.xlu0 %1434
    %1438 = vset.pattern.permute.xlu0 0
    %1439 = vperm.xlu0 %1438, %v117
    %v1440 = vpop.permute.xlu0 %1439
    %1443 = vset.pattern.permute.xlu0 0
    %1444 = vperm.xlu0 %1443, %v118
    %v1445 = vpop.permute.xlu0 %1444
    %1448 = vset.pattern.permute.xlu0 0
    %1449 = vperm.xlu0 %1448, %v119
    %v1450 = vpop.permute.xlu0 %1449
    %1453 = vset.pattern.permute.xlu0 0
    %1454 = vperm.xlu0 %1453, %v120
    %v1455 = vpop.permute.xlu0 %1454
    %1458 = vset.pattern.permute.xlu0 0
    %1459 = vperm.xlu0 %1458, %v121
    %v1460 = vpop.permute.xlu0 %1459
    %1463 = vset.pattern.permute.xlu0 0
    %1464 = vperm.xlu0 %1463, %v122
    %v1465 = vpop.permute.xlu0 %1464
    %v1468 = vsel %vm206, %v107, 0
    %v1471 = vsel %vm206, %v108, 0
    %v1474 = vsel %vm206, %v109, 0
    %v1477 = vsel %vm206, %v110, 0
    %v1480 = vsel %vm206, %v111, 0
    %v1483 = vsel %vm206, %v112, 0
    %v1486 = vsel %vm206, %v113, 0
    %v1489 = vsel %vm206, %v114, 0
    %1491 = vmatprep.subr.mxu0 0.0
    %1492 = vmatpush1.msra.mxu0 %v1425
    %1493 = vmatprep.subr.mxu0 0.0
    %1494 = vmatpush1.msra.mxu0 %v1426
    %1495 = vmatprep.subr.mxu0 0.0
    %1496 = vmatpush1.msra.mxu0 0.0
    %1497 = vmatprep.subr.mxu0 0.0
    %1498 = vmatpush1.msra.mxu0 0.0
    %1499 = vmatprep.subr.mxu0 0.0
    %1500 = vmatpush1.msra.mxu0 0.0
    %1501 = vmatprep.subr.mxu0 0.0
    %1502 = vmatpush1.msra.mxu0 0.0
    %1503 = vmatprep.subr.mxu0 0.0
    %1504 = vmatpush1.msra.mxu0 0.0
    %1505 = vmatprep.subr.mxu0 0.0
    %1506 = vmatpush1.msra.mxu0 0.0
    %1507 = vmatprep.subr.mxu0 0.0
    %1508 = vmatpush1.msra.mxu0 0.0
    %1509 = vmatprep.subr.mxu0 0.0
    %1510 = vmatpush1.msra.mxu0 0.0
    %1511 = vmatprep.subr.mxu0 0.0
    %1512 = vmatpush1.msra.mxu0 0.0
    %1513 = vmatprep.subr.mxu0 0.0
    %1514 = vmatpush1.msra.mxu0 0.0
    %1515 = vmatprep.subr.mxu0 0.0
    %1516 = vmatpush1.msra.mxu0 0.0
    %1517 = vmatprep.subr.mxu0 0.0
    %1518 = vmatpush1.msra.mxu0 0.0
    %1519 = vmatprep.subr.mxu0 0.0
    %1520 = vmatpush1.msra.mxu0 0.0
    %1521 = vmatprep.subr.mxu0 0.0
    %1522 = vmatpush1.msra.mxu0 0.0
    %1523 = vmatprep.subr.mxu0 0.0
    %1524 = vmatpush1.msra.mxu0 0.0
    %1525 = vmatprep.subr.mxu0 0.0
    %1526 = vmatpush1.msra.mxu0 0.0
    %1527 = vmatprep.subr.mxu0 0.0
    %1528 = vmatpush1.msra.mxu0 0.0
    %1529 = vmatprep.subr.mxu0 0.0
    %1530 = vmatpush1.msra.mxu0 0.0
    %1531 = vmatprep.subr.mxu0 0.0
    %1532 = vmatpush1.msra.mxu0 0.0
    %1533 = vmatprep.subr.mxu0 0.0
    %1534 = vmatpush1.msra.mxu0 0.0
    %1535 = vmatprep.subr.mxu0 0.0
    %1536 = vmatpush1.msra.mxu0 0.0
    %1537 = vmatprep.subr.mxu0 0.0
    %1538 = vmatpush1.msra.mxu0 0.0
    %1539 = vmatprep.subr.mxu0 0.0
    %1540 = vmatpush1.msra.mxu0 0.0
    %1541 = vmatprep.subr.mxu0 0.0
    %1542 = vmatpush1.msra.mxu0 0.0
    %1543 = vmatprep.subr.mxu0 0.0
    %1544 = vmatpush1.msra.mxu0 0.0
    %1545 = vmatprep.subr.mxu0 0.0
    %1546 = vmatpush1.msra.mxu0 0.0
    %1547 = vmatprep.subr.mxu0 0.0
    %1548 = vmatpush1.msra.mxu0 0.0
    %1549 = vmatprep.subr.mxu0 0.0
    %1550 = vmatpush1.msra.mxu0 0.0
    %1551 = vmatprep.subr.mxu0 0.0
    %1552 = vmatpush1.msra.mxu0 0.0
    %1553 = vmatprep.subr.mxu0 0.0
    %1554 = vmatpush1.msra.mxu0 0.0
    %1555 = vmatprep.mubr.f32.mxu0 0.0
    %1556 = vmatmul.mubr.f32.gmra.mrb[0].mxu0 %v1468
    %v1557 = vpop.f32.mrb[0].mxu0
    %v1558 = vadd.f32 %v1430, %v1557
    %v1559 = vpop.f32.mrb[0].mxu0
    %1560 = vmatprep.mubr.f32.mxu0 0.0
    %1561 = vmatmul.mubr.f32.gmra.mrb[0].mxu0 %v1471
    %v1562 = vpop.f32.mrb[0].mxu0
    %v1563 = vadd.f32 %v1435, %v1562
    %v1564 = vpop.f32.mrb[0].mxu0
    %1565 = vmatprep.mubr.f32.mxu0 0.0
    %1566 = vmatmul.mubr.f32.gmra.mrb[0].mxu0 %v1474
    %v1567 = vpop.f32.mrb[0].mxu0
    %v1568 = vadd.f32 %v1440, %v1567
    %v1569 = vpop.f32.mrb[0].mxu0
    %1570 = vmatprep.mubr.f32.mxu0 0.0
    %1571 = vmatmul.mubr.f32.gmra.mrb[0].mxu0 %v1477
    %v1572 = vpop.f32.mrb[0].mxu0
    %v1573 = vadd.f32 %v1445, %v1572
    %v1574 = vpop.f32.mrb[0].mxu0
    %1575 = vmatprep.mubr.f32.mxu0 0.0
    %1576 = vmatmul.mubr.f32.gmra.mrb[0].mxu0 %v1480
    %v1577 = vpop.f32.mrb[0].mxu0
    %v1578 = vadd.f32 %v1450, %v1577
    %v1579 = vpop.f32.mrb[0].mxu0
    %1580 = vmatprep.mubr.f32.mxu0 0.0
    %1581 = vmatmul.mubr.f32.gmra.mrb[0].mxu0 %v1483
    %v1582 = vpop.f32.mrb[0].mxu0
    %v1583 = vadd.f32 %v1455, %v1582
    %v1584 = vpop.f32.mrb[0].mxu0
    %1585 = vmatprep.mubr.f32.mxu0 0.0
    %1586 = vmatmul.mubr.f32.gmra.mrb[0].mxu0 %v1486
    %v1587 = vpop.f32.mrb[0].mxu0
    %v1588 = vadd.f32 %v1460, %v1587
    %v1589 = vpop.f32.mrb[0].mxu0
    %1590 = vmatprep.mubr.f32.mxu0 0.0
    %1591 = vmatmul.mubr.f32.gmra.mrb[0].mxu0 %v1489
    %v1592 = vpop.f32.mrb[0].mxu0
    %v1593 = vadd.f32 %v1465, %v1592
    %v1594 = vpop.f32.mrb[0].mxu0
    %1595 = vdwg.mxu0
    %v1596 = vmul.f32 %v1558, %v1558
    %v1597 = vmul.f32 %v1563, %v1563
    %v1598 = vmul.f32 %v1568, %v1568
    %v1599 = vmul.f32 %v1573, %v1573
    %v1600 = vmul.f32 %v1578, %v1578
    %v1601 = vmul.f32 %v1583, %v1583
    %v1602 = vmul.f32 %v1588, %v1588
    %v1603 = vmul.f32 %v1593, %v1593
    %v1604 = vmul.f32 %v1558, %v1596
    %v1605 = vmul.f32 %v1563, %v1597
    %v1606 = vmul.f32 %v1568, %v1598
    %v1607 = vmul.f32 %v1573, %v1599
    %v1608 = vmul.f32 %v1578, %v1600
    %v1609 = vmul.f32 %v1583, %v1601
    %v1610 = vmul.f32 %v1588, %v1602
    %v1611 = vmul.f32 %v1593, %v1603
    %v1612 = vmul.f32 %v1604, 0.044715
    %v1613 = vmul.f32 %v1605, 0.044715
    %v1614 = vmul.f32 %v1606, 0.044715
    %v1615 = vmul.f32 %v1607, 0.044715
    %v1616 = vmul.f32 %v1608, 0.044715
    %v1617 = vmul.f32 %v1609, 0.044715
    %v1618 = vmul.f32 %v1610, 0.044715
    %v1619 = vmul.f32 %v1611, 0.044715
    %v1620 = vadd.f32 %v1558, %v1612
    %v1621 = vadd.f32 %v1563, %v1613
    %v1622 = vadd.f32 %v1568, %v1614
    %v1623 = vadd.f32 %v1573, %v1615
    %v1624 = vadd.f32 %v1578, %v1616
    %v1625 = vadd.f32 %v1583, %v1617
    %v1626 = vadd.f32 %v1588, %v1618
    %v1627 = vadd.f32 %v1593, %v1619
    %v1628 = vmul.f32 %v1620, 0.7978846
    %v1629 = vmul.f32 %v1621, 0.7978846
    %v1630 = vmul.f32 %v1622, 0.7978846
    %v1631 = vmul.f32 %v1623, 0.7978846
    %v1632 = vmul.f32 %v1624, 0.7978846
    %v1633 = vmul.f32 %v1625, 0.7978846
    %v1634 = vmul.f32 %v1626, 0.7978846
    %v1635 = vmul.f32 %v1627, 0.7978846
    %v1636 = vtanh.pop %v1628
    %v1637 = vtanh.pop %v1629
    %v1638 = vtanh.pop %v1630
    %v1639 = vtanh.pop %v1631
    %v1640 = vtanh.pop %v1632
    %v1641 = vtanh.pop %v1633
    %v1642 = vtanh.pop %v1634
    %v1643 = vtanh.pop %v1635
    %v1644 = vadd.f32 %v1636, 1.0
    %v1645 = vadd.f32 %v1637, 1.0
    %v1646 = vadd.f32 %v1638, 1.0
    %v1647 = vadd.f32 %v1639, 1.0
    %v1648 = vadd.f32 %v1640, 1.0
    %v1649 = vadd.f32 %v1641, 1.0
    %v1650 = vadd.f32 %v1642, 1.0
    %v1651 = vadd.f32 %v1643, 1.0
    %v1652 = vmul.f32 %v1644, 0.5
    %v1653 = vmul.f32 %v1645, 0.5
    %v1654 = vmul.f32 %v1646, 0.5
    %v1655 = vmul.f32 %v1647, 0.5
    %v1656 = vmul.f32 %v1648, 0.5
    %v1657 = vmul.f32 %v1649, 0.5
    %v1658 = vmul.f32 %v1650, 0.5
    %v1659 = vmul.f32 %v1651, 0.5
    %v1660 = vmul.f32 %v1558, %v1652
    %v1661 = vmul.f32 %v1563, %v1653
    %v1662 = vmul.f32 %v1568, %v1654
    %v1663 = vmul.f32 %v1573, %v1655
    %v1664 = vmul.f32 %v1578, %v1656
    %v1665 = vmul.f32 %v1583, %v1657
    %v1666 = vmul.f32 %v1588, %v1658
    %v1667 = vmul.f32 %v1593, %v1659
    %1669 = vset.pattern.permute.xlu0 0
    %1670 = vperm.xlu0 %1669, %v125
    %v1671 = vpop.permute.xlu0 %1670
    %1674 = vset.pattern.permute.xlu0 0
    %1675 = vperm.xlu0 %1674, %v126
    %v1676 = vpop.permute.xlu0 %1675
    %vm1678 = vcmask 523264
    %v1680 = vsel %vm1678, %v123, 0
    %v1683 = vsel %vm1678, %v124, 0
    %1685 = vmatprep.subr.mxu0 0.0
    %1686 = vmatpush1.msra.mxu0 %v1660
    %1687 = vmatprep.subr.mxu0 0.0
    %1688 = vmatpush1.msra.mxu0 %v1661
    %1689 = vmatprep.subr.mxu0 0.0
    %1690 = vmatpush1.msra.mxu0 %v1662
    %1691 = vmatprep.subr.mxu0 0.0
    %1692 = vmatpush1.msra.mxu0 %v1663
    %1693 = vmatprep.subr.mxu0 0.0
    %1694 = vmatpush1.msra.mxu0 %v1664
    %1695 = vmatprep.subr.mxu0 0.0
    %1696 = vmatpush1.msra.mxu0 %v1665
    %1697 = vmatprep.subr.mxu0 0.0
    %1698 = vmatpush1.msra.mxu0 %v1666
    %1699 = vmatprep.subr.mxu0 0.0
    %1700 = vmatpush1.msra.mxu0 %v1667
    %1701 = vmatprep.subr.mxu0 0.0
    %1702 = vmatpush1.msra.mxu0 0.0
    %1703 = vmatprep.subr.mxu0 0.0
    %1704 = vmatpush1.msra.mxu0 0.0
    %1705 = vmatprep.subr.mxu0 0.0
    %1706 = vmatpush1.msra.mxu0 0.0
    %1707 = vmatprep.subr.mxu0 0.0
    %1708 = vmatpush1.msra.mxu0 0.0
    %1709 = vmatprep.subr.mxu0 0.0
    %1710 = vmatpush1.msra.mxu0 0.0
    %1711 = vmatprep.subr.mxu0 0.0
    %1712 = vmatpush1.msra.mxu0 0.0
    %1713 = vmatprep.subr.mxu0 0.0
    %1714 = vmatpush1.msra.mxu0 0.0
    %1715 = vmatprep.subr.mxu0 0.0
    %1716 = vmatpush1.msra.mxu0 0.0
    %1717 = vmatprep.subr.mxu0 0.0
    %1718 = vmatpush1.msra.mxu0 0.0
    %1719 = vmatprep.subr.mxu0 0.0
    %1720 = vmatpush1.msra.mxu0 0.0
    %1721 = vmatprep.subr.mxu0 0.0
    %1722 = vmatpush1.msra.mxu0 0.0
    %1723 = vmatprep.subr.mxu0 0.0
    %1724 = vmatpush1.msra.mxu0 0.0
    %1725 = vmatprep.subr.mxu0 0.0
    %1726 = vmatpush1.msra.mxu0 0.0
    %1727 = vmatprep.subr.mxu0 0.0
    %1728 = vmatpush1.msra.mxu0 0.0
    %1729 = vmatprep.subr.mxu0 0.0
    %1730 = vmatpush1.msra.mxu0 0.0
    %1731 = vmatprep.subr.mxu0 0.0
    %1732 = vmatpush1.msra.mxu0 0.0
    %1733 = vmatprep.subr.mxu0 0.0
    %1734 = vmatpush1.msra.mxu0 0.0
    %1735 = vmatprep.subr.mxu0 0.0
    %1736 = vmatpush1.msra.mxu0 0.0
    %1737 = vmatprep.subr.mxu0 0.0
    %1738 = vmatpush1.msra.mxu0 0.0
    %1739 = vmatprep.subr.mxu0 0.0
    %1740 = vmatpush1.msra.mxu0 0.0
    %1741 = vmatprep.subr.mxu0 0.0
    %1742 = vmatpush1.msra.mxu0 0.0
    %1743 = vmatprep.subr.mxu0 0.0
    %1744 = vmatpush1.msra.mxu0 0.0
    %1745 = vmatprep.subr.mxu0 0.0
    %1746 = vmatpush1.msra.mxu0 0.0
    %1747 = vmatprep.subr.mxu0 0.0
    %1748 = vmatpush1.msra.mxu0 0.0
    %1749 = vmatprep.mubr.f32.mxu0 0.0
    %1750 = vmatmul.mubr.f32.gmra.mrb[0].mxu0 %v1680
    %v1751 = vpop.f32.mrb[0].mxu0
    %v1752 = vadd.f32 %v1671, %v1751
    %v1753 = vpop.f32.mrb[0].mxu0
    %1754 = vmatprep.mubr.f32.mxu0 0.0
    %1755 = vmatmul.mubr.f32.gmra.mrb[0].mxu0 %v1683
    %v1756 = vpop.f32.mrb[0].mxu0
    %v1757 = vadd.f32 %v1676, %v1756
    %v1758 = vpop.f32.mrb[0].mxu0
    %1759 = vdwg.mxu0
    %v1760 = vadd.f32 %v1377, %v1752
    %v1761 = vadd.f32 %v1378, %v1757
    %v1762 = vld [vmem:[%s13] sm:$0xff]
    %v1763 = vld [vmem:[%s13 + $0x8] sm:$0xff]
    %v1764 = vld [vmem:[%s14] sm:$0xff]
    %v1765 = vld [vmem:[%s14 + $0x8] sm:$0xff]
    %v1766 = vld [vmem:[%s15] sm:$0xff]
    %v1767 = vld [vmem:[%s15 + $0x8] sm:$0xff]
    %v1768 = vld [vmem:[%s15 + $0x10] sm:$0xff]
    %v1769 = vld [vmem:[%s15 + $0x18] sm:$0xff]
    %v1770 = vld [vmem:[%s15 + $0x20] sm:$0xff]
    %v1771 = vld [vmem:[%s15 + $0x28] sm:$0xff]
    %v1772 = vld [vmem:[%s16] sm:$0xff]
    %v1773 = vld [vmem:[%s16 + $0x8] sm:$0xff]
    %v1774 = vld [vmem:[%s16 + $0x10] sm:$0xff]
    %v1775 = vld [vmem:[%s16 + $0x18] sm:$0xff]
    %v1776 = vld [vmem:[%s16 + $0x20] sm:$0xff]
    %v1777 = vld [vmem:[%s16 + $0x28] sm:$0xff]
    %v1778 = vld [vmem:[%s17] sm:$0xff]
    %v1779 = vld [vmem:[%s17 + $0x8] sm:$0xff]
    %v1780 = vld [vmem:[%s18] sm:$0xff]
    %v1781 = vld [vmem:[%s18 + $0x8] sm:$0xff]
    %v1782 = vld [vmem:[%s19] sm:$0xff]
    %v1783 = vld [vmem:[%s19 + $0x8] sm:$0xff]
    %v1784 = vld [vmem:[%s20] sm:$0xff]
    %v1785 = vld [vmem:[%s20 + $0x8] sm:$0xff]
    %v1786 = vld [vmem:[%s21] sm:$0xff]
    %v1787 = vld [vmem:[%s21 + $0x8] sm:$0xff]
    %v1788 = vld [vmem:[%s21 + $0x10] sm:$0xff]
    %v1789 = vld [vmem:[%s21 + $0x18] sm:$0xff]
    %v1790 = vld [vmem:[%s21 + $0x20] sm:$0xff]
    %v1791 = vld [vmem:[%s21 + $0x28] sm:$0xff]
    %v1792 = vld [vmem:[%s21 + $0x30] sm:$0xff]
    %v1793 = vld [vmem:[%s21 + $0x38] sm:$0xff]
    %v1794 = vld [vmem:[%s22] sm:$0xff]
    %v1795 = vld [vmem:[%s22 + $0x8] sm:$0xff]
    %v1796 = vld [vmem:[%s22 + $0x10] sm:$0xff]
    %v1797 = vld [vmem:[%s22 + $0x18] sm:$0xff]
    %v1798 = vld [vmem:[%s22 + $0x20] sm:$0xff]
    %v1799 = vld [vmem:[%s22 + $0x28] sm:$0xff]
    %v1800 = vld [vmem:[%s22 + $0x30] sm:$0xff]
    %v1801 = vld [vmem:[%s22 + $0x38] sm:$0xff]
    %v1802 = vld [vmem:[%s23] sm:$0xff]
    %v1803 = vld [vmem:[%s23 + $0x8] sm:$0xff]
    %v1804 = vld [vmem:[%s24] sm:$0xff]
    %v1805 = vld [vmem:[%s24 + $0x8] sm:$0xff]
    %v1806 = vadd.f32 %v1760, %v1761
    %v1807 = vrot.slane %v1806, 4
    %v1808 = vadd.f32 %v1806, %v1807
    %v1809 = vrot.slane %v1808, 2
    %v1810 = vadd.f32 %v1808, %v1809
    %v1811 = vrot.slane %v1810, 1
    %v1812 = vadd.f32 %v1810, %v1811
    %v1813 = vmul.f32 %v1812, %v134
    %v1814 = vsub.f32 %v1760, %v1813
    %v1815 = vsub.f32 %v1761, %v1813
    %v1816 = vmul.f32 %v1814, %v1814
    %v1817 = vmul.f32 %v1815, %v1815
    %v1818 = vadd.f32 %v1816, %v1817
    %v1819 = vrot.slane %v1818, 4
    %v1820 = vadd.f32 %v1818, %v1819
    %v1821 = vrot.slane %v1820, 2
    %v1822 = vadd.f32 %v1820, %v1821
    %v1823 = vrot.slane %v1822, 1
    %v1824 = vadd.f32 %v1822, %v1823
    %v1825 = vmul.f32 %v1824, %v134
    %v1826 = vadd.f32 %v1825, 1e-06
    %v1827 = vrsqrt.pop %v1826
    %v1828 = vmul.f32 %v1814, %v1827
    %v1829 = vmul.f32 %v1815, %v1827
    %1831 = vset.pattern.permute.xlu0 0
    %1832 = vperm.xlu0 %1831, %v1762
    %v1833 = vpop.permute.xlu0 %1832
    %1836 = vset.pattern.permute.xlu0 0
    %1837 = vperm.xlu0 %1836, %v1763
    %v1838 = vpop.permute.xlu0 %1837
    %v1840 = vmul.f32 %v1828, %v1833
    %v1841 = vmul.f32 %v1829, %v1838
    %1843 = vset.pattern.permute.xlu0 0
    %1844 = vperm.xlu0 %1843, %v1764
    %v1845 = vpop.permute.xlu0 %1844
    %1848 = vset.pattern.permute.xlu0 0
    %1849 = vperm.xlu0 %1848, %v1765
    %v1850 = vpop.permute.xlu0 %1849
    %v1852 = vadd.f32 %v1840, %v1845
    %v1853 = vadd.f32 %v1841, %v1850
    %1855 = vset.pattern.permute.xlu0 0
    %1856 = vperm.xlu0 %1855, %v1772
    %v1857 = vpop.permute.xlu0 %1856
    %1860 = vset.pattern.permute.xlu0 0
    %1861 = vperm.xlu0 %1860, %v1773
    %v1862 = vpop.permute.xlu0 %1861
    %1865 = vset.pattern.permute.xlu0 0
    %1866 = vperm.xlu0 %1865, %v1774
    %v1867 = vpop.permute.xlu0 %1866
    %1870 = vset.pattern.permute.xlu0 0
    %1871 = vperm.xlu0 %1870, %v1775
    %v1872 = vpop.permute.xlu0 %1871
    %1875 = vset.pattern.permute.xlu0 0
    %1876 = vperm.xlu0 %1875, %v1776
    %v1877 = vpop.permute.xlu0 %1876
    %1880 = vset.pattern.permute.xlu0 0
    %1881 = vperm.xlu0 %1880, %v1777
    %v1882 = vpop.permute.xlu0 %1881
    %v1885 = vsel %vm206, %v1766, 0
    %v1888 = vsel %vm206, %v1767, 0
    %v1891 = vsel %vm206, %v1768, 0
    %v1894 = vsel %vm206, %v1769, 0
    %v1897 = vsel %vm206, %v1770, 0
    %v1900 = vsel %vm206, %v1771, 0
    %1902 = vmatprep.subr.mxu0 0.0
    %1903 = vmatpush1.msra.mxu0 %v1852
    %1904 = vmatprep.subr.mxu0 0.0
    %1905 = vmatpush1.msra.mxu0 %v1853
    %1906 = vmatprep.subr.mxu0 0.0
    %1907 = vmatpush1.msra.mxu0 0.0
    %1908 = vmatprep.subr.mxu0 0.0
    %1909 = vmatpush1.msra.mxu0 0.0
    %1910 = vmatprep.subr.mxu0 0.0
    %1911 = vmatpush1.msra.mxu0 0.0
    %1912 = vmatprep.subr.mxu0 0.0
    %1913 = vmatpush1.msra.mxu0 0.0
    %1914 = vmatprep.subr.mxu0 0.0
    %1915 = vmatpush1.msra.mxu0 0.0
    %1916 = vmatprep.subr.mxu0 0.0
    %1917 = vmatpush1.msra.mxu0 0.0
    %1918 = vmatprep.subr.mxu0 0.0
    %1919 = vmatpush1.msra.mxu0 0.0
    %1920 = vmatprep.subr.mxu0 0.0
    %1921 = vmatpush1.msra.mxu0 0.0
    %1922 = vmatprep.subr.mxu0 0.0
    %1923 = vmatpush1.msra.mxu0 0.0
    %1924 = vmatprep.subr.mxu0 0.0
    %1925 = vmatpush1.msra.mxu0 0.0
    %1926 = vmatprep.subr.mxu0 0.0
    %1927 = vmatpush1.msra.mxu0 0.0
    %1928 = vmatprep.subr.mxu0 0.0
    %1929 = vmatpush1.msra.mxu0 0.0
    %1930 = vmatprep.subr.mxu0 0.0
    %1931 = vmatpush1.msra.mxu0 0.0
    %1932 = vmatprep.subr.mxu0 0.0
    %1933 = vmatpush1.msra.mxu0 0.0
    %1934 = vmatprep.subr.mxu0 0.0
    %1935 = vmatpush1.msra.mxu0 0.0
    %1936 = vmatprep.subr.mxu0 0.0
    %1937 = vmatpush1.msra.mxu0 0.0
    %1938 = vmatprep.subr.mxu0 0.0
    %1939 = vmatpush1.msra.mxu0 0.0
    %1940 = vmatprep.subr.mxu0 0.0
    %1941 = vmatpush1.msra.mxu0 0.0
    %1942 = vmatprep.subr.mxu0 0.0
    %1943 = vmatpush1.msra.mxu0 0.0
    %1944 = vmatprep.subr.mxu0 0.0
    %1945 = vmatpush1.msra.mxu0 0.0
    %1946 = vmatprep.subr.mxu0 0.0
    %1947 = vmatpush1.msra.mxu0 0.0
    %1948 = vmatprep.subr.mxu0 0.0
    %1949 = vmatpush1.msra.mxu0 0.0
    %1950 = vmatprep.subr.mxu0 0.0
    %1951 = vmatpush1.msra.mxu0 0.0
    %1952 = vmatprep.subr.mxu0 0.0
    %1953 = vmatpush1.msra.mxu0 0.0
    %1954 = vmatprep.subr.mxu0 0.0
    %1955 = vmatpush1.msra.mxu0 0.0
    %1956 = vmatprep.subr.mxu0 0.0
    %1957 = vmatpush1.msra.mxu0 0.0
    %1958 = vmatprep.subr.mxu0 0.0
    %1959 = vmatpush1.msra.mxu0 0.0
    %1960 = vmatprep.subr.mxu0 0.0
    %1961 = vmatpush1.msra.mxu0 0.0
    %1962 = vmatprep.subr.mxu0 0.0
    %1963 = vmatpush1.msra.mxu0 0.0
    %1964 = vmatprep.subr.mxu0 0.0
    %1965 = vmatpush1.msra.mxu0 0.0
    %1966 = vmatprep.mubr.f32.mxu0 0.0
    %1967 = vmatmul.mubr.f32.gmra.mrb[0].mxu0 %v1885
    %v1968 = vpop.f32.mrb[0].mxu0
    %v1969 = vadd.f32 %v1857, %v1968
    %v1970 = vpop.f32.mrb[0].mxu0
    %1971 = vmatprep.mubr.f32.mxu0 0.0
    %1972 = vmatmul.mubr.f32.gmra.mrb[0].mxu0 %v1888
    %v1973 = vpop.f32.mrb[0].mxu0
    %v1974 = vadd.f32 %v1862, %v1973
    %v1975 = vpop.f32.mrb[0].mxu0
    %1976 = vmatprep.mubr.f32.mxu0 0.0
    %1977 = vmatmul.mubr.f32.gmra.mrb[0].mxu0 %v1891
    %v1978 = vpop.f32.mrb[0].mxu0
    %v1979 = vadd.f32 %v1867, %v1978
    %v1980 = vpop.f32.mrb[0].mxu0
    %1981 = vmatprep.mubr.f32.mxu0 0.0
    %1982 = vmatmul.mubr.f32.gmra.mrb[0].mxu0 %v1894
    %v1983 = vpop.f32.mrb[0].mxu0
    %v1984 = vadd.f32 %v1872, %v1983
    %v1985 = vpop.f32.mrb[0].mxu0
    %1986 = vmatprep.mubr.f32.mxu0 0.0
    %1987 = vmatmul.mubr.f32.gmra.mrb[0].mxu0 %v1897
    %v1988 = vpop.f32.mrb[0].mxu0
    %v1989 = vadd.f32 %v1877, %v1988
    %v1990 = vpop.f32.mrb[0].mxu0
    %1991 = vmatprep.mubr.f32.mxu0 0.0
    %1992 = vmatmul.mubr.f32.gmra.mrb[0].mxu0 %v1900
    %v1993 = vpop.f32.mrb[0].mxu0
    %v1994 = vadd.f32 %v1882, %v1993
    %v1995 = vpop.f32.mrb[0].mxu0
    %1996 = vdwg.mxu0
    %v1997 = vmul.f32 %v1969, 0.35355338
    %1998 = vxpose.xlu0.b32.start [1/16] %v1997, 128
    %1999 = vxpose.xlu0.b32.cont [2/16] 0.0, 128
    %2000 = vxpose.xlu0.b32.cont [3/16] 0.0, 128
    %2001 = vxpose.xlu0.b32.cont [4/16] 0.0, 128
    %2002 = vxpose.xlu0.b32.cont [5/16] 0.0, 128
    %2003 = vxpose.xlu0.b32.cont [6/16] 0.0, 128
    %2004 = vxpose.xlu0.b32.cont [7/16] 0.0, 128
    %2005 = vxpose.xlu0.b32.cont [8/16] 0.0, 128
    %2006 = vxpose.xlu0.b32.cont [9/16] 0.0, 128
    %2007 = vxpose.xlu0.b32.cont [10/16] 0.0, 128
    %2008 = vxpose.xlu0.b32.cont [11/16] 0.0, 128
    %2009 = vxpose.xlu0.b32.cont [12/16] 0.0, 128
    %2010 = vxpose.xlu0.b32.cont [13/16] 0.0, 128
    %2011 = vxpose.xlu0.b32.cont [14/16] 0.0, 128
    %2012 = vxpose.xlu0.b32.cont [15/16] 0.0, 128
    %2013 = vxpose.xlu0.b32.end [16/16] 0.0, 128
    %v2014 = vpop.trf.xlu0
    %v2015 = vpop.trf.xlu0
    %v2016 = vpop.trf.xlu0
    %v2017 = vpop.trf.xlu0
    %v2018 = vpop.trf.xlu0
    %v2019 = vpop.trf.xlu0
    %v2020 = vpop.trf.xlu0
    %v2021 = vpop.trf.xlu0
    %v2022 = vpop.trf.xlu0
    %v2023 = vpop.trf.xlu0
    %v2024 = vpop.trf.xlu0
    %v2025 = vpop.trf.xlu0
    %v2026 = vpop.trf.xlu0
    %v2027 = vpop.trf.xlu0
    %v2028 = vpop.trf.xlu0
    %v2029 = vpop.trf.xlu0
    %v2031 = vsel %vm353, %v2014, 0
    %v2034 = vsel %vm353, %v2015, 0
    %v2037 = vsel %vm353, %v2016, 0
    %v2040 = vsel %vm353, %v2017, 0
    %v2043 = vsel %vm353, %v2018, 0
    %v2046 = vsel %vm353, %v2019, 0
    %v2049 = vsel %vm353, %v2020, 0
    %v2052 = vsel %vm353, %v2021, 0
    %v2055 = vsel %vm353, %v2022, 0
    %v2058 = vsel %vm353, %v2023, 0
    %v2061 = vsel %vm353, %v2024, 0
    %v2064 = vsel %vm353, %v2025, 0
    %v2067 = vsel %vm353, %v2026, 0
    %v2070 = vsel %vm353, %v2027, 0
    %v2073 = vsel %vm353, %v2028, 0
    %v2076 = vsel %vm353, %v2029, 0
    %2078 = vmatprep.subr.mxu0 0.0
    %2079 = vmatpush1.msra.mxu0 %v1979
    %2080 = vmatprep.subr.mxu0 0.0
    %2081 = vmatpush1.msra.mxu0 0.0
    %2082 = vmatprep.subr.mxu0 0.0
    %2083 = vmatpush1.msra.mxu0 0.0
    %2084 = vmatprep.subr.mxu0 0.0
    %2085 = vmatpush1.msra.mxu0 0.0
    %2086 = vmatprep.subr.mxu0 0.0
    %2087 = vmatpush1.msra.mxu0 0.0
    %2088 = vmatprep.subr.mxu0 0.0
    %2089 = vmatpush1.msra.mxu0 0.0
    %2090 = vmatprep.subr.mxu0 0.0
    %2091 = vmatpush1.msra.mxu0 0.0
    %2092 = vmatprep.subr.mxu0 0.0
    %2093 = vmatpush1.msra.mxu0 0.0
    %2094 = vmatprep.subr.mxu0 0.0
    %2095 = vmatpush1.msra.mxu0 0.0
    %2096 = vmatprep.subr.mxu0 0.0
    %2097 = vmatpush1.msra.mxu0 0.0
    %2098 = vmatprep.subr.mxu0 0.0
    %2099 = vmatpush1.msra.mxu0 0.0
    %2100 = vmatprep.subr.mxu0 0.0
    %2101 = vmatpush1.msra.mxu0 0.0
    %2102 = vmatprep.subr.mxu0 0.0
    %2103 = vmatpush1.msra.mxu0 0.0
    %2104 = vmatprep.subr.mxu0 0.0
    %2105 = vmatpush1.msra.mxu0 0.0
    %2106 = vmatprep.subr.mxu0 0.0
    %2107 = vmatpush1.msra.mxu0 0.0
    %2108 = vmatprep.subr.mxu0 0.0
    %2109 = vmatpush1.msra.mxu0 0.0
    %2110 = vmatprep.subr.mxu0 0.0
    %2111 = vmatpush1.msra.mxu0 0.0
    %2112 = vmatprep.subr.mxu0 0.0
    %2113 = vmatpush1.msra.mxu0 0.0
    %2114 = vmatprep.subr.mxu0 0.0
    %2115 = vmatpush1.msra.mxu0 0.0
    %2116 = vmatprep.subr.mxu0 0.0
    %2117 = vmatpush1.msra.mxu0 0.0
    %2118 = vmatprep.subr.mxu0 0.0
    %2119 = vmatpush1.msra.mxu0 0.0
    %2120 = vmatprep.subr.mxu0 0.0
    %2121 = vmatpush1.msra.mxu0 0.0
    %2122 = vmatprep.subr.mxu0 0.0
    %2123 = vmatpush1.msra.mxu0 0.0
    %2124 = vmatprep.subr.mxu0 0.0
    %2125 = vmatpush1.msra.mxu0 0.0
    %2126 = vmatprep.subr.mxu0 0.0
    %2127 = vmatpush1.msra.mxu0 0.0
    %2128 = vmatprep.subr.mxu0 0.0
    %2129 = vmatpush1.msra.mxu0 0.0
    %2130 = vmatprep.subr.mxu0 0.0
    %2131 = vmatpush1.msra.mxu0 0.0
    %2132 = vmatprep.subr.mxu0 0.0
    %2133 = vmatpush1.msra.mxu0 0.0
    %2134 = vmatprep.subr.mxu0 0.0
    %2135 = vmatpush1.msra.mxu0 0.0
    %2136 = vmatprep.subr.mxu0 0.0
    %2137 = vmatpush1.msra.mxu0 0.0
    %2138 = vmatprep.subr.mxu0 0.0
    %2139 = vmatpush1.msra.mxu0 0.0
    %2140 = vmatprep.subr.mxu0 0.0
    %2141 = vmatpush1.msra.mxu0 0.0
    %2142 = vmatprep.mubr.f32.mxu0 0.0
    %2143 = vmatmul.mubr.f32.gmra.mrb[0].mxu0 %v2031
    %v2144 = vpop.f32.mrb[0].mxu0
    %v2145 = vadd.f32 0.0, %v2144
    %v2146 = vpop.f32.mrb[0].mxu0
    %2147 = vmatprep.mubr.f32.mxu0 0.0
    %2148 = vmatmul.mubr.f32.gmra.mrb[0].mxu0 %v2034
    %v2149 = vpop.f32.mrb[0].mxu0
    %v2150 = vadd.f32 0.0, %v2149
    %v2151 = vpop.f32.mrb[0].mxu0
    %2152 = vmatprep.mubr.f32.mxu0 0.0
    %2153 = vmatmul.mubr.f32.gmra.mrb[0].mxu0 %v2037
    %v2154 = vpop.f32.mrb[0].mxu0
    %v2155 = vadd.f32 0.0, %v2154
    %v2156 = vpop.f32.mrb[0].mxu0
    %2157 = vmatprep.mubr.f32.mxu0 0.0
    %2158 = vmatmul.mubr.f32.gmra.mrb[0].mxu0 %v2040
    %v2159 = vpop.f32.mrb[0].mxu0
    %v2160 = vadd.f32 0.0, %v2159
    %v2161 = vpop.f32.mrb[0].mxu0
    %2162 = vmatprep.mubr.f32.mxu0 0.0
    %2163 = vmatmul.mubr.f32.gmra.mrb[0].mxu0 %v2043
    %v2164 = vpop.f32.mrb[0].mxu0
    %v2165 = vadd.f32 0.0, %v2164
    %v2166 = vpop.f32.mrb[0].mxu0
    %2167 = vmatprep.mubr.f32.mxu0 0.0
    %2168 = vmatmul.mubr.f32.gmra.mrb[0].mxu0 %v2046
    %v2169 = vpop.f32.mrb[0].mxu0
    %v2170 = vadd.f32 0.0, %v2169
    %v2171 = vpop.f32.mrb[0].mxu0
    %2172 = vmatprep.mubr.f32.mxu0 0.0
    %2173 = vmatmul.mubr.f32.gmra.mrb[0].mxu0 %v2049
    %v2174 = vpop.f32.mrb[0].mxu0
    %v2175 = vadd.f32 0.0, %v2174
    %v2176 = vpop.f32.mrb[0].mxu0
    %2177 = vmatprep.mubr.f32.mxu0 0.0
    %2178 = vmatmul.mubr.f32.gmra.mrb[0].mxu0 %v2052
    %v2179 = vpop.f32.mrb[0].mxu0
    %v2180 = vadd.f32 0.0, %v2179
    %v2181 = vpop.f32.mrb[0].mxu0
    %2182 = vmatprep.mubr.f32.mxu0 0.0
    %2183 = vmatmul.mubr.f32.gmra.mrb[0].mxu0 %v2055
    %v2184 = vpop.f32.mrb[0].mxu0
    %v2185 = vadd.f32 0.0, %v2184
    %v2186 = vpop.f32.mrb[0].mxu0
    %2187 = vmatprep.mubr.f32.mxu0 0.0
    %2188 = vmatmul.mubr.f32.gmra.mrb[0].mxu0 %v2058
    %v2189 = vpop.f32.mrb[0].mxu0
    %v2190 = vadd.f32 0.0, %v2189
    %v2191 = vpop.f32.mrb[0].mxu0
    %2192 = vmatprep.mubr.f32.mxu0 0.0
    %2193 = vmatmul.mubr.f32.gmra.mrb[0].mxu0 %v2061
    %v2194 = vpop.f32.mrb[0].mxu0
    %v2195 = vadd.f32 0.0, %v2194
    %v2196 = vpop.f32.mrb[0].mxu0
    %2197 = vmatprep.mubr.f32.mxu0 0.0
    %2198 = vmatmul.mubr.f32.gmra.mrb[0].mxu0 %v2064
    %v2199 = vpop.f32.mrb[0].mxu0
    %v2200 = vadd.f32 0.0, %v2199
    %v2201 = vpop.f32.mrb[0].mxu0
    %2202 = vmatprep.mubr.f32.mxu0 0.0
    %2203 = vmatmul.mubr.f32.gmra.mrb[0].mxu0 %v2067
    %v2204 = vpop.f32.mrb[0].mxu0
    %v2205 = vadd.f32 0.0, %v2204
    %v2206 = vpop.f32.mrb[0].mxu0
    %2207 = vmatprep.mubr.f32.mxu0 0.0
    %2208 = vmatmul.mubr.f32.gmra.mrb[0].mxu0 %v2070
    %v2209 = vpop.f32.mrb[0].mxu0
    %v2210 = vadd.f32 0.0, %v2209
    %v2211 = vpop.f32.mrb[0].mxu0
    %2212 = vmatprep.mubr.f32.mxu0 0.0
    %2213 = vmatmul.mubr.f32.gmra.mrb[0].mxu0 %v2073
    %v2214 = vpop.f32.mrb[0].mxu0
    %v2215 = vadd.f32 0.0, %v2214
    %v2216 = vpop.f32.mrb[0].mxu0
    %2217 = vmatprep.mubr.f32.mxu0 0.0
    %2218 = vmatmul.mubr.f32.gmra.mrb[0].mxu0 %v2076
    %v2219 = vpop.f32.mrb[0].mxu0
    %v2220 = vadd.f32 0.0, %v2219
    %v2221 = vpop.f32.mrb[0].mxu0
    %2222 = vdwg.mxu0
    %2223 = vmax.xlane.f32.xlu0 %v2145
    %v2224 = vpop.xlane.xlu0 %2223
    %2225 = vmax.xlane.f32.xlu0 %v2150
    %v2226 = vpop.xlane.xlu0 %2225
    %2227 = vmax.xlane.f32.xlu0 %v2155
    %v2228 = vpop.xlane.xlu0 %2227
    %2229 = vmax.xlane.f32.xlu0 %v2160
    %v2230 = vpop.xlane.xlu0 %2229
    %2231 = vmax.xlane.f32.xlu0 %v2165
    %v2232 = vpop.xlane.xlu0 %2231
    %2233 = vmax.xlane.f32.xlu0 %v2170
    %v2234 = vpop.xlane.xlu0 %2233
    %2235 = vmax.xlane.f32.xlu0 %v2175
    %v2236 = vpop.xlane.xlu0 %2235
    %2237 = vmax.xlane.f32.xlu0 %v2180
    %v2238 = vpop.xlane.xlu0 %2237
    %2239 = vmax.xlane.f32.xlu0 %v2185
    %v2240 = vpop.xlane.xlu0 %2239
    %2241 = vmax.xlane.f32.xlu0 %v2190
    %v2242 = vpop.xlane.xlu0 %2241
    %2243 = vmax.xlane.f32.xlu0 %v2195
    %v2244 = vpop.xlane.xlu0 %2243
    %2245 = vmax.xlane.f32.xlu0 %v2200
    %v2246 = vpop.xlane.xlu0 %2245
    %2247 = vmax.xlane.f32.xlu0 %v2205
    %v2248 = vpop.xlane.xlu0 %2247
    %2249 = vmax.xlane.f32.xlu0 %v2210
    %v2250 = vpop.xlane.xlu0 %2249
    %2251 = vmax.xlane.f32.xlu0 %v2215
    %v2252 = vpop.xlane.xlu0 %2251
    %2253 = vmax.xlane.f32.xlu0 %v2220
    %v2254 = vpop.xlane.xlu0 %2253
    %v2255 = vsub.f32 %v2145, %v2224
    %v2256 = vsub.f32 %v2150, %v2226
    %v2257 = vsub.f32 %v2155, %v2228
    %v2258 = vsub.f32 %v2160, %v2230
    %v2259 = vsub.f32 %v2165, %v2232
    %v2260 = vsub.f32 %v2170, %v2234
    %v2261 = vsub.f32 %v2175, %v2236
    %v2262 = vsub.f32 %v2180, %v2238
    %v2263 = vsub.f32 %v2185, %v2240
    %v2264 = vsub.f32 %v2190, %v2242
    %v2265 = vsub.f32 %v2195, %v2244
    %v2266 = vsub.f32 %v2200, %v2246
    %v2267 = vsub.f32 %v2205, %v2248
    %v2268 = vsub.f32 %v2210, %v2250
    %v2269 = vsub.f32 %v2215, %v2252
    %v2270 = vsub.f32 %v2220, %v2254
    %v2271 = vmul.f32 %v2255, 1.442695
    %v2272 = vpow.pop %v2271
    %v2273 = vmul.f32 %v2256, 1.442695
    %v2274 = vpow.pop %v2273
    %v2275 = vmul.f32 %v2257, 1.442695
    %v2276 = vpow.pop %v2275
    %v2277 = vmul.f32 %v2258, 1.442695
    %v2278 = vpow.pop %v2277
    %v2279 = vmul.f32 %v2259, 1.442695
    %v2280 = vpow.pop %v2279
    %v2281 = vmul.f32 %v2260, 1.442695
    %v2282 = vpow.pop %v2281
    %v2283 = vmul.f32 %v2261, 1.442695
    %v2284 = vpow.pop %v2283
    %v2285 = vmul.f32 %v2262, 1.442695
    %v2286 = vpow.pop %v2285
    %v2287 = vmul.f32 %v2263, 1.442695
    %v2288 = vpow.pop %v2287
    %v2289 = vmul.f32 %v2264, 1.442695
    %v2290 = vpow.pop %v2289
    %v2291 = vmul.f32 %v2265, 1.442695
    %v2292 = vpow.pop %v2291
    %v2293 = vmul.f32 %v2266, 1.442695
    %v2294 = vpow.pop %v2293
    %v2295 = vmul.f32 %v2267, 1.442695
    %v2296 = vpow.pop %v2295
    %v2297 = vmul.f32 %v2268, 1.442695
    %v2298 = vpow.pop %v2297
    %v2299 = vmul.f32 %v2269, 1.442695
    %v2300 = vpow.pop %v2299
    %v2301 = vmul.f32 %v2270, 1.442695
    %v2302 = vpow.pop %v2301
    %2303 = vadd.xlane.f32.xlu0 %v2272
    %v2304 = vpop.xlane.xlu0 %2303
    %2305 = vadd.xlane.f32.xlu0 %v2274
    %v2306 = vpop.xlane.xlu0 %2305
    %2307 = vadd.xlane.f32.xlu0 %v2276
    %v2308 = vpop.xlane.xlu0 %2307
    %2309 = vadd.xlane.f32.xlu0 %v2278
    %v2310 = vpop.xlane.xlu0 %2309
    %2311 = vadd.xlane.f32.xlu0 %v2280
    %v2312 = vpop.xlane.xlu0 %2311
    %2313 = vadd.xlane.f32.xlu0 %v2282
    %v2314 = vpop.xlane.xlu0 %2313
    %2315 = vadd.xlane.f32.xlu0 %v2284
    %v2316 = vpop.xlane.xlu0 %2315
    %2317 = vadd.xlane.f32.xlu0 %v2286
    %v2318 = vpop.xlane.xlu0 %2317
    %2319 = vadd.xlane.f32.xlu0 %v2288
    %v2320 = vpop.xlane.xlu0 %2319
    %2321 = vadd.xlane.f32.xlu0 %v2290
    %v2322 = vpop.xlane.xlu0 %2321
    %2323 = vadd.xlane.f32.xlu0 %v2292
    %v2324 = vpop.xlane.xlu0 %2323
    %2325 = vadd.xlane.f32.xlu0 %v2294
    %v2326 = vpop.xlane.xlu0 %2325
    %2327 = vadd.xlane.f32.xlu0 %v2296
    %v2328 = vpop.xlane.xlu0 %2327
    %2329 = vadd.xlane.f32.xlu0 %v2298
    %v2330 = vpop.xlane.xlu0 %2329
    %2331 = vadd.xlane.f32.xlu0 %v2300
    %v2332 = vpop.xlane.xlu0 %2331
    %2333 = vadd.xlane.f32.xlu0 %v2302
    %v2334 = vpop.xlane.xlu0 %2333
    %v2335 = vrcp.pop %v2304
    %v2336 = vrcp.pop %v2306
    %v2337 = vrcp.pop %v2308
    %v2338 = vrcp.pop %v2310
    %v2339 = vrcp.pop %v2312
    %v2340 = vrcp.pop %v2314
    %v2341 = vrcp.pop %v2316
    %v2342 = vrcp.pop %v2318
    %v2343 = vrcp.pop %v2320
    %v2344 = vrcp.pop %v2322
    %v2345 = vrcp.pop %v2324
    %v2346 = vrcp.pop %v2326
    %v2347 = vrcp.pop %v2328
    %v2348 = vrcp.pop %v2330
    %v2349 = vrcp.pop %v2332
    %v2350 = vrcp.pop %v2334
    %v2351 = vmul.f32 %v2272, %v2335
    %v2352 = vmul.f32 %v2274, %v2336
    %v2353 = vmul.f32 %v2276, %v2337
    %v2354 = vmul.f32 %v2278, %v2338
    %v2355 = vmul.f32 %v2280, %v2339
    %v2356 = vmul.f32 %v2282, %v2340
    %v2357 = vmul.f32 %v2284, %v2341
    %v2358 = vmul.f32 %v2286, %v2342
    %v2359 = vmul.f32 %v2288, %v2343
    %v2360 = vmul.f32 %v2290, %v2344
    %v2361 = vmul.f32 %v2292, %v2345
    %v2362 = vmul.f32 %v2294, %v2346
    %v2363 = vmul.f32 %v2296, %v2347
    %v2364 = vmul.f32 %v2298, %v2348
    %v2365 = vmul.f32 %v2300, %v2349
    %v2366 = vmul.f32 %v2302, %v2350
    %2367 = vmatprep.subr.mxu0 0.0
    %2368 = vmatpush1.xpose.msra.mxu0 %v2351
    %2369 = vmatprep.subr.mxu0 0.0
    %2370 = vmatpush1.xpose.msra.mxu0 %v2352
    %2371 = vmatprep.subr.mxu0 0.0
    %2372 = vmatpush1.xpose.msra.mxu0 %v2353
    %2373 = vmatprep.subr.mxu0 0.0
    %2374 = vmatpush1.xpose.msra.mxu0 %v2354
    %2375 = vmatprep.subr.mxu0 0.0
    %2376 = vmatpush1.xpose.msra.mxu0 %v2355
    %2377 = vmatprep.subr.mxu0 0.0
    %2378 = vmatpush1.xpose.msra.mxu0 %v2356
    %2379 = vmatprep.subr.mxu0 0.0
    %2380 = vmatpush1.xpose.msra.mxu0 %v2357
    %2381 = vmatprep.subr.mxu0 0.0
    %2382 = vmatpush1.xpose.msra.mxu0 %v2358
    %2383 = vmatprep.subr.mxu0 0.0
    %2384 = vmatpush1.xpose.msra.mxu0 %v2359
    %2385 = vmatprep.subr.mxu0 0.0
    %2386 = vmatpush1.xpose.msra.mxu0 %v2360
    %2387 = vmatprep.subr.mxu0 0.0
    %2388 = vmatpush1.xpose.msra.mxu0 %v2361
    %2389 = vmatprep.subr.mxu0 0.0
    %2390 = vmatpush1.xpose.msra.mxu0 %v2362
    %2391 = vmatprep.subr.mxu0 0.0
    %2392 = vmatpush1.xpose.msra.mxu0 %v2363
    %2393 = vmatprep.subr.mxu0 0.0
    %2394 = vmatpush1.xpose.msra.mxu0 %v2364
    %2395 = vmatprep.subr.mxu0 0.0
    %2396 = vmatpush1.xpose.msra.mxu0 %v2365
    %2397 = vmatprep.subr.mxu0 0.0
    %2398 = vmatpush1.xpose.msra.mxu0 %v2366
    %2399 = vmatprep.subr.mxu0 0.0
    %2400 = vmatpush1.xpose.msra.mxu0 0.0
    %2401 = vmatprep.subr.mxu0 0.0
    %2402 = vmatpush1.xpose.msra.mxu0 0.0
    %2403 = vmatprep.subr.mxu0 0.0
    %2404 = vmatpush1.xpose.msra.mxu0 0.0
    %2405 = vmatprep.subr.mxu0 0.0
    %2406 = vmatpush1.xpose.msra.mxu0 0.0
    %2407 = vmatprep.subr.mxu0 0.0
    %2408 = vmatpush1.xpose.msra.mxu0 0.0
    %2409 = vmatprep.subr.mxu0 0.0
    %2410 = vmatpush1.xpose.msra.mxu0 0.0
    %2411 = vmatprep.subr.mxu0 0.0
    %2412 = vmatpush1.xpose.msra.mxu0 0.0
    %2413 = vmatprep.subr.mxu0 0.0
    %2414 = vmatpush1.xpose.msra.mxu0 0.0
    %2415 = vmatprep.subr.mxu0 0.0
    %2416 = vmatpush1.xpose.msra.mxu0 0.0
    %2417 = vmatprep.subr.mxu0 0.0
    %2418 = vmatpush1.xpose.msra.mxu0 0.0
    %2419 = vmatprep.subr.mxu0 0.0
    %2420 = vmatpush1.xpose.msra.mxu0 0.0
    %2421 = vmatprep.subr.mxu0 0.0
    %2422 = vmatpush1.xpose.msra.mxu0 0.0
    %2423 = vmatprep.subr.mxu0 0.0
    %2424 = vmatpush1.xpose.msra.mxu0 0.0
    %2425 = vmatprep.subr.mxu0 0.0
    %2426 = vmatpush1.xpose.msra.mxu0 0.0
    %2427 = vmatprep.subr.mxu0 0.0
    %2428 = vmatpush1.xpose.msra.mxu0 0.0
    %2429 = vmatprep.subr.mxu0 0.0
    %2430 = vmatpush1.xpose.msra.mxu0 0.0
    %2431 = vmatprep.mubr.f32.mxu0 0.0
    %2432 = vmatmul.mubr.f32.gmra.mrb[0].mxu0 %v1989
    %v2433 = vpop.f32.mrb[0].mxu0
    %v2434 = vadd.f32 0.0, %v2433
    %v2435 = vpop.f32.mrb[0].mxu0
    %2436 = vdwg.mxu0
    %v2437 = vmul.f32 %v1974, 0.35355338
    %2438 = vxpose.xlu0.b32.start [1/16] %v2437, 128
    %2439 = vxpose.xlu0.b32.cont [2/16] 0.0, 128
    %2440 = vxpose.xlu0.b32.cont [3/16] 0.0, 128
    %2441 = vxpose.xlu0.b32.cont [4/16] 0.0, 128
    %2442 = vxpose.xlu0.b32.cont [5/16] 0.0, 128
    %2443 = vxpose.xlu0.b32.cont [6/16] 0.0, 128
    %2444 = vxpose.xlu0.b32.cont [7/16] 0.0, 128
    %2445 = vxpose.xlu0.b32.cont [8/16] 0.0, 128
    %2446 = vxpose.xlu0.b32.cont [9/16] 0.0, 128
    %2447 = vxpose.xlu0.b32.cont [10/16] 0.0, 128
    %2448 = vxpose.xlu0.b32.cont [11/16] 0.0, 128
    %2449 = vxpose.xlu0.b32.cont [12/16] 0.0, 128
    %2450 = vxpose.xlu0.b32.cont [13/16] 0.0, 128
    %2451 = vxpose.xlu0.b32.cont [14/16] 0.0, 128
    %2452 = vxpose.xlu0.b32.cont [15/16] 0.0, 128
    %2453 = vxpose.xlu0.b32.end [16/16] 0.0, 128
    %v2454 = vpop.trf.xlu0
    %v2455 = vpop.trf.xlu0
    %v2456 = vpop.trf.xlu0
    %v2457 = vpop.trf.xlu0
    %v2458 = vpop.trf.xlu0
    %v2459 = vpop.trf.xlu0
    %v2460 = vpop.trf.xlu0
    %v2461 = vpop.trf.xlu0
    %v2462 = vpop.trf.xlu0
    %v2463 = vpop.trf.xlu0
    %v2464 = vpop.trf.xlu0
    %v2465 = vpop.trf.xlu0
    %v2466 = vpop.trf.xlu0
    %v2467 = vpop.trf.xlu0
    %v2468 = vpop.trf.xlu0
    %v2469 = vpop.trf.xlu0
    %v2471 = vsel %vm353, %v2454, 0
    %v2474 = vsel %vm353, %v2455, 0
    %v2477 = vsel %vm353, %v2456, 0
    %v2480 = vsel %vm353, %v2457, 0
    %v2483 = vsel %vm353, %v2458, 0
    %v2486 = vsel %vm353, %v2459, 0
    %v2489 = vsel %vm353, %v2460, 0
    %v2492 = vsel %vm353, %v2461, 0
    %v2495 = vsel %vm353, %v2462, 0
    %v2498 = vsel %vm353, %v2463, 0
    %v2501 = vsel %vm353, %v2464, 0
    %v2504 = vsel %vm353, %v2465, 0
    %v2507 = vsel %vm353, %v2466, 0
    %v2510 = vsel %vm353, %v2467, 0
    %v2513 = vsel %vm353, %v2468, 0
    %v2516 = vsel %vm353, %v2469, 0
    %2518 = vmatprep.subr.mxu0 0.0
    %2519 = vmatpush1.msra.mxu0 %v1984
    %2520 = vmatprep.subr.mxu0 0.0
    %2521 = vmatpush1.msra.mxu0 0.0
    %2522 = vmatprep.subr.mxu0 0.0
    %2523 = vmatpush1.msra.mxu0 0.0
    %2524 = vmatprep.subr.mxu0 0.0
    %2525 = vmatpush1.msra.mxu0 0.0
    %2526 = vmatprep.subr.mxu0 0.0
    %2527 = vmatpush1.msra.mxu0 0.0
    %2528 = vmatprep.subr.mxu0 0.0
    %2529 = vmatpush1.msra.mxu0 0.0
    %2530 = vmatprep.subr.mxu0 0.0
    %2531 = vmatpush1.msra.mxu0 0.0
    %2532 = vmatprep.subr.mxu0 0.0
    %2533 = vmatpush1.msra.mxu0 0.0
    %2534 = vmatprep.subr.mxu0 0.0
    %2535 = vmatpush1.msra.mxu0 0.0
    %2536 = vmatprep.subr.mxu0 0.0
    %2537 = vmatpush1.msra.mxu0 0.0
    %2538 = vmatprep.subr.mxu0 0.0
    %2539 = vmatpush1.msra.mxu0 0.0
    %2540 = vmatprep.subr.mxu0 0.0
    %2541 = vmatpush1.msra.mxu0 0.0
    %2542 = vmatprep.subr.mxu0 0.0
    %2543 = vmatpush1.msra.mxu0 0.0
    %2544 = vmatprep.subr.mxu0 0.0
    %2545 = vmatpush1.msra.mxu0 0.0
    %2546 = vmatprep.subr.mxu0 0.0
    %2547 = vmatpush1.msra.mxu0 0.0
    %2548 = vmatprep.subr.mxu0 0.0
    %2549 = vmatpush1.msra.mxu0 0.0
    %2550 = vmatprep.subr.mxu0 0.0
    %2551 = vmatpush1.msra.mxu0 0.0
    %2552 = vmatprep.subr.mxu0 0.0
    %2553 = vmatpush1.msra.mxu0 0.0
    %2554 = vmatprep.subr.mxu0 0.0
    %2555 = vmatpush1.msra.mxu0 0.0
    %2556 = vmatprep.subr.mxu0 0.0
    %2557 = vmatpush1.msra.mxu0 0.0
    %2558 = vmatprep.subr.mxu0 0.0
    %2559 = vmatpush1.msra.mxu0 0.0
    %2560 = vmatprep.subr.mxu0 0.0
    %2561 = vmatpush1.msra.mxu0 0.0
    %2562 = vmatprep.subr.mxu0 0.0
    %2563 = vmatpush1.msra.mxu0 0.0
    %2564 = vmatprep.subr.mxu0 0.0
    %2565 = vmatpush1.msra.mxu0 0.0
    %2566 = vmatprep.subr.mxu0 0.0
    %2567 = vmatpush1.msra.mxu0 0.0
    %2568 = vmatprep.subr.mxu0 0.0
    %2569 = vmatpush1.msra.mxu0 0.0
    %2570 = vmatprep.subr.mxu0 0.0
    %2571 = vmatpush1.msra.mxu0 0.0
    %2572 = vmatprep.subr.mxu0 0.0
    %2573 = vmatpush1.msra.mxu0 0.0
    %2574 = vmatprep.subr.mxu0 0.0
    %2575 = vmatpush1.msra.mxu0 0.0
    %2576 = vmatprep.subr.mxu0 0.0
    %2577 = vmatpush1.msra.mxu0 0.0
    %2578 = vmatprep.subr.mxu0 0.0
    %2579 = vmatpush1.msra.mxu0 0.0
    %2580 = vmatprep.subr.mxu0 0.0
    %2581 = vmatpush1.msra.mxu0 0.0
    %2582 = vmatprep.mubr.f32.mxu0 0.0
    %2583 = vmatmul.mubr.f32.gmra.mrb[0].mxu0 %v2471
    %v2584 = vpop.f32.mrb[0].mxu0
    %v2585 = vadd.f32 0.0, %v2584
    %v2586 = vpop.f32.mrb[0].mxu0
    %2587 = vmatprep.mubr.f32.mxu0 0.0
    %2588 = vmatmul.mubr.f32.gmra.mrb[0].mxu0 %v2474
    %v2589 = vpop.f32.mrb[0].mxu0
    %v2590 = vadd.f32 0.0, %v2589
    %v2591 = vpop.f32.mrb[0].mxu0
    %2592 = vmatprep.mubr.f32.mxu0 0.0
    %2593 = vmatmul.mubr.f32.gmra.mrb[0].mxu0 %v2477
    %v2594 = vpop.f32.mrb[0].mxu0
    %v2595 = vadd.f32 0.0, %v2594
    %v2596 = vpop.f32.mrb[0].mxu0
    %2597 = vmatprep.mubr.f32.mxu0 0.0
    %2598 = vmatmul.mubr.f32.gmra.mrb[0].mxu0 %v2480
    %v2599 = vpop.f32.mrb[0].mxu0
    %v2600 = vadd.f32 0.0, %v2599
    %v2601 = vpop.f32.mrb[0].mxu0
    %2602 = vmatprep.mubr.f32.mxu0 0.0
    %2603 = vmatmul.mubr.f32.gmra.mrb[0].mxu0 %v2483
    %v2604 = vpop.f32.mrb[0].mxu0
    %v2605 = vadd.f32 0.0, %v2604
    %v2606 = vpop.f32.mrb[0].mxu0
    %2607 = vmatprep.mubr.f32.mxu0 0.0
    %2608 = vmatmul.mubr.f32.gmra.mrb[0].mxu0 %v2486
    %v2609 = vpop.f32.mrb[0].mxu0
    %v2610 = vadd.f32 0.0, %v2609
    %v2611 = vpop.f32.mrb[0].mxu0
    %2612 = vmatprep.mubr.f32.mxu0 0.0
    %2613 = vmatmul.mubr.f32.gmra.mrb[0].mxu0 %v2489
    %v2614 = vpop.f32.mrb[0].mxu0
    %v2615 = vadd.f32 0.0, %v2614
    %v2616 = vpop.f32.mrb[0].mxu0
    %2617 = vmatprep.mubr.f32.mxu0 0.0
    %2618 = vmatmul.mubr.f32.gmra.mrb[0].mxu0 %v2492
    %v2619 = vpop.f32.mrb[0].mxu0
    %v2620 = vadd.f32 0.0, %v2619
    %v2621 = vpop.f32.mrb[0].mxu0
    %2622 = vmatprep.mubr.f32.mxu0 0.0
    %2623 = vmatmul.mubr.f32.gmra.mrb[0].mxu0 %v2495
    %v2624 = vpop.f32.mrb[0].mxu0
    %v2625 = vadd.f32 0.0, %v2624
    %v2626 = vpop.f32.mrb[0].mxu0
    %2627 = vmatprep.mubr.f32.mxu0 0.0
    %2628 = vmatmul.mubr.f32.gmra.mrb[0].mxu0 %v2498
    %v2629 = vpop.f32.mrb[0].mxu0
    %v2630 = vadd.f32 0.0, %v2629
    %v2631 = vpop.f32.mrb[0].mxu0
    %2632 = vmatprep.mubr.f32.mxu0 0.0
    %2633 = vmatmul.mubr.f32.gmra.mrb[0].mxu0 %v2501
    %v2634 = vpop.f32.mrb[0].mxu0
    %v2635 = vadd.f32 0.0, %v2634
    %v2636 = vpop.f32.mrb[0].mxu0
    %2637 = vmatprep.mubr.f32.mxu0 0.0
    %2638 = vmatmul.mubr.f32.gmra.mrb[0].mxu0 %v2504
    %v2639 = vpop.f32.mrb[0].mxu0
    %v2640 = vadd.f32 0.0, %v2639
    %v2641 = vpop.f32.mrb[0].mxu0
    %2642 = vmatprep.mubr.f32.mxu0 0.0
    %2643 = vmatmul.mubr.f32.gmra.mrb[0].mxu0 %v2507
    %v2644 = vpop.f32.mrb[0].mxu0
    %v2645 = vadd.f32 0.0, %v2644
    %v2646 = vpop.f32.mrb[0].mxu0
    %2647 = vmatprep.mubr.f32.mxu0 0.0
    %2648 = vmatmul.mubr.f32.gmra.mrb[0].mxu0 %v2510
    %v2649 = vpop.f32.mrb[0].mxu0
    %v2650 = vadd.f32 0.0, %v2649
    %v2651 = vpop.f32.mrb[0].mxu0
    %2652 = vmatprep.mubr.f32.mxu0 0.0
    %2653 = vmatmul.mubr.f32.gmra.mrb[0].mxu0 %v2513
    %v2654 = vpop.f32.mrb[0].mxu0
    %v2655 = vadd.f32 0.0, %v2654
    %v2656 = vpop.f32.mrb[0].mxu0
    %2657 = vmatprep.mubr.f32.mxu0 0.0
    %2658 = vmatmul.mubr.f32.gmra.mrb[0].mxu0 %v2516
    %v2659 = vpop.f32.mrb[0].mxu0
    %v2660 = vadd.f32 0.0, %v2659
    %v2661 = vpop.f32.mrb[0].mxu0
    %2662 = vdwg.mxu0
    %2663 = vmax.xlane.f32.xlu0 %v2585
    %v2664 = vpop.xlane.xlu0 %2663
    %2665 = vmax.xlane.f32.xlu0 %v2590
    %v2666 = vpop.xlane.xlu0 %2665
    %2667 = vmax.xlane.f32.xlu0 %v2595
    %v2668 = vpop.xlane.xlu0 %2667
    %2669 = vmax.xlane.f32.xlu0 %v2600
    %v2670 = vpop.xlane.xlu0 %2669
    %2671 = vmax.xlane.f32.xlu0 %v2605
    %v2672 = vpop.xlane.xlu0 %2671
    %2673 = vmax.xlane.f32.xlu0 %v2610
    %v2674 = vpop.xlane.xlu0 %2673
    %2675 = vmax.xlane.f32.xlu0 %v2615
    %v2676 = vpop.xlane.xlu0 %2675
    %2677 = vmax.xlane.f32.xlu0 %v2620
    %v2678 = vpop.xlane.xlu0 %2677
    %2679 = vmax.xlane.f32.xlu0 %v2625
    %v2680 = vpop.xlane.xlu0 %2679
    %2681 = vmax.xlane.f32.xlu0 %v2630
    %v2682 = vpop.xlane.xlu0 %2681
    %2683 = vmax.xlane.f32.xlu0 %v2635
    %v2684 = vpop.xlane.xlu0 %2683
    %2685 = vmax.xlane.f32.xlu0 %v2640
    %v2686 = vpop.xlane.xlu0 %2685
    %2687 = vmax.xlane.f32.xlu0 %v2645
    %v2688 = vpop.xlane.xlu0 %2687
    %2689 = vmax.xlane.f32.xlu0 %v2650
    %v2690 = vpop.xlane.xlu0 %2689
    %2691 = vmax.xlane.f32.xlu0 %v2655
    %v2692 = vpop.xlane.xlu0 %2691
    %2693 = vmax.xlane.f32.xlu0 %v2660
    %v2694 = vpop.xlane.xlu0 %2693
    %v2695 = vsub.f32 %v2585, %v2664
    %v2696 = vsub.f32 %v2590, %v2666
    %v2697 = vsub.f32 %v2595, %v2668
    %v2698 = vsub.f32 %v2600, %v2670
    %v2699 = vsub.f32 %v2605, %v2672
    %v2700 = vsub.f32 %v2610, %v2674
    %v2701 = vsub.f32 %v2615, %v2676
    %v2702 = vsub.f32 %v2620, %v2678
    %v2703 = vsub.f32 %v2625, %v2680
    %v2704 = vsub.f32 %v2630, %v2682
    %v2705 = vsub.f32 %v2635, %v2684
    %v2706 = vsub.f32 %v2640, %v2686
    %v2707 = vsub.f32 %v2645, %v2688
    %v2708 = vsub.f32 %v2650, %v2690
    %v2709 = vsub.f32 %v2655, %v2692
    %v2710 = vsub.f32 %v2660, %v2694
    %v2711 = vmul.f32 %v2695, 1.442695
    %v2712 = vpow.pop %v2711
    %v2713 = vmul.f32 %v2696, 1.442695
    %v2714 = vpow.pop %v2713
    %v2715 = vmul.f32 %v2697, 1.442695
    %v2716 = vpow.pop %v2715
    %v2717 = vmul.f32 %v2698, 1.442695
    %v2718 = vpow.pop %v2717
    %v2719 = vmul.f32 %v2699, 1.442695
    %v2720 = vpow.pop %v2719
    %v2721 = vmul.f32 %v2700, 1.442695
    %v2722 = vpow.pop %v2721
    %v2723 = vmul.f32 %v2701, 1.442695
    %v2724 = vpow.pop %v2723
    %v2725 = vmul.f32 %v2702, 1.442695
    %v2726 = vpow.pop %v2725
    %v2727 = vmul.f32 %v2703, 1.442695
    %v2728 = vpow.pop %v2727
    %v2729 = vmul.f32 %v2704, 1.442695
    %v2730 = vpow.pop %v2729
    %v2731 = vmul.f32 %v2705, 1.442695
    %v2732 = vpow.pop %v2731
    %v2733 = vmul.f32 %v2706, 1.442695
    %v2734 = vpow.pop %v2733
    %v2735 = vmul.f32 %v2707, 1.442695
    %v2736 = vpow.pop %v2735
    %v2737 = vmul.f32 %v2708, 1.442695
    %v2738 = vpow.pop %v2737
    %v2739 = vmul.f32 %v2709, 1.442695
    %v2740 = vpow.pop %v2739
    %v2741 = vmul.f32 %v2710, 1.442695
    %v2742 = vpow.pop %v2741
    %2743 = vadd.xlane.f32.xlu0 %v2712
    %v2744 = vpop.xlane.xlu0 %2743
    %2745 = vadd.xlane.f32.xlu0 %v2714
    %v2746 = vpop.xlane.xlu0 %2745
    %2747 = vadd.xlane.f32.xlu0 %v2716
    %v2748 = vpop.xlane.xlu0 %2747
    %2749 = vadd.xlane.f32.xlu0 %v2718
    %v2750 = vpop.xlane.xlu0 %2749
    %2751 = vadd.xlane.f32.xlu0 %v2720
    %v2752 = vpop.xlane.xlu0 %2751
    %2753 = vadd.xlane.f32.xlu0 %v2722
    %v2754 = vpop.xlane.xlu0 %2753
    %2755 = vadd.xlane.f32.xlu0 %v2724
    %v2756 = vpop.xlane.xlu0 %2755
    %2757 = vadd.xlane.f32.xlu0 %v2726
    %v2758 = vpop.xlane.xlu0 %2757
    %2759 = vadd.xlane.f32.xlu0 %v2728
    %v2760 = vpop.xlane.xlu0 %2759
    %2761 = vadd.xlane.f32.xlu0 %v2730
    %v2762 = vpop.xlane.xlu0 %2761
    %2763 = vadd.xlane.f32.xlu0 %v2732
    %v2764 = vpop.xlane.xlu0 %2763
    %2765 = vadd.xlane.f32.xlu0 %v2734
    %v2766 = vpop.xlane.xlu0 %2765
    %2767 = vadd.xlane.f32.xlu0 %v2736
    %v2768 = vpop.xlane.xlu0 %2767
    %2769 = vadd.xlane.f32.xlu0 %v2738
    %v2770 = vpop.xlane.xlu0 %2769
    %2771 = vadd.xlane.f32.xlu0 %v2740
    %v2772 = vpop.xlane.xlu0 %2771
    %2773 = vadd.xlane.f32.xlu0 %v2742
    %v2774 = vpop.xlane.xlu0 %2773
    %v2775 = vrcp.pop %v2744
    %v2776 = vrcp.pop %v2746
    %v2777 = vrcp.pop %v2748
    %v2778 = vrcp.pop %v2750
    %v2779 = vrcp.pop %v2752
    %v2780 = vrcp.pop %v2754
    %v2781 = vrcp.pop %v2756
    %v2782 = vrcp.pop %v2758
    %v2783 = vrcp.pop %v2760
    %v2784 = vrcp.pop %v2762
    %v2785 = vrcp.pop %v2764
    %v2786 = vrcp.pop %v2766
    %v2787 = vrcp.pop %v2768
    %v2788 = vrcp.pop %v2770
    %v2789 = vrcp.pop %v2772
    %v2790 = vrcp.pop %v2774
    %v2791 = vmul.f32 %v2712, %v2775
    %v2792 = vmul.f32 %v2714, %v2776
    %v2793 = vmul.f32 %v2716, %v2777
    %v2794 = vmul.f32 %v2718, %v2778
    %v2795 = vmul.f32 %v2720, %v2779
    %v2796 = vmul.f32 %v2722, %v2780
    %v2797 = vmul.f32 %v2724, %v2781
    %v2798 = vmul.f32 %v2726, %v2782
    %v2799 = vmul.f32 %v2728, %v2783
    %v2800 = vmul.f32 %v2730, %v2784
    %v2801 = vmul.f32 %v2732, %v2785
    %v2802 = vmul.f32 %v2734, %v2786
    %v2803 = vmul.f32 %v2736, %v2787
    %v2804 = vmul.f32 %v2738, %v2788
    %v2805 = vmul.f32 %v2740, %v2789
    %v2806 = vmul.f32 %v2742, %v2790
    %2807 = vmatprep.subr.mxu0 0.0
    %2808 = vmatpush1.xpose.msra.mxu0 %v2791
    %2809 = vmatprep.subr.mxu0 0.0
    %2810 = vmatpush1.xpose.msra.mxu0 %v2792
    %2811 = vmatprep.subr.mxu0 0.0
    %2812 = vmatpush1.xpose.msra.mxu0 %v2793
    %2813 = vmatprep.subr.mxu0 0.0
    %2814 = vmatpush1.xpose.msra.mxu0 %v2794
    %2815 = vmatprep.subr.mxu0 0.0
    %2816 = vmatpush1.xpose.msra.mxu0 %v2795
    %2817 = vmatprep.subr.mxu0 0.0
    %2818 = vmatpush1.xpose.msra.mxu0 %v2796
    %2819 = vmatprep.subr.mxu0 0.0
    %2820 = vmatpush1.xpose.msra.mxu0 %v2797
    %2821 = vmatprep.subr.mxu0 0.0
    %2822 = vmatpush1.xpose.msra.mxu0 %v2798
    %2823 = vmatprep.subr.mxu0 0.0
    %2824 = vmatpush1.xpose.msra.mxu0 %v2799
    %2825 = vmatprep.subr.mxu0 0.0
    %2826 = vmatpush1.xpose.msra.mxu0 %v2800
    %2827 = vmatprep.subr.mxu0 0.0
    %2828 = vmatpush1.xpose.msra.mxu0 %v2801
    %2829 = vmatprep.subr.mxu0 0.0
    %2830 = vmatpush1.xpose.msra.mxu0 %v2802
    %2831 = vmatprep.subr.mxu0 0.0
    %2832 = vmatpush1.xpose.msra.mxu0 %v2803
    %2833 = vmatprep.subr.mxu0 0.0
    %2834 = vmatpush1.xpose.msra.mxu0 %v2804
    %2835 = vmatprep.subr.mxu0 0.0
    %2836 = vmatpush1.xpose.msra.mxu0 %v2805
    %2837 = vmatprep.subr.mxu0 0.0
    %2838 = vmatpush1.xpose.msra.mxu0 %v2806
    %2839 = vmatprep.subr.mxu0 0.0
    %2840 = vmatpush1.xpose.msra.mxu0 0.0
    %2841 = vmatprep.subr.mxu0 0.0
    %2842 = vmatpush1.xpose.msra.mxu0 0.0
    %2843 = vmatprep.subr.mxu0 0.0
    %2844 = vmatpush1.xpose.msra.mxu0 0.0
    %2845 = vmatprep.subr.mxu0 0.0
    %2846 = vmatpush1.xpose.msra.mxu0 0.0
    %2847 = vmatprep.subr.mxu0 0.0
    %2848 = vmatpush1.xpose.msra.mxu0 0.0
    %2849 = vmatprep.subr.mxu0 0.0
    %2850 = vmatpush1.xpose.msra.mxu0 0.0
    %2851 = vmatprep.subr.mxu0 0.0
    %2852 = vmatpush1.xpose.msra.mxu0 0.0
    %2853 = vmatprep.subr.mxu0 0.0
    %2854 = vmatpush1.xpose.msra.mxu0 0.0
    %2855 = vmatprep.subr.mxu0 0.0
    %2856 = vmatpush1.xpose.msra.mxu0 0.0
    %2857 = vmatprep.subr.mxu0 0.0
    %2858 = vmatpush1.xpose.msra.mxu0 0.0
    %2859 = vmatprep.subr.mxu0 0.0
    %2860 = vmatpush1.xpose.msra.mxu0 0.0
    %2861 = vmatprep.subr.mxu0 0.0
    %2862 = vmatpush1.xpose.msra.mxu0 0.0
    %2863 = vmatprep.subr.mxu0 0.0
    %2864 = vmatpush1.xpose.msra.mxu0 0.0
    %2865 = vmatprep.subr.mxu0 0.0
    %2866 = vmatpush1.xpose.msra.mxu0 0.0
    %2867 = vmatprep.subr.mxu0 0.0
    %2868 = vmatpush1.xpose.msra.mxu0 0.0
    %2869 = vmatprep.subr.mxu0 0.0
    %2870 = vmatpush1.xpose.msra.mxu0 0.0
    %2871 = vmatprep.mubr.f32.mxu0 0.0
    %2872 = vmatmul.mubr.f32.gmra.mrb[0].mxu0 %v1994
    %v2873 = vpop.f32.mrb[0].mxu0
    %v2874 = vadd.f32 0.0, %v2873
    %v2875 = vpop.f32.mrb[0].mxu0
    %2876 = vdwg.mxu0
    %2879 = vrot.lane.b32.xlu0 %v1778, 120
    %v2880 = vpop.permute.xlu0 %2879
    %2881 = vrot.lane.b32.xlu0 %v1779, 120
    %v2882 = vpop.permute.xlu0 %2881
    %v2883 = vsel %vm353, %v2880, 0
    %v2885 = vsel %vm353, %v2882, 0
    %2887 = vmatprep.subr.mxu0 0.0
    %2888 = vmatpush1.msra.mxu0 %v2874
    %2889 = vmatprep.subr.mxu0 0.0
    %2890 = vmatpush1.msra.mxu0 0.0
    %2891 = vmatprep.subr.mxu0 0.0
    %2892 = vmatpush1.msra.mxu0 0.0
    %2893 = vmatprep.subr.mxu0 0.0
    %2894 = vmatpush1.msra.mxu0 0.0
    %2895 = vmatprep.subr.mxu0 0.0
    %2896 = vmatpush1.msra.mxu0 0.0
    %2897 = vmatprep.subr.mxu0 0.0
    %2898 = vmatpush1.msra.mxu0 0.0
    %2899 = vmatprep.subr.mxu0 0.0
    %2900 = vmatpush1.msra.mxu0 0.0
    %2901 = vmatprep.subr.mxu0 0.0
    %2902 = vmatpush1.msra.mxu0 0.0
    %2903 = vmatprep.subr.mxu0 0.0
    %2904 = vmatpush1.msra.mxu0 0.0
    %2905 = vmatprep.subr.mxu0 0.0
    %2906 = vmatpush1.msra.mxu0 0.0
    %2907 = vmatprep.subr.mxu0 0.0
    %2908 = vmatpush1.msra.mxu0 0.0
    %2909 = vmatprep.subr.mxu0 0.0
    %2910 = vmatpush1.msra.mxu0 0.0
    %2911 = vmatprep.subr.mxu0 0.0
    %2912 = vmatpush1.msra.mxu0 0.0
    %2913 = vmatprep.subr.mxu0 0.0
    %2914 = vmatpush1.msra.mxu0 0.0
    %2915 = vmatprep.subr.mxu0 0.0
    %2916 = vmatpush1.msra.mxu0 0.0
    %2917 = vmatprep.subr.mxu0 0.0
    %2918 = vmatpush1.msra.mxu0 0.0
    %2919 = vmatprep.subr.mxu0 0.0
    %2920 = vmatpush1.msra.mxu0 0.0
    %2921 = vmatprep.subr.mxu0 0.0
    %2922 = vmatpush1.msra.mxu0 0.0
    %2923 = vmatprep.subr.mxu0 0.0
    %2924 = vmatpush1.msra.mxu0 0.0
    %2925 = vmatprep.subr.mxu0 0.0
    %2926 = vmatpush1.msra.mxu0 0.0
    %2927 = vmatprep.subr.mxu0 0.0
    %2928 = vmatpush1.msra.mxu0 0.0
    %2929 = vmatprep.subr.mxu0 0.0
    %2930 = vmatpush1.msra.mxu0 0.0
    %2931 = vmatprep.subr.mxu0 0.0
    %2932 = vmatpush1.msra.mxu0 0.0
    %2933 = vmatprep.subr.mxu0 0.0
    %2934 = vmatpush1.msra.mxu0 0.0
    %2935 = vmatprep.subr.mxu0 0.0
    %2936 = vmatpush1.msra.mxu0 0.0
    %2937 = vmatprep.subr.mxu0 0.0
    %2938 = vmatpush1.msra.mxu0 0.0
    %2939 = vmatprep.subr.mxu0 0.0
    %2940 = vmatpush1.msra.mxu0 0.0
    %2941 = vmatprep.subr.mxu0 0.0
    %2942 = vmatpush1.msra.mxu0 0.0
    %2943 = vmatprep.subr.mxu0 0.0
    %2944 = vmatpush1.msra.mxu0 0.0
    %2945 = vmatprep.subr.mxu0 0.0
    %2946 = vmatpush1.msra.mxu0 0.0
    %2947 = vmatprep.subr.mxu0 0.0
    %2948 = vmatpush1.msra.mxu0 0.0
    %2949 = vmatprep.subr.mxu0 0.0
    %2950 = vmatpush1.msra.mxu0 0.0
    %2951 = vmatprep.mubr.f32.mxu0 0.0
    %2952 = vmatmul.mubr.f32.gmra.mrb[0].mxu0 %v2883
    %v2953 = vpop.f32.mrb[0].mxu0
    %v2954 = vadd.f32 0.0, %v2953
    %v2955 = vpop.f32.mrb[0].mxu0
    %2956 = vmatprep.mubr.f32.mxu0 0.0
    %2957 = vmatmul.mubr.f32.gmra.mrb[0].mxu0 %v2885
    %v2958 = vpop.f32.mrb[0].mxu0
    %v2959 = vadd.f32 0.0, %v2958
    %v2960 = vpop.f32.mrb[0].mxu0
    %2961 = vdwg.mxu0
    %v2962 = vsel %vm353, %v1778, 0
    %v2964 = vsel %vm353, %v1779, 0
    %2966 = vmatprep.subr.mxu0 0.0
    %2967 = vmatpush1.msra.mxu0 %v2434
    %2968 = vmatprep.subr.mxu0 0.0
    %2969 = vmatpush1.msra.mxu0 0.0
    %2970 = vmatprep.subr.mxu0 0.0
    %2971 = vmatpush1.msra.mxu0 0.0
    %2972 = vmatprep.subr.mxu0 0.0
    %2973 = vmatpush1.msra.mxu0 0.0
    %2974 = vmatprep.subr.mxu0 0.0
    %2975 = vmatpush1.msra.mxu0 0.0
    %2976 = vmatprep.subr.mxu0 0.0
    %2977 = vmatpush1.msra.mxu0 0.0
    %2978 = vmatprep.subr.mxu0 0.0
    %2979 = vmatpush1.msra.mxu0 0.0
    %2980 = vmatprep.subr.mxu0 0.0
    %2981 = vmatpush1.msra.mxu0 0.0
    %2982 = vmatprep.subr.mxu0 0.0
    %2983 = vmatpush1.msra.mxu0 0.0
    %2984 = vmatprep.subr.mxu0 0.0
    %2985 = vmatpush1.msra.mxu0 0.0
    %2986 = vmatprep.subr.mxu0 0.0
    %2987 = vmatpush1.msra.mxu0 0.0
    %2988 = vmatprep.subr.mxu0 0.0
    %2989 = vmatpush1.msra.mxu0 0.0
    %2990 = vmatprep.subr.mxu0 0.0
    %2991 = vmatpush1.msra.mxu0 0.0
    %2992 = vmatprep.subr.mxu0 0.0
    %2993 = vmatpush1.msra.mxu0 0.0
    %2994 = vmatprep.subr.mxu0 0.0
    %2995 = vmatpush1.msra.mxu0 0.0
    %2996 = vmatprep.subr.mxu0 0.0
    %2997 = vmatpush1.msra.mxu0 0.0
    %2998 = vmatprep.subr.mxu0 0.0
    %2999 = vmatpush1.msra.mxu0 0.0
    %3000 = vmatprep.subr.mxu0 0.0
    %3001 = vmatpush1.msra.mxu0 0.0
    %3002 = vmatprep.subr.mxu0 0.0
    %3003 = vmatpush1.msra.mxu0 0.0
    %3004 = vmatprep.subr.mxu0 0.0
    %3005 = vmatpush1.msra.mxu0 0.0
    %3006 = vmatprep.subr.mxu0 0.0
    %3007 = vmatpush1.msra.mxu0 0.0
    %3008 = vmatprep.subr.mxu0 0.0
    %3009 = vmatpush1.msra.mxu0 0.0
    %3010 = vmatprep.subr.mxu0 0.0
    %3011 = vmatpush1.msra.mxu0 0.0
    %3012 = vmatprep.subr.mxu0 0.0
    %3013 = vmatpush1.msra.mxu0 0.0
    %3014 = vmatprep.subr.mxu0 0.0
    %3015 = vmatpush1.msra.mxu0 0.0
    %3016 = vmatprep.subr.mxu0 0.0
    %3017 = vmatpush1.msra.mxu0 0.0
    %3018 = vmatprep.subr.mxu0 0.0
    %3019 = vmatpush1.msra.mxu0 0.0
    %3020 = vmatprep.subr.mxu0 0.0
    %3021 = vmatpush1.msra.mxu0 0.0
    %3022 = vmatprep.subr.mxu0 0.0
    %3023 = vmatpush1.msra.mxu0 0.0
    %3024 = vmatprep.subr.mxu0 0.0
    %3025 = vmatpush1.msra.mxu0 0.0
    %3026 = vmatprep.subr.mxu0 0.0
    %3027 = vmatpush1.msra.mxu0 0.0
    %3028 = vmatprep.subr.mxu0 0.0
    %3029 = vmatpush1.msra.mxu0 0.0
    %3030 = vmatprep.mubr.f32.mxu0 0.0
    %3031 = vmatmul.mubr.f32.gmra.mrb[0].mxu0 %v2962
    %v3032 = vpop.f32.mrb[0].mxu0
    %v3033 = vadd.f32 %v2954, %v3032
    %v3034 = vpop.f32.mrb[0].mxu0
    %3035 = vmatprep.mubr.f32.mxu0 0.0
    %3036 = vmatmul.mubr.f32.gmra.mrb[0].mxu0 %v2964
    %v3037 = vpop.f32.mrb[0].mxu0
    %v3038 = vadd.f32 %v2959, %v3037
    %v3039 = vpop.f32.mrb[0].mxu0
    %3040 = vdwg.mxu0
    %v3041 = vadd.f32 %v1760, %v3033
    %v3042 = vadd.f32 %v1761, %v3038
    %3044 = vset.pattern.permute.xlu0 0
    %3045 = vperm.xlu0 %3044, %v1780
    %v3046 = vpop.permute.xlu0 %3045
    %3049 = vset.pattern.permute.xlu0 0
    %3050 = vperm.xlu0 %3049, %v1781
    %v3051 = vpop.permute.xlu0 %3050
    %v3053 = vadd.f32 %v3041, %v3046
    %v3054 = vadd.f32 %v3042, %v3051
    %v3055 = vadd.f32 %v3053, %v3054
    %v3056 = vrot.slane %v3055, 4
    %v3057 = vadd.f32 %v3055, %v3056
    %v3058 = vrot.slane %v3057, 2
    %v3059 = vadd.f32 %v3057, %v3058
    %v3060 = vrot.slane %v3059, 1
    %v3061 = vadd.f32 %v3059, %v3060
    %v3062 = vmul.f32 %v3061, %v134
    %v3063 = vsub.f32 %v3053, %v3062
    %v3064 = vsub.f32 %v3054, %v3062
    %v3065 = vmul.f32 %v3063, %v3063
    %v3066 = vmul.f32 %v3064, %v3064
    %v3067 = vadd.f32 %v3065, %v3066
    %v3068 = vrot.slane %v3067, 4
    %v3069 = vadd.f32 %v3067, %v3068
    %v3070 = vrot.slane %v3069, 2
    %v3071 = vadd.f32 %v3069, %v3070
    %v3072 = vrot.slane %v3071, 1
    %v3073 = vadd.f32 %v3071, %v3072
    %v3074 = vmul.f32 %v3073, %v134
    %v3075 = vadd.f32 %v3074, 1e-06
    %v3076 = vrsqrt.pop %v3075
    %v3077 = vmul.f32 %v3063, %v3076
    %v3078 = vmul.f32 %v3064, %v3076
    %3080 = vset.pattern.permute.xlu0 0
    %3081 = vperm.xlu0 %3080, %v1782
    %v3082 = vpop.permute.xlu0 %3081
    %3085 = vset.pattern.permute.xlu0 0
    %3086 = vperm.xlu0 %3085, %v1783
    %v3087 = vpop.permute.xlu0 %3086
    %v3089 = vmul.f32 %v3077, %v3082
    %v3090 = vmul.f32 %v3078, %v3087
    %3092 = vset.pattern.permute.xlu0 0
    %3093 = vperm.xlu0 %3092, %v1784
    %v3094 = vpop.permute.xlu0 %3093
    %3097 = vset.pattern.permute.xlu0 0
    %3098 = vperm.xlu0 %3097, %v1785
    %v3099 = vpop.permute.xlu0 %3098
    %v3101 = vadd.f32 %v3089, %v3094
    %v3102 = vadd.f32 %v3090, %v3099
    %3104 = vset.pattern.permute.xlu0 0
    %3105 = vperm.xlu0 %3104, %v1794
    %v3106 = vpop.permute.xlu0 %3105
    %3109 = vset.pattern.permute.xlu0 0
    %3110 = vperm.xlu0 %3109, %v1795
    %v3111 = vpop.permute.xlu0 %3110
    %3114 = vset.pattern.permute.xlu0 0
    %3115 = vperm.xlu0 %3114, %v1796
    %v3116 = vpop.permute.xlu0 %3115
    %3119 = vset.pattern.permute.xlu0 0
    %3120 = vperm.xlu0 %3119, %v1797
    %v3121 = vpop.permute.xlu0 %3120
    %3124 = vset.pattern.permute.xlu0 0
    %3125 = vperm.xlu0 %3124, %v1798
    %v3126 = vpop.permute.xlu0 %3125
    %3129 = vset.pattern.permute.xlu0 0
    %3130 = vperm.xlu0 %3129, %v1799
    %v3131 = vpop.permute.xlu0 %3130
    %3134 = vset.pattern.permute.xlu0 0
    %3135 = vperm.xlu0 %3134, %v1800
    %v3136 = vpop.permute.xlu0 %3135
    %3139 = vset.pattern.permute.xlu0 0
    %3140 = vperm.xlu0 %3139, %v1801
    %v3141 = vpop.permute.xlu0 %3140
    %v3144 = vsel %vm206, %v1786, 0
    %v3147 = vsel %vm206, %v1787, 0
    %v3150 = vsel %vm206, %v1788, 0
    %v3153 = vsel %vm206, %v1789, 0
    %v3156 = vsel %vm206, %v1790, 0
    %v3159 = vsel %vm206, %v1791, 0
    %v3162 = vsel %vm206, %v1792, 0
    %v3165 = vsel %vm206, %v1793, 0
    %3167 = vmatprep.subr.mxu0 0.0
    %3168 = vmatpush1.msra.mxu0 %v3101
    %3169 = vmatprep.subr.mxu0 0.0
    %3170 = vmatpush1.msra.mxu0 %v3102
    %3171 = vmatprep.subr.mxu0 0.0
    %3172 = vmatpush1.msra.mxu0 0.0
    %3173 = vmatprep.subr.mxu0 0.0
    %3174 = vmatpush1.msra.mxu0 0.0
    %3175 = vmatprep.subr.mxu0 0.0
    %3176 = vmatpush1.msra.mxu0 0.0
    %3177 = vmatprep.subr.mxu0 0.0
    %3178 = vmatpush1.msra.mxu0 0.0
    %3179 = vmatprep.subr.mxu0 0.0
    %3180 = vmatpush1.msra.mxu0 0.0
    %3181 = vmatprep.subr.mxu0 0.0
    %3182 = vmatpush1.msra.mxu0 0.0
    %3183 = vmatprep.subr.mxu0 0.0
    %3184 = vmatpush1.msra.mxu0 0.0
    %3185 = vmatprep.subr.mxu0 0.0
    %3186 = vmatpush1.msra.mxu0 0.0
    %3187 = vmatprep.subr.mxu0 0.0
    %3188 = vmatpush1.msra.mxu0 0.0
    %3189 = vmatprep.subr.mxu0 0.0
    %3190 = vmatpush1.msra.mxu0 0.0
    %3191 = vmatprep.subr.mxu0 0.0
    %3192 = vmatpush1.msra.mxu0 0.0
    %3193 = vmatprep.subr.mxu0 0.0
    %3194 = vmatpush1.msra.mxu0 0.0
    %3195 = vmatprep.subr.mxu0 0.0
    %3196 = vmatpush1.msra.mxu0 0.0
    %3197 = vmatprep.subr.mxu0 0.0
    %3198 = vmatpush1.msra.mxu0 0.0
    %3199 = vmatprep.subr.mxu0 0.0
    %3200 = vmatpush1.msra.mxu0 0.0
    %3201 = vmatprep.subr.mxu0 0.0
    %3202 = vmatpush1.msra.mxu0 0.0
    %3203 = vmatprep.subr.mxu0 0.0
    %3204 = vmatpush1.msra.mxu0 0.0
    %3205 = vmatprep.subr.mxu0 0.0
    %3206 = vmatpush1.msra.mxu0 0.0
    %3207 = vmatprep.subr.mxu0 0.0
    %3208 = vmatpush1.msra.mxu0 0.0
    %3209 = vmatprep.subr.mxu0 0.0
    %3210 = vmatpush1.msra.mxu0 0.0
    %3211 = vmatprep.subr.mxu0 0.0
    %3212 = vmatpush1.msra.mxu0 0.0
    %3213 = vmatprep.subr.mxu0 0.0
    %3214 = vmatpush1.msra.mxu0 0.0
    %3215 = vmatprep.subr.mxu0 0.0
    %3216 = vmatpush1.msra.mxu0 0.0
    %3217 = vmatprep.subr.mxu0 0.0
    %3218 = vmatpush1.msra.mxu0 0.0
    %3219 = vmatprep.subr.mxu0 0.0
    %3220 = vmatpush1.msra.mxu0 0.0
    %3221 = vmatprep.subr.mxu0 0.0
    %3222 = vmatpush1.msra.mxu0 0.0
    %3223 = vmatprep.subr.mxu0 0.0
    %3224 = vmatpush1.msra.mxu0 0.0
    %3225 = vmatprep.subr.mxu0 0.0
    %3226 = vmatpush1.msra.mxu0 0.0
    %3227 = vmatprep.subr.mxu0 0.0
    %3228 = vmatpush1.msra.mxu0 0.0
    %3229 = vmatprep.subr.mxu0 0.0
    %3230 = vmatpush1.msra.mxu0 0.0
    %3231 = vmatprep.mubr.f32.mxu0 0.0
    %3232 = vmatmul.mubr.f32.gmra.mrb[0].mxu0 %v3144
    %v3233 = vpop.f32.mrb[0].mxu0
    %v3234 = vadd.f32 %v3106, %v3233
    %v3235 = vpop.f32.mrb[0].mxu0
    %3236 = vmatprep.mubr.f32.mxu0 0.0
    %3237 = vmatmul.mubr.f32.gmra.mrb[0].mxu0 %v3147
    %v3238 = vpop.f32.mrb[0].mxu0
    %v3239 = vadd.f32 %v3111, %v3238
    %v3240 = vpop.f32.mrb[0].mxu0
    %3241 = vmatprep.mubr.f32.mxu0 0.0
    %3242 = vmatmul.mubr.f32.gmra.mrb[0].mxu0 %v3150
    %v3243 = vpop.f32.mrb[0].mxu0
    %v3244 = vadd.f32 %v3116, %v3243
    %v3245 = vpop.f32.mrb[0].mxu0
    %3246 = vmatprep.mubr.f32.mxu0 0.0
    %3247 = vmatmul.mubr.f32.gmra.mrb[0].mxu0 %v3153
    %v3248 = vpop.f32.mrb[0].mxu0
    %v3249 = vadd.f32 %v3121, %v3248
    %v3250 = vpop.f32.mrb[0].mxu0
    %3251 = vmatprep.mubr.f32.mxu0 0.0
    %3252 = vmatmul.mubr.f32.gmra.mrb[0].mxu0 %v3156
    %v3253 = vpop.f32.mrb[0].mxu0
    %v3254 = vadd.f32 %v3126, %v3253
    %v3255 = vpop.f32.mrb[0].mxu0
    %3256 = vmatprep.mubr.f32.mxu0 0.0
    %3257 = vmatmul.mubr.f32.gmra.mrb[0].mxu0 %v3159
    %v3258 = vpop.f32.mrb[0].mxu0
    %v3259 = vadd.f32 %v3131, %v3258
    %v3260 = vpop.f32.mrb[0].mxu0
    %3261 = vmatprep.mubr.f32.mxu0 0.0
    %3262 = vmatmul.mubr.f32.gmra.mrb[0].mxu0 %v3162
    %v3263 = vpop.f32.mrb[0].mxu0
    %v3264 = vadd.f32 %v3136, %v3263
    %v3265 = vpop.f32.mrb[0].mxu0
    %3266 = vmatprep.mubr.f32.mxu0 0.0
    %3267 = vmatmul.mubr.f32.gmra.mrb[0].mxu0 %v3165
    %v3268 = vpop.f32.mrb[0].mxu0
    %v3269 = vadd.f32 %v3141, %v3268
    %v3270 = vpop.f32.mrb[0].mxu0
    %3271 = vdwg.mxu0
    %v3272 = vmul.f32 %v3234, %v3234
    %v3273 = vmul.f32 %v3239, %v3239
    %v3274 = vmul.f32 %v3244, %v3244
    %v3275 = vmul.f32 %v3249, %v3249
    %v3276 = vmul.f32 %v3254, %v3254
    %v3277 = vmul.f32 %v3259, %v3259
    %v3278 = vmul.f32 %v3264, %v3264
    %v3279 = vmul.f32 %v3269, %v3269
    %v3280 = vmul.f32 %v3234, %v3272
    %v3281 = vmul.f32 %v3239, %v3273
    %v3282 = vmul.f32 %v3244, %v3274
    %v3283 = vmul.f32 %v3249, %v3275
    %v3284 = vmul.f32 %v3254, %v3276
    %v3285 = vmul.f32 %v3259, %v3277
    %v3286 = vmul.f32 %v3264, %v3278
    %v3287 = vmul.f32 %v3269, %v3279
    %v3288 = vmul.f32 %v3280, 0.044715
    %v3289 = vmul.f32 %v3281, 0.044715
    %v3290 = vmul.f32 %v3282, 0.044715
    %v3291 = vmul.f32 %v3283, 0.044715
    %v3292 = vmul.f32 %v3284, 0.044715
    %v3293 = vmul.f32 %v3285, 0.044715
    %v3294 = vmul.f32 %v3286, 0.044715
    %v3295 = vmul.f32 %v3287, 0.044715
    %v3296 = vadd.f32 %v3234, %v3288
    %v3297 = vadd.f32 %v3239, %v3289
    %v3298 = vadd.f32 %v3244, %v3290
    %v3299 = vadd.f32 %v3249, %v3291
    %v3300 = vadd.f32 %v3254, %v3292
    %v3301 = vadd.f32 %v3259, %v3293
    %v3302 = vadd.f32 %v3264, %v3294
    %v3303 = vadd.f32 %v3269, %v3295
    %v3304 = vmul.f32 %v3296, 0.7978846
    %v3305 = vmul.f32 %v3297, 0.7978846
    %v3306 = vmul.f32 %v3298, 0.7978846
    %v3307 = vmul.f32 %v3299, 0.7978846
    %v3308 = vmul.f32 %v3300, 0.7978846
    %v3309 = vmul.f32 %v3301, 0.7978846
    %v3310 = vmul.f32 %v3302, 0.7978846
    %v3311 = vmul.f32 %v3303, 0.7978846
    %v3312 = vtanh.pop %v3304
    %v3313 = vtanh.pop %v3305
    %v3314 = vtanh.pop %v3306
    %v3315 = vtanh.pop %v3307
    %v3316 = vtanh.pop %v3308
    %v3317 = vtanh.pop %v3309
    %v3318 = vtanh.pop %v3310
    %v3319 = vtanh.pop %v3311
    %v3320 = vadd.f32 %v3312, 1.0
    %v3321 = vadd.f32 %v3313, 1.0
    %v3322 = vadd.f32 %v3314, 1.0
    %v3323 = vadd.f32 %v3315, 1.0
    %v3324 = vadd.f32 %v3316, 1.0
    %v3325 = vadd.f32 %v3317, 1.0
    %v3326 = vadd.f32 %v3318, 1.0
    %v3327 = vadd.f32 %v3319, 1.0
    %v3328 = vmul.f32 %v3320, 0.5
    %v3329 = vmul.f32 %v3321, 0.5
    %v3330 = vmul.f32 %v3322, 0.5
    %v3331 = vmul.f32 %v3323, 0.5
    %v3332 = vmul.f32 %v3324, 0.5
    %v3333 = vmul.f32 %v3325, 0.5
    %v3334 = vmul.f32 %v3326, 0.5
    %v3335 = vmul.f32 %v3327, 0.5
    %v3336 = vmul.f32 %v3234, %v3328
    %v3337 = vmul.f32 %v3239, %v3329
    %v3338 = vmul.f32 %v3244, %v3330
    %v3339 = vmul.f32 %v3249, %v3331
    %v3340 = vmul.f32 %v3254, %v3332
    %v3341 = vmul.f32 %v3259, %v3333
    %v3342 = vmul.f32 %v3264, %v3334
    %v3343 = vmul.f32 %v3269, %v3335
    %3345 = vset.pattern.permute.xlu0 0
    %3346 = vperm.xlu0 %3345, %v1804
    %v3347 = vpop.permute.xlu0 %3346
    %3350 = vset.pattern.permute.xlu0 0
    %3351 = vperm.xlu0 %3350, %v1805
    %v3352 = vpop.permute.xlu0 %3351
    %v3355 = vsel %vm1678, %v1802, 0
    %v3358 = vsel %vm1678, %v1803, 0
    %3360 = vmatprep.subr.mxu0 0.0
    %3361 = vmatpush1.msra.mxu0 %v3336
    %3362 = vmatprep.subr.mxu0 0.0
    %3363 = vmatpush1.msra.mxu0 %v3337
    %3364 = vmatprep.subr.mxu0 0.0
    %3365 = vmatpush1.msra.mxu0 %v3338
    %3366 = vmatprep.subr.mxu0 0.0
    %3367 = vmatpush1.msra.mxu0 %v3339
    %3368 = vmatprep.subr.mxu0 0.0
    %3369 = vmatpush1.msra.mxu0 %v3340
    %3370 = vmatprep.subr.mxu0 0.0
    %3371 = vmatpush1.msra.mxu0 %v3341
    %3372 = vmatprep.subr.mxu0 0.0
    %3373 = vmatpush1.msra.mxu0 %v3342
    %3374 = vmatprep.subr.mxu0 0.0
    %3375 = vmatpush1.msra.mxu0 %v3343
    %3376 = vmatprep.subr.mxu0 0.0
    %3377 = vmatpush1.msra.mxu0 0.0
    %3378 = vmatprep.subr.mxu0 0.0
    %3379 = vmatpush1.msra.mxu0 0.0
    %3380 = vmatprep.subr.mxu0 0.0
    %3381 = vmatpush1.msra.mxu0 0.0
    %3382 = vmatprep.subr.mxu0 0.0
    %3383 = vmatpush1.msra.mxu0 0.0
    %3384 = vmatprep.subr.mxu0 0.0
    %3385 = vmatpush1.msra.mxu0 0.0
    %3386 = vmatprep.subr.mxu0 0.0
    %3387 = vmatpush1.msra.mxu0 0.0
    %3388 = vmatprep.subr.mxu0 0.0
    %3389 = vmatpush1.msra.mxu0 0.0
    %3390 = vmatprep.subr.mxu0 0.0
    %3391 = vmatpush1.msra.mxu0 0.0
    %3392 = vmatprep.subr.mxu0 0.0
    %3393 = vmatpush1.msra.mxu0 0.0
    %3394 = vmatprep.subr.mxu0 0.0
    %3395 = vmatpush1.msra.mxu0 0.0
    %3396 = vmatprep.subr.mxu0 0.0
    %3397 = vmatpush1.msra.mxu0 0.0
    %3398 = vmatprep.subr.mxu0 0.0
    %3399 = vmatpush1.msra.mxu0 0.0
    %3400 = vmatprep.subr.mxu0 0.0
    %3401 = vmatpush1.msra.mxu0 0.0
    %3402 = vmatprep.subr.mxu0 0.0
    %3403 = vmatpush1.msra.mxu0 0.0
    %3404 = vmatprep.subr.mxu0 0.0
    %3405 = vmatpush1.msra.mxu0 0.0
    %3406 = vmatprep.subr.mxu0 0.0
    %3407 = vmatpush1.msra.mxu0 0.0
    %3408 = vmatprep.subr.mxu0 0.0
    %3409 = vmatpush1.msra.mxu0 0.0
    %3410 = vmatprep.subr.mxu0 0.0
    %3411 = vmatpush1.msra.mxu0 0.0
    %3412 = vmatprep.subr.mxu0 0.0
    %3413 = vmatpush1.msra.mxu0 0.0
    %3414 = vmatprep.subr.mxu0 0.0
    %3415 = vmatpush1.msra.mxu0 0.0
    %3416 = vmatprep.subr.mxu0 0.0
    %3417 = vmatpush1.msra.mxu0 0.0
    %3418 = vmatprep.subr.mxu0 0.0
    %3419 = vmatpush1.msra.mxu0 0.0
    %3420 = vmatprep.subr.mxu0 0.0
    %3421 = vmatpush1.msra.mxu0 0.0
    %3422 = vmatprep.subr.mxu0 0.0
    %3423 = vmatpush1.msra.mxu0 0.0
    %3424 = vmatprep.mubr.f32.mxu0 0.0
    %3425 = vmatmul.mubr.f32.gmra.mrb[0].mxu0 %v3355
    %v3426 = vpop.f32.mrb[0].mxu0
    %v3427 = vadd.f32 %v3347, %v3426
    %v3428 = vpop.f32.mrb[0].mxu0
    %3429 = vmatprep.mubr.f32.mxu0 0.0
    %3430 = vmatmul.mubr.f32.gmra.mrb[0].mxu0 %v3358
    %v3431 = vpop.f32.mrb[0].mxu0
    %v3432 = vadd.f32 %v3352, %v3431
    %v3433 = vpop.f32.mrb[0].mxu0
    %3434 = vdwg.mxu0
    %v3435 = vadd.f32 %v3053, %v3427
    %v3436 = vadd.f32 %v3054, %v3432
    %3437 = vst [vmem:[#allocation2] sm:$0xff] %v3435
    %3438 = vst [vmem:[#allocation2 + $0x8] sm:$0xff] %v3436
    // Predicated region
    $region102: #{_forward_impl.1} parent=1 // pred_check
      _
    $region103: #{_forward_impl.1} parent=1 // pred_check_branch
      %3440 = sbr.rel (0) target = $region105
    $region104: #{_forward_impl.1} parent=1 // pred_region
      %s3442 = ssub.s32 256, 256
      %3443 = vsyncadd [#allocation3], %s3442
      %s3444 = sshll.u32 [#allocation2], 4
      %s3445 = int_to_ptr.vmem [resolvable:$true] %s3444
      %3450 = dma.vmem_to_hbm [thread:$0]  %s3445, 256, %s25, [#allocation3], 128, 128, 8
    $region105: #{_forward_impl.1} parent=1 // pred_fallthru
      _
    // Predicated region
    $region106: #{_forward_impl.1} parent=1 // pred_check
      _
    $region107: #{_forward_impl.1} parent=1 // pred_check_branch
      %3452 = sbr.rel (0) target = $region109
    $region108: #{_forward_impl.1} parent=1 // pred_region
      %3453 = dma.done [#allocation3], 256
    $region109: #{_forward_impl.1} parent=1 // pred_fallthru
      _
    %3454 = vsyncpa [#allocation3], 1

</llo_original>
